<compile_context>
chip_gen: v7x
topology: tpu7x:2x2x1
jax: 0.10.0
libtpu: 0.0.40
codegen_flags: <defaults>
</compile_context>

<pallas_src>
import functools

import jax
import jax.numpy as jnp
from jax import lax
from jax.experimental import pallas as pl
from jax.experimental.pallas import tpu as pltpu

LN_EPS = 1e-5

# Set True on v6e/v7x to run MXU matmuls with bf16 operands (f32 accumulate).
# Kept False by default so the forward matches the f32 torch semantics.
MXU_BF16 = False


def _layernorm(x, gamma, beta):
    # x: [R, H], gamma/beta: [1, H]  (torch.nn.LayerNorm(H), eps=1e-5)
    mu = jnp.mean(x, axis=-1, keepdims=True)
    var = jnp.mean((x - mu) ** 2, axis=-1, keepdims=True)
    return (x - mu) * lax.rsqrt(var + LN_EPS) * gamma + beta


def _mm(a, b, *, bf16=False, dims=None):
    # MXU matmul with f32 accumulation; optional bf16 operand cast (v6e/v7x).
    if bf16:
        a = a.astype(jnp.bfloat16)
        b = b.astype(jnp.bfloat16)
    if dims is None:
        return jnp.dot(a, b, preferred_element_type=jnp.float32)
    return lax.dot_general(a, b, dims, preferred_element_type=jnp.float32)


def _gnn_cell_kernel(
    nodes_ref,      # [N, H]   f32
    edges_ref,      # [E, H]   f32
    idx_ref,        # [2E, 1]  int32  (rows 0..E-1 = src, rows E..2E-1 = dst)
    ew_ref,         # [E, 1]   f32
    W_ref,          # [7H, H]  f32    packed: node_w1 | node_w2 | edge_w1 | edge_w2
    V_ref,          # [12, H]  f32    packed per-feature vectors (biases, LN gamma/beta)
    nodes_out_ref,  # [N, H]   f32
    edges_out_ref,  # [E, H]   f32
    *, mxu_bf16,
):
    nodes = nodes_ref[...]
    edges = edges_ref[...]
    ew = ew_ref[...]

    N, H = nodes.shape
    E = edges.shape[0]

    # ---- packed weights: single DMA, static sublane-aligned slices ----
    nw1 = W_ref[0:2 * H, :]            # [2H, H]
    nw2 = W_ref[2 * H:3 * H, :]        # [H,  H]
    ew1 = W_ref[3 * H:6 * H, :]        # [3H, H]
    ew2 = W_ref[6 * H:7 * H, :]        # [H,  H]

    # ---- packed per-feature vectors: single DMA, static row slices ----
    V = V_ref[...]                     # [12, H]
    nb1, ng1, nB1 = V[0:1], V[1:2], V[2:3]
    nb2, ng2, nB2 = V[3:4], V[4:5], V[5:6]
    eb1, eg1, eB1 = V[6:7], V[7:8], V[8:9]
    eb2, eg2, eB2 = V[9:10], V[10:11], V[11:12]

    # One-hot incidence matrix for src AND dst in a single [2E, N] build.
    idx = idx_ref[...]                                             # [2E, 1]
    node_iota = lax.broadcasted_iota(jnp.int32, (2 * E, N), 1)     # [2E, N]
    oh_all = (node_iota == idx).astype(jnp.float32)                # [2E, N]
    oh_dst = oh_all[E:, :]                                         # [E, N] (sublane-aligned slice)

    # ---- scatter_add(edges * edge_weights, dst, dim_size=N) via MXU ----
    weighted = edges * ew                                          # [E, H]
    edge_messages = _mm(oh_dst, weighted, bf16=mxu_bf16,
                        dims=(((0,), (0,)), ((), ())))             # [N, H]

    # ---- node network: one K=2H matmul on concat([nodes, messages]) ----
    node_in = jnp.concatenate([nodes, edge_messages], axis=-1)     # [N, 2H]
    h = _mm(node_in, nw1, bf16=mxu_bf16) + nb1
    h = jnp.maximum(_layernorm(h, ng1, nB1), 0.0)
    h = _mm(h, nw2, bf16=mxu_bf16) + nb2
    h = jnp.maximum(_layernorm(h, ng2, nB2), 0.0)
    nodes_new = h + nodes                                          # residual

    # ---- gather nodes_new[src] AND nodes_new[dst] with ONE MXU matmul ----
    gathered = _mm(oh_all, nodes_new, bf16=mxu_bf16)               # [2E, H]
    n_src = gathered[:E, :]                                        # [E, H]
    n_dst = gathered[E:, :]                                        # [E, H]

    # ---- edge network: one K=3H matmul on concat([n_src, n_dst, edges]) ----
    edge_in = jnp.concatenate([n_src, n_dst, edges], axis=-1)      # [E, 3H]
    g = _mm(edge_in, ew1, bf16=mxu_bf16) + eb1
    g = jnp.maximum(_layernorm(g, eg1, eB1), 0.0)
    g = _mm(g, ew2, bf16=mxu_bf16) + eb2
    g = jnp.tanh(_layernorm(g, eg2, eB2))
    edges_new = g + edges                                          # residual

    nodes_out_ref[...] = nodes_new
    edges_out_ref[...] = edges_new


@jax.jit
def interaction_gnn_cell(nodes, edges, graph, edge_weights, params):
    """Pallas-backed InteractionGNNCell.forward.

    nodes: [N, H] f32; edges: [E, H] f32; graph: [2, E] int32;
    edge_weights: [E, 1] f32.  Returns (nodes_new [N, H], edges_new [E, H]).
    """
    N, H = nodes.shape
    E = edges.shape[0]

    # [2E, 1] int32: first E rows = src (graph[0]), next E rows = dst (graph[1]).
    idx_col = graph.astype(jnp.int32).reshape(2 * E, 1)

    p = params
    # Pack the 4 weight matrices into one array (1 DMA instead of 4).
    W_packed = jnp.concatenate(
        [p["node_w1"], p["node_w2"], p["edge_w1"], p["edge_w2"]], axis=0)   # [7H, H]
    # Pack the 12 [1, H] vectors into one array (1 DMA instead of 12).
    V_packed = jnp.concatenate(
        [p["node_b1"], p["node_g1"], p["node_B1"],
         p["node_b2"], p["node_g2"], p["node_B2"],
         p["edge_b1"], p["edge_g1"], p["edge_B1"],
         p["edge_b2"], p["edge_g2"], p["edge_B2"]], axis=0)                  # [12, H]
    # NOTE: when this cell is run inside an outer message-passing loop, hoist
    # W_packed / V_packed out of the loop so the packing (and their DMAs) are
    # amortized across iterations.

    vmem_spec = pl.BlockSpec(memory_space=pltpu.MemorySpace.VMEM)
    kernel = pl.pallas_call(
        functools.partial(_gnn_cell_kernel, mxu_bf16=MXU_BF16),
        out_shape=(
            jax.ShapeDtypeStruct((N, H), jnp.float32),
            jax.ShapeDtypeStruct((E, H), jnp.float32),
        ),
        in_specs=[vmem_spec] * 6,
        out_specs=(vmem_spec, vmem_spec),
    )
    return kernel(nodes, edges, idx_col, edge_weights, W_packed, V_packed)


def _reference(nodes, edges, graph, edge_weights, params):
    """Pure-JAX reference mirroring the PyTorch forward."""
    p = params
    src, dst = graph[0], graph[1]
    N, H = nodes.shape

    def ln(x, g, b):
        mu = jnp.mean(x, -1, keepdims=True)
        var = jnp.mean((x - mu) ** 2, -1, keepdims=True)
        return (x - mu) * lax.rsqrt(var + LN_EPS) * g + b

    msgs = jax.ops.segment_sum(edges * edge_weights, dst, num_segments=N)
    node_in = jnp.concatenate([nodes, msgs], axis=-1)
    h = node_in @ p["node_w1"] + p["node_b1"]
    h = jnp.maximum(ln(h, p["node_g1"], p["node_B1"]), 0.0)
    h = h @ p["node_w2"] + p["node_b2"]
    h = jnp.maximum(ln(h, p["node_g2"], p["node_B2"]), 0.0)
    nodes_new = h + nodes

    edge_in = jnp.concatenate([nodes_new[src], nodes_new[dst], edges], axis=-1)
    g = edge_in @ p["edge_w1"] + p["edge_b1"]
    g = jnp.maximum(ln(g, p["edge_g1"], p["edge_B1"]), 0.0)
    g = g @ p["edge_w2"] + p["edge_b2"]
    g = jnp.tanh(ln(g, p["edge_g2"], p["edge_B2"]))
    edges_new = g + edges
    return nodes_new, edges_new


def _init_params(key, H):
    ks = jax.random.split(key, 16)

    def lin(k, fan_in, fan_out):
        return (jax.random.normal(k, (fan_in, fan_out), jnp.float32)
                / jnp.sqrt(jnp.float32(fan_in)))

    def vec(k, scale=0.1):
        return scale * jax.random.normal(k, (1, H), jnp.float32)

    return dict(
        node_w1=lin(ks[0], 2 * H, H), node_b1=vec(ks[1]),
        node_g1=1.0 + vec(ks[2]), node_B1=vec(ks[3]),
        node_w2=lin(ks[4], H, H), node_b2=vec(ks[5]),
        node_g2=1.0 + vec(ks[6]), node_B2=vec(ks[7]),
        edge_w1=lin(ks[8], 3 * H, H), edge_b1=vec(ks[9]),
        edge_g1=1.0 + vec(ks[10]), edge_B1=vec(ks[11]),
        edge_w2=lin(ks[12], H, H), edge_b2=vec(ks[13]),
        edge_g2=1.0 + vec(ks[14]), edge_B2=vec(ks[15]),
    )


if __name__ == "__main__":
    key = jax.random.PRNGKey(0)
    k_nodes, k_edges, k_graph, k_w, k_p = jax.random.split(key, 5)

    N, E, H = 64, 256, 32
    nodes = jax.random.normal(k_nodes, (N, H), jnp.float32)
    edges = jax.random.normal(k_edges, (E, H), jnp.float32)
    graph = jax.random.randint(k_graph, (2, E), 0, N, dtype=jnp.int32)
    edge_weights = jax.nn.sigmoid(jax.random.normal(k_w, (E, 1), jnp.float32))
    params = _init_params(k_p, H)

    nodes_out, edges_out = interaction_gnn_cell(nodes, edges, graph,
                                                edge_weights, params)
    jax.block_until_ready((nodes_out, edges_out))

    ref_nodes, ref_edges = _reference(nodes, edges, graph, edge_weights, params)
    assert jnp.allclose(nodes_out, ref_nodes, atol=1e-4, rtol=1e-4)
    assert jnp.allclose(edges_out, ref_edges, atol=1e-4, rtol=1e-4)
    print("KERNEL_OK")
</pallas_src>

<mosaic_0001>
module attributes {stable_mosaic.version = 11 : i64} {
  func.func @_gnn_cell_kernel(%arg0: memref<64x32xf32, #tpu.memory_space<vmem>>, %arg1: memref<256x32xf32, #tpu.memory_space<vmem>>, %arg2: memref<512x1xi32, #tpu.memory_space<vmem>>, %arg3: memref<256x1xf32, #tpu.memory_space<vmem>>, %arg4: memref<224x32xf32, #tpu.memory_space<vmem>>, %arg5: memref<12x32xf32, #tpu.memory_space<vmem>>, %arg6: memref<64x32xf32, #tpu.memory_space<vmem>>, %arg7: memref<256x32xf32, #tpu.memory_space<vmem>>) attributes {dimension_semantics = [], scalar_prefetch = 0 : i64, scratch_operands = 0 : i64, tpu.core_type = #tpu.core_type<tc>} {
    %c0 = arith.constant 0 : index
    %c0_0 = arith.constant 0 : index
    %0 = vector.load %arg0[%c0, %c0_0] : memref<64x32xf32, #tpu.memory_space<vmem>>, vector<64x32xf32>
    %c0_1 = arith.constant 0 : index
    %c0_2 = arith.constant 0 : index
    %1 = vector.load %arg1[%c0_1, %c0_2] : memref<256x32xf32, #tpu.memory_space<vmem>>, vector<256x32xf32>
    %c0_3 = arith.constant 0 : index
    %c0_4 = arith.constant 0 : index
    %2 = vector.load %arg3[%c0_3, %c0_4] : memref<256x1xf32, #tpu.memory_space<vmem>>, vector<256x1xf32>
    %c0_5 = arith.constant 0 : index
    %c0_6 = arith.constant 0 : index
    %3 = vector.load %arg4[%c0_5, %c0_6] : memref<224x32xf32, #tpu.memory_space<vmem>>, vector<64x32xf32>
    %c64 = arith.constant 64 : index
    %c0_7 = arith.constant 0 : index
    %4 = vector.load %arg4[%c64, %c0_7] : memref<224x32xf32, #tpu.memory_space<vmem>>, vector<32x32xf32>
    %c96 = arith.constant 96 : index
    %c0_8 = arith.constant 0 : index
    %5 = vector.load %arg4[%c96, %c0_8] : memref<224x32xf32, #tpu.memory_space<vmem>>, vector<96x32xf32>
    %c192 = arith.constant 192 : index
    %c0_9 = arith.constant 0 : index
    %6 = vector.load %arg4[%c192, %c0_9] : memref<224x32xf32, #tpu.memory_space<vmem>>, vector<32x32xf32>
    %c0_10 = arith.constant 0 : index
    %c0_11 = arith.constant 0 : index
    %7 = vector.load %arg5[%c0_10, %c0_11] : memref<12x32xf32, #tpu.memory_space<vmem>>, vector<12x32xf32>
    %8 = vector.extract_strided_slice %7 {offsets = [0, 0], sizes = [1, 32], strides = [1, 1]} : vector<12x32xf32> to vector<1x32xf32>
    %9 = vector.extract_strided_slice %7 {offsets = [1, 0], sizes = [1, 32], strides = [1, 1]} : vector<12x32xf32> to vector<1x32xf32>
    %10 = vector.extract_strided_slice %7 {offsets = [2, 0], sizes = [1, 32], strides = [1, 1]} : vector<12x32xf32> to vector<1x32xf32>
    %11 = vector.extract_strided_slice %7 {offsets = [3, 0], sizes = [1, 32], strides = [1, 1]} : vector<12x32xf32> to vector<1x32xf32>
    %12 = vector.extract_strided_slice %7 {offsets = [4, 0], sizes = [1, 32], strides = [1, 1]} : vector<12x32xf32> to vector<1x32xf32>
    %13 = vector.extract_strided_slice %7 {offsets = [5, 0], sizes = [1, 32], strides = [1, 1]} : vector<12x32xf32> to vector<1x32xf32>
    %14 = vector.extract_strided_slice %7 {offsets = [6, 0], sizes = [1, 32], strides = [1, 1]} : vector<12x32xf32> to vector<1x32xf32>
    %15 = vector.extract_strided_slice %7 {offsets = [7, 0], sizes = [1, 32], strides = [1, 1]} : vector<12x32xf32> to vector<1x32xf32>
    %16 = vector.extract_strided_slice %7 {offsets = [8, 0], sizes = [1, 32], strides = [1, 1]} : vector<12x32xf32> to vector<1x32xf32>
    %17 = vector.extract_strided_slice %7 {offsets = [9, 0], sizes = [1, 32], strides = [1, 1]} : vector<12x32xf32> to vector<1x32xf32>
    %18 = vector.extract_strided_slice %7 {offsets = [10, 0], sizes = [1, 32], strides = [1, 1]} : vector<12x32xf32> to vector<1x32xf32>
    %19 = vector.extract_strided_slice %7 {offsets = [11, 0], sizes = [1, 32], strides = [1, 1]} : vector<12x32xf32> to vector<1x32xf32>
    %c0_12 = arith.constant 0 : index
    %c0_13 = arith.constant 0 : index
    %20 = vector.load %arg2[%c0_12, %c0_13] : memref<512x1xi32, #tpu.memory_space<vmem>>, vector<512x1xi32>
    %21 = tpu.iota {dimensions = array<i32: 1>} : vector<512x64xi32>
    %22 = vector.broadcast %20 : vector<512x1xi32> to vector<512x64xi32>
    %23 = arith.cmpi eq, %21, %22 : vector<512x64xi32>
    %24 = arith.extui %23 : vector<512x64xi1> to vector<512x64xi32>
    %25 = arith.sitofp %24 : vector<512x64xi32> to vector<512x64xf32>
    %26 = vector.extract_strided_slice %25 {offsets = [256, 0], sizes = [256, 64], strides = [1, 1]} : vector<512x64xf32> to vector<256x64xf32>
    %27 = vector.broadcast %2 : vector<256x1xf32> to vector<256x32xf32>
    %28 = arith.mulf %1, %27 : vector<256x32xf32>
    %cst = arith.constant dense<0.000000e+00> : vector<64x32xf32>
    %29 = tpu.matmul %26, %28, %cst {dimension_numbers = #tpu.dot_dimension_numbers<[0], [0], [1], [1], [0, 1, 1, 1], [], []>} : vector<256x64xf32>, vector<256x32xf32>, vector<64x32xf32> -> vector<64x32xf32>
    %30 = tpu.concatenate %0, %29 in 1 : vector<64x32xf32>, vector<64x32xf32> -> vector<64x64xf32>
    %cst_14 = arith.constant dense<0.000000e+00> : vector<64x32xf32>
    %31 = tpu.matmul %30, %3, %cst_14 {dimension_numbers = #tpu.dot_dimension_numbers<[1], [0], [0], [1], [0, 0, 1, 1], [], []>} : vector<64x64xf32>, vector<64x32xf32>, vector<64x32xf32> -> vector<64x32xf32>
    %32 = vector.broadcast %8 : vector<1x32xf32> to vector<64x32xf32>
    %33 = arith.addf %31, %32 : vector<64x32xf32>
    %cst_15 = arith.constant dense<0.000000e+00> : vector<64xf32>
    %34 = vector.multi_reduction <add>, %33, %cst_15 [1] : vector<64x32xf32> to vector<64xf32>
    %35 = vector.shape_cast %34 : vector<64xf32> to vector<64x1xf32>
    %cst_16 = arith.constant 3.200000e+01 : f32
    %36 = vector.broadcast %cst_16 : f32 to vector<64x1xf32>
    %37 = arith.divf %35, %36 : vector<64x1xf32>
    %38 = vector.broadcast %37 : vector<64x1xf32> to vector<64x32xf32>
    %39 = arith.subf %33, %38 : vector<64x32xf32>
    %40 = arith.mulf %39, %39 : vector<64x32xf32>
    %cst_17 = arith.constant dense<0.000000e+00> : vector<64xf32>
    %41 = vector.multi_reduction <add>, %40, %cst_17 [1] : vector<64x32xf32> to vector<64xf32>
    %42 = vector.shape_cast %41 : vector<64xf32> to vector<64x1xf32>
    %cst_18 = arith.constant 3.200000e+01 : f32
    %43 = vector.broadcast %cst_18 : f32 to vector<64x1xf32>
    %44 = arith.divf %42, %43 : vector<64x1xf32>
    %45 = vector.broadcast %37 : vector<64x1xf32> to vector<64x32xf32>
    %46 = arith.subf %33, %45 : vector<64x32xf32>
    %cst_19 = arith.constant 9.99999974E-6 : f32
    %47 = vector.broadcast %cst_19 : f32 to vector<64x1xf32>
    %48 = arith.addf %44, %47 : vector<64x1xf32>
    %49 = math.rsqrt %48 : vector<64x1xf32>
    %50 = vector.broadcast %49 : vector<64x1xf32> to vector<64x32xf32>
    %51 = arith.mulf %46, %50 : vector<64x32xf32>
    %52 = vector.broadcast %9 : vector<1x32xf32> to vector<64x32xf32>
    %53 = arith.mulf %51, %52 : vector<64x32xf32>
    %54 = vector.broadcast %10 : vector<1x32xf32> to vector<64x32xf32>
    %55 = arith.addf %53, %54 : vector<64x32xf32>
    %cst_20 = arith.constant 0.000000e+00 : f32
    %56 = vector.broadcast %cst_20 : f32 to vector<64x32xf32>
    %57 = arith.maximumf %55, %56 : vector<64x32xf32>
    %cst_21 = arith.constant dense<0.000000e+00> : vector<64x32xf32>
    %58 = tpu.matmul %57, %4, %cst_21 {dimension_numbers = #tpu.dot_dimension_numbers<[1], [0], [0], [1], [0, 0, 1, 1], [], []>} : vector<64x32xf32>, vector<32x32xf32>, vector<64x32xf32> -> vector<64x32xf32>
    %59 = vector.broadcast %11 : vector<1x32xf32> to vector<64x32xf32>
    %60 = arith.addf %58, %59 : vector<64x32xf32>
    %cst_22 = arith.constant dense<0.000000e+00> : vector<64xf32>
    %61 = vector.multi_reduction <add>, %60, %cst_22 [1] : vector<64x32xf32> to vector<64xf32>
    %62 = vector.shape_cast %61 : vector<64xf32> to vector<64x1xf32>
    %cst_23 = arith.constant 3.200000e+01 : f32
    %63 = vector.broadcast %cst_23 : f32 to vector<64x1xf32>
    %64 = arith.divf %62, %63 : vector<64x1xf32>
    %65 = vector.broadcast %64 : vector<64x1xf32> to vector<64x32xf32>
    %66 = arith.subf %60, %65 : vector<64x32xf32>
    %67 = arith.mulf %66, %66 : vector<64x32xf32>
    %cst_24 = arith.constant dense<0.000000e+00> : vector<64xf32>
    %68 = vector.multi_reduction <add>, %67, %cst_24 [1] : vector<64x32xf32> to vector<64xf32>
    %69 = vector.shape_cast %68 : vector<64xf32> to vector<64x1xf32>
    %cst_25 = arith.constant 3.200000e+01 : f32
    %70 = vector.broadcast %cst_25 : f32 to vector<64x1xf32>
    %71 = arith.divf %69, %70 : vector<64x1xf32>
    %72 = vector.broadcast %64 : vector<64x1xf32> to vector<64x32xf32>
    %73 = arith.subf %60, %72 : vector<64x32xf32>
    %cst_26 = arith.constant 9.99999974E-6 : f32
    %74 = vector.broadcast %cst_26 : f32 to vector<64x1xf32>
    %75 = arith.addf %71, %74 : vector<64x1xf32>
    %76 = math.rsqrt %75 : vector<64x1xf32>
    %77 = vector.broadcast %76 : vector<64x1xf32> to vector<64x32xf32>
    %78 = arith.mulf %73, %77 : vector<64x32xf32>
    %79 = vector.broadcast %12 : vector<1x32xf32> to vector<64x32xf32>
    %80 = arith.mulf %78, %79 : vector<64x32xf32>
    %81 = vector.broadcast %13 : vector<1x32xf32> to vector<64x32xf32>
    %82 = arith.addf %80, %81 : vector<64x32xf32>
    %cst_27 = arith.constant 0.000000e+00 : f32
    %83 = vector.broadcast %cst_27 : f32 to vector<64x32xf32>
    %84 = arith.maximumf %82, %83 : vector<64x32xf32>
    %85 = arith.addf %84, %0 : vector<64x32xf32>
    %cst_28 = arith.constant dense<0.000000e+00> : vector<512x32xf32>
    %86 = tpu.matmul %25, %85, %cst_28 {dimension_numbers = #tpu.dot_dimension_numbers<[1], [0], [0], [1], [0, 0, 1, 1], [], []>} : vector<512x64xf32>, vector<64x32xf32>, vector<512x32xf32> -> vector<512x32xf32>
    %87 = vector.extract_strided_slice %86 {offsets = [0, 0], sizes = [256, 32], strides = [1, 1]} : vector<512x32xf32> to vector<256x32xf32>
    %88 = vector.extract_strided_slice %86 {offsets = [256, 0], sizes = [256, 32], strides = [1, 1]} : vector<512x32xf32> to vector<256x32xf32>
    %89 = tpu.concatenate %87, %88, %1 in 1 : vector<256x32xf32>, vector<256x32xf32>, vector<256x32xf32> -> vector<256x96xf32>
    %cst_29 = arith.constant dense<0.000000e+00> : vector<256x32xf32>
    %90 = tpu.matmul %89, %5, %cst_29 {dimension_numbers = #tpu.dot_dimension_numbers<[1], [0], [0], [1], [0, 0, 1, 1], [], []>} : vector<256x96xf32>, vector<96x32xf32>, vector<256x32xf32> -> vector<256x32xf32>
    %91 = vector.broadcast %14 : vector<1x32xf32> to vector<256x32xf32>
    %92 = arith.addf %90, %91 : vector<256x32xf32>
    %cst_30 = arith.constant dense<0.000000e+00> : vector<256xf32>
    %93 = vector.multi_reduction <add>, %92, %cst_30 [1] : vector<256x32xf32> to vector<256xf32>
    %94 = vector.shape_cast %93 : vector<256xf32> to vector<256x1xf32>
    %cst_31 = arith.constant 3.200000e+01 : f32
    %95 = vector.broadcast %cst_31 : f32 to vector<256x1xf32>
    %96 = arith.divf %94, %95 : vector<256x1xf32>
    %97 = vector.broadcast %96 : vector<256x1xf32> to vector<256x32xf32>
    %98 = arith.subf %92, %97 : vector<256x32xf32>
    %99 = arith.mulf %98, %98 : vector<256x32xf32>
    %cst_32 = arith.constant dense<0.000000e+00> : vector<256xf32>
    %100 = vector.multi_reduction <add>, %99, %cst_32 [1] : vector<256x32xf32> to vector<256xf32>
    %101 = vector.shape_cast %100 : vector<256xf32> to vector<256x1xf32>
    %cst_33 = arith.constant 3.200000e+01 : f32
    %102 = vector.broadcast %cst_33 : f32 to vector<256x1xf32>
    %103 = arith.divf %101, %102 : vector<256x1xf32>
    %104 = vector.broadcast %96 : vector<256x1xf32> to vector<256x32xf32>
    %105 = arith.subf %92, %104 : vector<256x32xf32>
    %cst_34 = arith.constant 9.99999974E-6 : f32
    %106 = vector.broadcast %cst_34 : f32 to vector<256x1xf32>
    %107 = arith.addf %103, %106 : vector<256x1xf32>
    %108 = math.rsqrt %107 : vector<256x1xf32>
    %109 = vector.broadcast %108 : vector<256x1xf32> to vector<256x32xf32>
    %110 = arith.mulf %105, %109 : vector<256x32xf32>
    %111 = vector.broadcast %15 : vector<1x32xf32> to vector<256x32xf32>
    %112 = arith.mulf %110, %111 : vector<256x32xf32>
    %113 = vector.broadcast %16 : vector<1x32xf32> to vector<256x32xf32>
    %114 = arith.addf %112, %113 : vector<256x32xf32>
    %cst_35 = arith.constant 0.000000e+00 : f32
    %115 = vector.broadcast %cst_35 : f32 to vector<256x32xf32>
    %116 = arith.maximumf %114, %115 : vector<256x32xf32>
    %cst_36 = arith.constant dense<0.000000e+00> : vector<256x32xf32>
    %117 = tpu.matmul %116, %6, %cst_36 {dimension_numbers = #tpu.dot_dimension_numbers<[1], [0], [0], [1], [0, 0, 1, 1], [], []>} : vector<256x32xf32>, vector<32x32xf32>, vector<256x32xf32> -> vector<256x32xf32>
    %118 = vector.broadcast %17 : vector<1x32xf32> to vector<256x32xf32>
    %119 = arith.addf %117, %118 : vector<256x32xf32>
    %cst_37 = arith.constant dense<0.000000e+00> : vector<256xf32>
    %120 = vector.multi_reduction <add>, %119, %cst_37 [1] : vector<256x32xf32> to vector<256xf32>
    %121 = vector.shape_cast %120 : vector<256xf32> to vector<256x1xf32>
    %cst_38 = arith.constant 3.200000e+01 : f32
    %122 = vector.broadcast %cst_38 : f32 to vector<256x1xf32>
    %123 = arith.divf %121, %122 : vector<256x1xf32>
    %124 = vector.broadcast %123 : vector<256x1xf32> to vector<256x32xf32>
    %125 = arith.subf %119, %124 : vector<256x32xf32>
    %126 = arith.mulf %125, %125 : vector<256x32xf32>
    %cst_39 = arith.constant dense<0.000000e+00> : vector<256xf32>
    %127 = vector.multi_reduction <add>, %126, %cst_39 [1] : vector<256x32xf32> to vector<256xf32>
    %128 = vector.shape_cast %127 : vector<256xf32> to vector<256x1xf32>
    %cst_40 = arith.constant 3.200000e+01 : f32
    %129 = vector.broadcast %cst_40 : f32 to vector<256x1xf32>
    %130 = arith.divf %128, %129 : vector<256x1xf32>
    %131 = vector.broadcast %123 : vector<256x1xf32> to vector<256x32xf32>
    %132 = arith.subf %119, %131 : vector<256x32xf32>
    %cst_41 = arith.constant 9.99999974E-6 : f32
    %133 = vector.broadcast %cst_41 : f32 to vector<256x1xf32>
    %134 = arith.addf %130, %133 : vector<256x1xf32>
    %135 = math.rsqrt %134 : vector<256x1xf32>
    %136 = vector.broadcast %135 : vector<256x1xf32> to vector<256x32xf32>
    %137 = arith.mulf %132, %136 : vector<256x32xf32>
    %138 = vector.broadcast %18 : vector<1x32xf32> to vector<256x32xf32>
    %139 = arith.mulf %137, %138 : vector<256x32xf32>
    %140 = vector.broadcast %19 : vector<1x32xf32> to vector<256x32xf32>
    %141 = arith.addf %139, %140 : vector<256x32xf32>
    %142 = math.tanh %141 : vector<256x32xf32>
    %143 = arith.addf %142, %1 : vector<256x32xf32>
    %c0_42 = arith.constant 0 : index
    %c0_43 = arith.constant 0 : index
    %144 = vector.load %arg6[%c0_42, %c0_43] : memref<64x32xf32, #tpu.memory_space<vmem>>, vector<64x32xf32>
    tpu.vector_store %arg6[%c0_42, %c0_43], %85 {strides = array<i32>} : memref<64x32xf32, #tpu.memory_space<vmem>>, vector<64x32xf32>,
    %c0_44 = arith.constant 0 : index
    %c0_45 = arith.constant 0 : index
    %145 = vector.load %arg7[%c0_44, %c0_45] : memref<256x32xf32, #tpu.memory_space<vmem>>, vector<256x32xf32>
    tpu.vector_store %arg7[%c0_44, %c0_45], %143 {strides = array<i32>} : memref<256x32xf32, #tpu.memory_space<vmem>>, vector<256x32xf32>,
    return
  }
}

</mosaic_0001>

<llo_original>
// kernel: interaction_gnn_cell.1
$region0: #{interaction_gnn_cell.1}
  #allocation0 [shape = 'u32[]', space=smem, size = 0x4, offset = 0x4, fixed_abs, tag = 'smem constant byte address 0x4 - core index']
  #allocation1 [shape = 'u32[144,128]{1,0:T(1,128)}', space=vmem, size = 0x12000, scoped, tag = 'internal scratch']
  %s0 = inlined_call_operand.vmem [shape: f32[64,32], index: 0, kind: input, shape index: {}]
  %s1 = inlined_call_operand.vmem [shape: f32[256,32], index: 1, kind: input, shape index: {}]
  %s2 = inlined_call_operand.vmem [shape: s32[512,1], index: 2, kind: input, shape index: {}]
  %s3 = inlined_call_operand.vmem [shape: f32[256,1], index: 3, kind: input, shape index: {}]
  %s4 = inlined_call_operand.vmem [shape: f32[224,32], index: 4, kind: input, shape index: {}]
  %s5 = inlined_call_operand.vmem [shape: f32[12,32], index: 5, kind: input, shape index: {}]
  %s6 = inlined_call_operand.vmem [shape: f32[64,32], index: 6, kind: output, shape index: {0}]
  %s7 = inlined_call_operand.vmem [shape: f32[256,32], index: 7, kind: output, shape index: {1}]
  %8 = xla_tuple %s6, %s7
  %s9 = sld [smem:[#allocation0]]
  $region42: #{interaction_gnn_cell.1} parent=0
    _
  %s11 = ssub.s32 1, %s9
  %s12 = scalar_select 0, %s11, %s9
  // Predicated region
  $region2: #{interaction_gnn_cell.1} parent=0 // pred_check
    _
  $region3: #{interaction_gnn_cell.1} parent=0 // pred_check_branch
    %14 = sbr.rel (0) target = $region5
  $region4: #{interaction_gnn_cell.1} parent=0 // pred_region
    _
  $region5: #{interaction_gnn_cell.1} parent=0 // pred_fallthru
    _
  // Predicated region
  $region6: #{interaction_gnn_cell.1} parent=0 // pred_check
    _
  $region7: #{interaction_gnn_cell.1} parent=0 // pred_check_branch
    %16 = sbr.rel (0) target = $region9
  $region8: #{interaction_gnn_cell.1} parent=0 // pred_region
    _
  $region9: #{interaction_gnn_cell.1} parent=0 // pred_fallthru
    _
  // Predicated region
  $region10: #{interaction_gnn_cell.1} parent=0 // pred_check
    _
  $region11: #{interaction_gnn_cell.1} parent=0 // pred_check_branch
    %18 = sbr.rel (0) target = $region13
  $region12: #{interaction_gnn_cell.1} parent=0 // pred_region
    _
  $region13: #{interaction_gnn_cell.1} parent=0 // pred_fallthru
    _
  // Predicated region
  $region14: #{interaction_gnn_cell.1} parent=0 // pred_check
    _
  $region15: #{interaction_gnn_cell.1} parent=0 // pred_check_branch
    %20 = sbr.rel (0) target = $region17
  $region16: #{interaction_gnn_cell.1} parent=0 // pred_region
    _
  $region17: #{interaction_gnn_cell.1} parent=0 // pred_fallthru
    _
  // Predicated region
  $region18: #{interaction_gnn_cell.1} parent=0 // pred_check
    _
  $region19: #{interaction_gnn_cell.1} parent=0 // pred_check_branch
    %22 = sbr.rel (0) target = $region21
  $region20: #{interaction_gnn_cell.1} parent=0 // pred_region
    _
  $region21: #{interaction_gnn_cell.1} parent=0 // pred_fallthru
    _
  // Predicated region
  $region22: #{interaction_gnn_cell.1} parent=0 // pred_check
    _
  $region23: #{interaction_gnn_cell.1} parent=0 // pred_check_branch
    %24 = sbr.rel (0) target = $region25
  $region24: #{interaction_gnn_cell.1} parent=0 // pred_region
    _
  $region25: #{interaction_gnn_cell.1} parent=0 // pred_fallthru
    _
  %v25 = vld [vmem:[%s0] sm:$0xff]
  %v26 = vld [vmem:[%s0 + $0x8] sm:$0xff]
  %v27 = vld [vmem:[%s0 + $0x10] sm:$0xff]
  %v28 = vld [vmem:[%s0 + $0x18] sm:$0xff]
  %v29 = vld [vmem:[%s0 + $0x20] sm:$0xff]
  %v30 = vld [vmem:[%s0 + $0x28] sm:$0xff]
  %v31 = vld [vmem:[%s0 + $0x30] sm:$0xff]
  %v32 = vld [vmem:[%s0 + $0x38] sm:$0xff]
  %v33 = vld [vmem:[%s1] sm:$0xff]
  %v34 = vld [vmem:[%s1 + $0x8] sm:$0xff]
  %v35 = vld [vmem:[%s1 + $0x10] sm:$0xff]
  %v36 = vld [vmem:[%s1 + $0x18] sm:$0xff]
  %v37 = vld [vmem:[%s1 + $0x20] sm:$0xff]
  %v38 = vld [vmem:[%s1 + $0x28] sm:$0xff]
  %v39 = vld [vmem:[%s1 + $0x30] sm:$0xff]
  %v40 = vld [vmem:[%s1 + $0x38] sm:$0xff]
  %v41 = vld [vmem:[%s1 + $0x40] sm:$0xff]
  %v42 = vld [vmem:[%s1 + $0x48] sm:$0xff]
  %v43 = vld [vmem:[%s1 + $0x50] sm:$0xff]
  %v44 = vld [vmem:[%s1 + $0x58] sm:$0xff]
  %v45 = vld [vmem:[%s1 + $0x60] sm:$0xff]
  %v46 = vld [vmem:[%s1 + $0x68] sm:$0xff]
  %v47 = vld [vmem:[%s1 + $0x70] sm:$0xff]
  %v48 = vld [vmem:[%s1 + $0x78] sm:$0xff]
  %v49 = vld [vmem:[%s1 + $0x80] sm:$0xff]
  %v50 = vld [vmem:[%s1 + $0x88] sm:$0xff]
  %v51 = vld [vmem:[%s1 + $0x90] sm:$0xff]
  %v52 = vld [vmem:[%s1 + $0x98] sm:$0xff]
  %v53 = vld [vmem:[%s1 + $0xa0] sm:$0xff]
  %v54 = vld [vmem:[%s1 + $0xa8] sm:$0xff]
  %v55 = vld [vmem:[%s1 + $0xb0] sm:$0xff]
  %v56 = vld [vmem:[%s1 + $0xb8] sm:$0xff]
  %v57 = vld [vmem:[%s1 + $0xc0] sm:$0xff]
  %v58 = vld [vmem:[%s1 + $0xc8] sm:$0xff]
  %v59 = vld [vmem:[%s1 + $0xd0] sm:$0xff]
  %v60 = vld [vmem:[%s1 + $0xd8] sm:$0xff]
  %v61 = vld [vmem:[%s1 + $0xe0] sm:$0xff]
  %v62 = vld [vmem:[%s1 + $0xe8] sm:$0xff]
  %v63 = vld [vmem:[%s1 + $0xf0] sm:$0xff]
  %v64 = vld [vmem:[%s1 + $0xf8] sm:$0xff]
  %v65 = vld [vmem:[%s3] sm:$0xff]
  %v66 = vld [vmem:[%s3 + $0x8] sm:$0xff]
  %v67 = vld [vmem:[%s3 + $0x10] sm:$0xff]
  %v68 = vld [vmem:[%s3 + $0x18] sm:$0xff]
  %v69 = vld [vmem:[%s3 + $0x20] sm:$0xff]
  %v70 = vld [vmem:[%s3 + $0x28] sm:$0xff]
  %v71 = vld [vmem:[%s3 + $0x30] sm:$0xff]
  %v72 = vld [vmem:[%s3 + $0x38] sm:$0xff]
  %v73 = vld [vmem:[%s3 + $0x40] sm:$0xff]
  %v74 = vld [vmem:[%s3 + $0x48] sm:$0xff]
  %v75 = vld [vmem:[%s3 + $0x50] sm:$0xff]
  %v76 = vld [vmem:[%s3 + $0x58] sm:$0xff]
  %v77 = vld [vmem:[%s3 + $0x60] sm:$0xff]
  %v78 = vld [vmem:[%s3 + $0x68] sm:$0xff]
  %v79 = vld [vmem:[%s3 + $0x70] sm:$0xff]
  %v80 = vld [vmem:[%s3 + $0x78] sm:$0xff]
  %v81 = vld [vmem:[%s3 + $0x80] sm:$0xff]
  %v82 = vld [vmem:[%s3 + $0x88] sm:$0xff]
  %v83 = vld [vmem:[%s3 + $0x90] sm:$0xff]
  %v84 = vld [vmem:[%s3 + $0x98] sm:$0xff]
  %v85 = vld [vmem:[%s3 + $0xa0] sm:$0xff]
  %v86 = vld [vmem:[%s3 + $0xa8] sm:$0xff]
  %v87 = vld [vmem:[%s3 + $0xb0] sm:$0xff]
  %v88 = vld [vmem:[%s3 + $0xb8] sm:$0xff]
  %v89 = vld [vmem:[%s3 + $0xc0] sm:$0xff]
  %v90 = vld [vmem:[%s3 + $0xc8] sm:$0xff]
  %v91 = vld [vmem:[%s3 + $0xd0] sm:$0xff]
  %v92 = vld [vmem:[%s3 + $0xd8] sm:$0xff]
  %v93 = vld [vmem:[%s3 + $0xe0] sm:$0xff]
  %v94 = vld [vmem:[%s3 + $0xe8] sm:$0xff]
  %v95 = vld [vmem:[%s3 + $0xf0] sm:$0xff]
  %v96 = vld [vmem:[%s3 + $0xf8] sm:$0xff]
  %v97 = vld [vmem:[%s4] sm:$0xff]
  %v98 = vld [vmem:[%s4 + $0x8] sm:$0xff]
  %v99 = vld [vmem:[%s4 + $0x10] sm:$0xff]
  %v100 = vld [vmem:[%s4 + $0x18] sm:$0xff]
  %v101 = vld [vmem:[%s4 + $0x20] sm:$0xff]
  %v102 = vld [vmem:[%s4 + $0x28] sm:$0xff]
  %v103 = vld [vmem:[%s4 + $0x30] sm:$0xff]
  %v104 = vld [vmem:[%s4 + $0x38] sm:$0xff]
  %v105 = vld [vmem:[%s4 + $0x40] sm:$0xff]
  %v106 = vld [vmem:[%s4 + $0x48] sm:$0xff]
  %v107 = vld [vmem:[%s4 + $0x50] sm:$0xff]
  %v108 = vld [vmem:[%s4 + $0x58] sm:$0xff]
  %v109 = vld [vmem:[%s4 + $0x60] sm:$0xff]
  %v110 = vld [vmem:[%s4 + $0x68] sm:$0xff]
  %v111 = vld [vmem:[%s4 + $0x70] sm:$0xff]
  %v112 = vld [vmem:[%s4 + $0x78] sm:$0xff]
  %v113 = vld [vmem:[%s4 + $0x80] sm:$0xff]
  %v114 = vld [vmem:[%s4 + $0x88] sm:$0xff]
  %v115 = vld [vmem:[%s4 + $0x90] sm:$0xff]
  %v116 = vld [vmem:[%s4 + $0x98] sm:$0xff]
  %v117 = vld [vmem:[%s4 + $0xa0] sm:$0xff]
  %v118 = vld [vmem:[%s4 + $0xa8] sm:$0xff]
  %v119 = vld [vmem:[%s4 + $0xb0] sm:$0xff]
  %v120 = vld [vmem:[%s4 + $0xb8] sm:$0xff]
  %v121 = vld [vmem:[%s4 + $0xc0] sm:$0xff]
  %v122 = vld [vmem:[%s4 + $0xc8] sm:$0xff]
  %v123 = vld [vmem:[%s4 + $0xd0] sm:$0xff]
  %v124 = vld [vmem:[%s4 + $0xd8] sm:$0xff]
  %v125 = vld [vmem:[%s5] sm:$0xff]
  %v126 = vld [vmem:[%s5 + $0x8] sm:$0xf]
  %v127 = vld [vmem:[%s2] sm:$0xff]
  %v128 = vld [vmem:[%s2 + $0x8] sm:$0xff]
  %v129 = vld [vmem:[%s2 + $0x10] sm:$0xff]
  %v130 = vld [vmem:[%s2 + $0x18] sm:$0xff]
  %v131 = vld [vmem:[%s2 + $0x20] sm:$0xff]
  %v132 = vld [vmem:[%s2 + $0x28] sm:$0xff]
  %v133 = vld [vmem:[%s2 + $0x30] sm:$0xff]
  %v134 = vld [vmem:[%s2 + $0x38] sm:$0xff]
  %v135 = vld [vmem:[%s2 + $0x40] sm:$0xff]
  %v136 = vld [vmem:[%s2 + $0x48] sm:$0xff]
  %v137 = vld [vmem:[%s2 + $0x50] sm:$0xff]
  %v138 = vld [vmem:[%s2 + $0x58] sm:$0xff]
  %v139 = vld [vmem:[%s2 + $0x60] sm:$0xff]
  %v140 = vld [vmem:[%s2 + $0x68] sm:$0xff]
  %v141 = vld [vmem:[%s2 + $0x70] sm:$0xff]
  %v142 = vld [vmem:[%s2 + $0x78] sm:$0xff]
  %v143 = vld [vmem:[%s2 + $0x80] sm:$0xff]
  %v144 = vld [vmem:[%s2 + $0x88] sm:$0xff]
  %v145 = vld [vmem:[%s2 + $0x90] sm:$0xff]
  %v146 = vld [vmem:[%s2 + $0x98] sm:$0xff]
  %v147 = vld [vmem:[%s2 + $0xa0] sm:$0xff]
  %v148 = vld [vmem:[%s2 + $0xa8] sm:$0xff]
  %v149 = vld [vmem:[%s2 + $0xb0] sm:$0xff]
  %v150 = vld [vmem:[%s2 + $0xb8] sm:$0xff]
  %v151 = vld [vmem:[%s2 + $0xc0] sm:$0xff]
  %v152 = vld [vmem:[%s2 + $0xc8] sm:$0xff]
  %v153 = vld [vmem:[%s2 + $0xd0] sm:$0xff]
  %v154 = vld [vmem:[%s2 + $0xd8] sm:$0xff]
  %v155 = vld [vmem:[%s2 + $0xe0] sm:$0xff]
  %v156 = vld [vmem:[%s2 + $0xe8] sm:$0xff]
  %v157 = vld [vmem:[%s2 + $0xf0] sm:$0xff]
  %v158 = vld [vmem:[%s2 + $0xf8] sm:$0xff]
  %v159 = vld [vmem:[%s2 + $0x100] sm:$0xff]
  %v160 = vld [vmem:[%s2 + $0x108] sm:$0xff]
  %v161 = vld [vmem:[%s2 + $0x110] sm:$0xff]
  %v162 = vld [vmem:[%s2 + $0x118] sm:$0xff]
  %v163 = vld [vmem:[%s2 + $0x120] sm:$0xff]
  %v164 = vld [vmem:[%s2 + $0x128] sm:$0xff]
  %v165 = vld [vmem:[%s2 + $0x130] sm:$0xff]
  %v166 = vld [vmem:[%s2 + $0x138] sm:$0xff]
  %v167 = vld [vmem:[%s2 + $0x140] sm:$0xff]
  %v168 = vld [vmem:[%s2 + $0x148] sm:$0xff]
  %v169 = vld [vmem:[%s2 + $0x150] sm:$0xff]
  %v170 = vld [vmem:[%s2 + $0x158] sm:$0xff]
  %v171 = vld [vmem:[%s2 + $0x160] sm:$0xff]
  %v172 = vld [vmem:[%s2 + $0x168] sm:$0xff]
  %v173 = vld [vmem:[%s2 + $0x170] sm:$0xff]
  %v174 = vld [vmem:[%s2 + $0x178] sm:$0xff]
  %v175 = vld [vmem:[%s2 + $0x180] sm:$0xff]
  %v176 = vld [vmem:[%s2 + $0x188] sm:$0xff]
  %v177 = vld [vmem:[%s2 + $0x190] sm:$0xff]
  %v178 = vld [vmem:[%s2 + $0x198] sm:$0xff]
  %v179 = vld [vmem:[%s2 + $0x1a0] sm:$0xff]
  %v180 = vld [vmem:[%s2 + $0x1a8] sm:$0xff]
  %v181 = vld [vmem:[%s2 + $0x1b0] sm:$0xff]
  %v182 = vld [vmem:[%s2 + $0x1b8] sm:$0xff]
  %v183 = vld [vmem:[%s2 + $0x1c0] sm:$0xff]
  %v184 = vld [vmem:[%s2 + $0x1c8] sm:$0xff]
  %v185 = vld [vmem:[%s2 + $0x1d0] sm:$0xff]
  %v186 = vld [vmem:[%s2 + $0x1d8] sm:$0xff]
  %v187 = vld [vmem:[%s2 + $0x1e0] sm:$0xff]
  %v188 = vld [vmem:[%s2 + $0x1e8] sm:$0xff]
  %v189 = vld [vmem:[%s2 + $0x1f0] sm:$0xff]
  %v190 = vld [vmem:[%s2 + $0x1f8] sm:$0xff]
  %v191 = vlaneseq
  %v192 = vand.u32 %v191, 127
  %193 = vset.pattern.permute.xlu0 0
  %194 = vperm.xlu0 %193, %v127
  %v195 = vpop.permute.xlu0 %194
  %196 = vset.pattern.permute.xlu0 0
  %197 = vperm.xlu0 %196, %v128
  %v198 = vpop.permute.xlu0 %197
  %199 = vset.pattern.permute.xlu0 0
  %200 = vperm.xlu0 %199, %v129
  %v201 = vpop.permute.xlu0 %200
  %202 = vset.pattern.permute.xlu0 0
  %203 = vperm.xlu0 %202, %v130
  %v204 = vpop.permute.xlu0 %203
  %205 = vset.pattern.permute.xlu0 0
  %206 = vperm.xlu0 %205, %v131
  %v207 = vpop.permute.xlu0 %206
  %208 = vset.pattern.permute.xlu0 0
  %209 = vperm.xlu0 %208, %v132
  %v210 = vpop.permute.xlu0 %209
  %211 = vset.pattern.permute.xlu0 0
  %212 = vperm.xlu0 %211, %v133
  %v213 = vpop.permute.xlu0 %212
  %214 = vset.pattern.permute.xlu0 0
  %215 = vperm.xlu0 %214, %v134
  %v216 = vpop.permute.xlu0 %215
  %217 = vset.pattern.permute.xlu0 0
  %218 = vperm.xlu0 %217, %v135
  %v219 = vpop.permute.xlu0 %218
  %220 = vset.pattern.permute.xlu0 0
  %221 = vperm.xlu0 %220, %v136
  %v222 = vpop.permute.xlu0 %221
  %223 = vset.pattern.permute.xlu0 0
  %224 = vperm.xlu0 %223, %v137
  %v225 = vpop.permute.xlu0 %224
  %226 = vset.pattern.permute.xlu0 0
  %227 = vperm.xlu0 %226, %v138
  %v228 = vpop.permute.xlu0 %227
  %229 = vset.pattern.permute.xlu0 0
  %230 = vperm.xlu0 %229, %v139
  %v231 = vpop.permute.xlu0 %230
  %232 = vset.pattern.permute.xlu0 0
  %233 = vperm.xlu0 %232, %v140
  %v234 = vpop.permute.xlu0 %233
  %235 = vset.pattern.permute.xlu0 0
  %236 = vperm.xlu0 %235, %v141
  %v237 = vpop.permute.xlu0 %236
  %238 = vset.pattern.permute.xlu0 0
  %239 = vperm.xlu0 %238, %v142
  %v240 = vpop.permute.xlu0 %239
  %241 = vset.pattern.permute.xlu0 0
  %242 = vperm.xlu0 %241, %v143
  %v243 = vpop.permute.xlu0 %242
  %244 = vset.pattern.permute.xlu0 0
  %245 = vperm.xlu0 %244, %v144
  %v246 = vpop.permute.xlu0 %245
  %247 = vset.pattern.permute.xlu0 0
  %248 = vperm.xlu0 %247, %v145
  %v249 = vpop.permute.xlu0 %248
  %250 = vset.pattern.permute.xlu0 0
  %251 = vperm.xlu0 %250, %v146
  %v252 = vpop.permute.xlu0 %251
  %253 = vset.pattern.permute.xlu0 0
  %254 = vperm.xlu0 %253, %v147
  %v255 = vpop.permute.xlu0 %254
  %256 = vset.pattern.permute.xlu0 0
  %257 = vperm.xlu0 %256, %v148
  %v258 = vpop.permute.xlu0 %257
  %259 = vset.pattern.permute.xlu0 0
  %260 = vperm.xlu0 %259, %v149
  %v261 = vpop.permute.xlu0 %260
  %262 = vset.pattern.permute.xlu0 0
  %263 = vperm.xlu0 %262, %v150
  %v264 = vpop.permute.xlu0 %263
  %265 = vset.pattern.permute.xlu0 0
  %266 = vperm.xlu0 %265, %v151
  %v267 = vpop.permute.xlu0 %266
  %268 = vset.pattern.permute.xlu0 0
  %269 = vperm.xlu0 %268, %v152
  %v270 = vpop.permute.xlu0 %269
  %271 = vset.pattern.permute.xlu0 0
  %272 = vperm.xlu0 %271, %v153
  %v273 = vpop.permute.xlu0 %272
  %274 = vset.pattern.permute.xlu0 0
  %275 = vperm.xlu0 %274, %v154
  %v276 = vpop.permute.xlu0 %275
  %277 = vset.pattern.permute.xlu0 0
  %278 = vperm.xlu0 %277, %v155
  %v279 = vpop.permute.xlu0 %278
  %280 = vset.pattern.permute.xlu0 0
  %281 = vperm.xlu0 %280, %v156
  %v282 = vpop.permute.xlu0 %281
  %283 = vset.pattern.permute.xlu0 0
  %284 = vperm.xlu0 %283, %v157
  %v285 = vpop.permute.xlu0 %284
  %286 = vset.pattern.permute.xlu0 0
  %287 = vperm.xlu0 %286, %v158
  %v288 = vpop.permute.xlu0 %287
  %289 = vset.pattern.permute.xlu0 0
  %290 = vperm.xlu0 %289, %v159
  %v291 = vpop.permute.xlu0 %290
  %292 = vset.pattern.permute.xlu0 0
  %293 = vperm.xlu0 %292, %v160
  %v294 = vpop.permute.xlu0 %293
  %295 = vset.pattern.permute.xlu0 0
  %296 = vperm.xlu0 %295, %v161
  %v297 = vpop.permute.xlu0 %296
  %298 = vset.pattern.permute.xlu0 0
  %299 = vperm.xlu0 %298, %v162
  %v300 = vpop.permute.xlu0 %299
  %301 = vset.pattern.permute.xlu0 0
  %302 = vperm.xlu0 %301, %v163
  %v303 = vpop.permute.xlu0 %302
  %304 = vset.pattern.permute.xlu0 0
  %305 = vperm.xlu0 %304, %v164
  %v306 = vpop.permute.xlu0 %305
  %307 = vset.pattern.permute.xlu0 0
  %308 = vperm.xlu0 %307, %v165
  %v309 = vpop.permute.xlu0 %308
  %310 = vset.pattern.permute.xlu0 0
  %311 = vperm.xlu0 %310, %v166
  %v312 = vpop.permute.xlu0 %311
  %313 = vset.pattern.permute.xlu0 0
  %314 = vperm.xlu0 %313, %v167
  %v315 = vpop.permute.xlu0 %314
  %316 = vset.pattern.permute.xlu0 0
  %317 = vperm.xlu0 %316, %v168
  %v318 = vpop.permute.xlu0 %317
  %319 = vset.pattern.permute.xlu0 0
  %320 = vperm.xlu0 %319, %v169
  %v321 = vpop.permute.xlu0 %320
  %322 = vset.pattern.permute.xlu0 0
  %323 = vperm.xlu0 %322, %v170
  %v324 = vpop.permute.xlu0 %323
  %325 = vset.pattern.permute.xlu0 0
  %326 = vperm.xlu0 %325, %v171
  %v327 = vpop.permute.xlu0 %326
  %328 = vset.pattern.permute.xlu0 0
  %329 = vperm.xlu0 %328, %v172
  %v330 = vpop.permute.xlu0 %329
  %331 = vset.pattern.permute.xlu0 0
  %332 = vperm.xlu0 %331, %v173
  %v333 = vpop.permute.xlu0 %332
  %334 = vset.pattern.permute.xlu0 0
  %335 = vperm.xlu0 %334, %v174
  %v336 = vpop.permute.xlu0 %335
  %337 = vset.pattern.permute.xlu0 0
  %338 = vperm.xlu0 %337, %v175
  %v339 = vpop.permute.xlu0 %338
  %340 = vset.pattern.permute.xlu0 0
  %341 = vperm.xlu0 %340, %v176
  %v342 = vpop.permute.xlu0 %341
  %343 = vset.pattern.permute.xlu0 0
  %344 = vperm.xlu0 %343, %v177
  %v345 = vpop.permute.xlu0 %344
  %346 = vset.pattern.permute.xlu0 0
  %347 = vperm.xlu0 %346, %v178
  %v348 = vpop.permute.xlu0 %347
  %349 = vset.pattern.permute.xlu0 0
  %350 = vperm.xlu0 %349, %v179
  %v351 = vpop.permute.xlu0 %350
  %352 = vset.pattern.permute.xlu0 0
  %353 = vperm.xlu0 %352, %v180
  %v354 = vpop.permute.xlu0 %353
  %355 = vset.pattern.permute.xlu0 0
  %356 = vperm.xlu0 %355, %v181
  %v357 = vpop.permute.xlu0 %356
  %358 = vset.pattern.permute.xlu0 0
  %359 = vperm.xlu0 %358, %v182
  %v360 = vpop.permute.xlu0 %359
  %361 = vset.pattern.permute.xlu0 0
  %362 = vperm.xlu0 %361, %v183
  %v363 = vpop.permute.xlu0 %362
  %364 = vset.pattern.permute.xlu0 0
  %365 = vperm.xlu0 %364, %v184
  %v366 = vpop.permute.xlu0 %365
  %367 = vset.pattern.permute.xlu0 0
  %368 = vperm.xlu0 %367, %v185
  %v369 = vpop.permute.xlu0 %368
  %370 = vset.pattern.permute.xlu0 0
  %371 = vperm.xlu0 %370, %v186
  %v372 = vpop.permute.xlu0 %371
  %373 = vset.pattern.permute.xlu0 0
  %374 = vperm.xlu0 %373, %v187
  %v375 = vpop.permute.xlu0 %374
  %376 = vset.pattern.permute.xlu0 0
  %377 = vperm.xlu0 %376, %v188
  %v378 = vpop.permute.xlu0 %377
  %379 = vset.pattern.permute.xlu0 0
  %380 = vperm.xlu0 %379, %v189
  %v381 = vpop.permute.xlu0 %380
  %382 = vset.pattern.permute.xlu0 0
  %383 = vperm.xlu0 %382, %v190
  %v384 = vpop.permute.xlu0 %383
  %vm385 = vcmp.eq.s32.totalorder %v192, %v195
  %vm386 = vcmp.eq.s32.totalorder %v192, %v198
  %vm387 = vcmp.eq.s32.totalorder %v192, %v201
  %vm388 = vcmp.eq.s32.totalorder %v192, %v204
  %vm389 = vcmp.eq.s32.totalorder %v192, %v207
  %vm390 = vcmp.eq.s32.totalorder %v192, %v210
  %vm391 = vcmp.eq.s32.totalorder %v192, %v213
  %vm392 = vcmp.eq.s32.totalorder %v192, %v216
  %vm393 = vcmp.eq.s32.totalorder %v192, %v219
  %vm394 = vcmp.eq.s32.totalorder %v192, %v222
  %vm395 = vcmp.eq.s32.totalorder %v192, %v225
  %vm396 = vcmp.eq.s32.totalorder %v192, %v228
  %vm397 = vcmp.eq.s32.totalorder %v192, %v231
  %vm398 = vcmp.eq.s32.totalorder %v192, %v234
  %vm399 = vcmp.eq.s32.totalorder %v192, %v237
  %vm400 = vcmp.eq.s32.totalorder %v192, %v240
  %vm401 = vcmp.eq.s32.totalorder %v192, %v243
  %vm402 = vcmp.eq.s32.totalorder %v192, %v246
  %vm403 = vcmp.eq.s32.totalorder %v192, %v249
  %vm404 = vcmp.eq.s32.totalorder %v192, %v252
  %vm405 = vcmp.eq.s32.totalorder %v192, %v255
  %vm406 = vcmp.eq.s32.totalorder %v192, %v258
  %vm407 = vcmp.eq.s32.totalorder %v192, %v261
  %vm408 = vcmp.eq.s32.totalorder %v192, %v264
  %vm409 = vcmp.eq.s32.totalorder %v192, %v267
  %vm410 = vcmp.eq.s32.totalorder %v192, %v270
  %vm411 = vcmp.eq.s32.totalorder %v192, %v273
  %vm412 = vcmp.eq.s32.totalorder %v192, %v276
  %vm413 = vcmp.eq.s32.totalorder %v192, %v279
  %vm414 = vcmp.eq.s32.totalorder %v192, %v282
  %vm415 = vcmp.eq.s32.totalorder %v192, %v285
  %vm416 = vcmp.eq.s32.totalorder %v192, %v288
  %vm417 = vcmp.eq.s32.totalorder %v192, %v291
  %vm418 = vcmp.eq.s32.totalorder %v192, %v294
  %vm419 = vcmp.eq.s32.totalorder %v192, %v297
  %vm420 = vcmp.eq.s32.totalorder %v192, %v300
  %vm421 = vcmp.eq.s32.totalorder %v192, %v303
  %vm422 = vcmp.eq.s32.totalorder %v192, %v306
  %vm423 = vcmp.eq.s32.totalorder %v192, %v309
  %vm424 = vcmp.eq.s32.totalorder %v192, %v312
  %vm425 = vcmp.eq.s32.totalorder %v192, %v315
  %vm426 = vcmp.eq.s32.totalorder %v192, %v318
  %vm427 = vcmp.eq.s32.totalorder %v192, %v321
  %vm428 = vcmp.eq.s32.totalorder %v192, %v324
  %vm429 = vcmp.eq.s32.totalorder %v192, %v327
  %vm430 = vcmp.eq.s32.totalorder %v192, %v330
  %vm431 = vcmp.eq.s32.totalorder %v192, %v333
  %vm432 = vcmp.eq.s32.totalorder %v192, %v336
  %vm433 = vcmp.eq.s32.totalorder %v192, %v339
  %vm434 = vcmp.eq.s32.totalorder %v192, %v342
  %vm435 = vcmp.eq.s32.totalorder %v192, %v345
  %vm436 = vcmp.eq.s32.totalorder %v192, %v348
  %vm437 = vcmp.eq.s32.totalorder %v192, %v351
  %vm438 = vcmp.eq.s32.totalorder %v192, %v354
  %vm439 = vcmp.eq.s32.totalorder %v192, %v357
  %vm440 = vcmp.eq.s32.totalorder %v192, %v360
  %vm441 = vcmp.eq.s32.totalorder %v192, %v363
  %vm442 = vcmp.eq.s32.totalorder %v192, %v366
  %vm443 = vcmp.eq.s32.totalorder %v192, %v369
  %vm444 = vcmp.eq.s32.totalorder %v192, %v372
  %vm445 = vcmp.eq.s32.totalorder %v192, %v375
  %vm446 = vcmp.eq.s32.totalorder %v192, %v378
  %vm447 = vcmp.eq.s32.totalorder %v192, %v381
  %vm448 = vcmp.eq.s32.totalorder %v192, %v384
  %v449 = vsel %vm385, 1, 0
  %v450 = vsel %vm386, 1, 0
  %v451 = vsel %vm387, 1, 0
  %v452 = vsel %vm388, 1, 0
  %v453 = vsel %vm389, 1, 0
  %v454 = vsel %vm390, 1, 0
  %v455 = vsel %vm391, 1, 0
  %v456 = vsel %vm392, 1, 0
  %v457 = vsel %vm393, 1, 0
  %v458 = vsel %vm394, 1, 0
  %v459 = vsel %vm395, 1, 0
  %v460 = vsel %vm396, 1, 0
  %v461 = vsel %vm397, 1, 0
  %v462 = vsel %vm398, 1, 0
  %v463 = vsel %vm399, 1, 0
  %v464 = vsel %vm400, 1, 0
  %v465 = vsel %vm401, 1, 0
  %v466 = vsel %vm402, 1, 0
  %v467 = vsel %vm403, 1, 0
  %v468 = vsel %vm404, 1, 0
  %v469 = vsel %vm405, 1, 0
  %v470 = vsel %vm406, 1, 0
  %v471 = vsel %vm407, 1, 0
  %v472 = vsel %vm408, 1, 0
  %v473 = vsel %vm409, 1, 0
  %v474 = vsel %vm410, 1, 0
  %v475 = vsel %vm411, 1, 0
  %v476 = vsel %vm412, 1, 0
  %v477 = vsel %vm413, 1, 0
  %v478 = vsel %vm414, 1, 0
  %v479 = vsel %vm415, 1, 0
  %v480 = vsel %vm416, 1, 0
  %v481 = vsel %vm417, 1, 0
  %v482 = vsel %vm418, 1, 0
  %v483 = vsel %vm419, 1, 0
  %v484 = vsel %vm420, 1, 0
  %v485 = vsel %vm421, 1, 0
  %v486 = vsel %vm422, 1, 0
  %v487 = vsel %vm423, 1, 0
  %v488 = vsel %vm424, 1, 0
  %v489 = vsel %vm425, 1, 0
  %v490 = vsel %vm426, 1, 0
  %v491 = vsel %vm427, 1, 0
  %v492 = vsel %vm428, 1, 0
  %v493 = vsel %vm429, 1, 0
  %v494 = vsel %vm430, 1, 0
  %v495 = vsel %vm431, 1, 0
  %v496 = vsel %vm432, 1, 0
  %v497 = vsel %vm433, 1, 0
  %v498 = vsel %vm434, 1, 0
  %v499 = vsel %vm435, 1, 0
  %v500 = vsel %vm436, 1, 0
  %v501 = vsel %vm437, 1, 0
  %v502 = vsel %vm438, 1, 0
  %v503 = vsel %vm439, 1, 0
  %v504 = vsel %vm440, 1, 0
  %v505 = vsel %vm441, 1, 0
  %v506 = vsel %vm442, 1, 0
  %v507 = vsel %vm443, 1, 0
  %v508 = vsel %vm444, 1, 0
  %v509 = vsel %vm445, 1, 0
  %v510 = vsel %vm446, 1, 0
  %v511 = vsel %vm447, 1, 0
  %v512 = vsel %vm448, 1, 0
  %v513 = vcvt.s32.f32 %v449
  %v514 = vcvt.s32.f32 %v450
  %v515 = vcvt.s32.f32 %v451
  %v516 = vcvt.s32.f32 %v452
  %v517 = vcvt.s32.f32 %v453
  %v518 = vcvt.s32.f32 %v454
  %v519 = vcvt.s32.f32 %v455
  %v520 = vcvt.s32.f32 %v456
  %v521 = vcvt.s32.f32 %v457
  %v522 = vcvt.s32.f32 %v458
  %v523 = vcvt.s32.f32 %v459
  %v524 = vcvt.s32.f32 %v460
  %v525 = vcvt.s32.f32 %v461
  %v526 = vcvt.s32.f32 %v462
  %v527 = vcvt.s32.f32 %v463
  %v528 = vcvt.s32.f32 %v464
  %v529 = vcvt.s32.f32 %v465
  %v530 = vcvt.s32.f32 %v466
  %v531 = vcvt.s32.f32 %v467
  %v532 = vcvt.s32.f32 %v468
  %v533 = vcvt.s32.f32 %v469
  %v534 = vcvt.s32.f32 %v470
  %v535 = vcvt.s32.f32 %v471
  %v536 = vcvt.s32.f32 %v472
  %v537 = vcvt.s32.f32 %v473
  %v538 = vcvt.s32.f32 %v474
  %v539 = vcvt.s32.f32 %v475
  %v540 = vcvt.s32.f32 %v476
  %v541 = vcvt.s32.f32 %v477
  %v542 = vcvt.s32.f32 %v478
  %v543 = vcvt.s32.f32 %v479
  %v544 = vcvt.s32.f32 %v480
  %v545 = vcvt.s32.f32 %v481
  %v546 = vcvt.s32.f32 %v482
  %v547 = vcvt.s32.f32 %v483
  %v548 = vcvt.s32.f32 %v484
  %v549 = vcvt.s32.f32 %v485
  %v550 = vcvt.s32.f32 %v486
  %v551 = vcvt.s32.f32 %v487
  %v552 = vcvt.s32.f32 %v488
  %v553 = vcvt.s32.f32 %v489
  %v554 = vcvt.s32.f32 %v490
  %v555 = vcvt.s32.f32 %v491
  %v556 = vcvt.s32.f32 %v492
  %v557 = vcvt.s32.f32 %v493
  %v558 = vcvt.s32.f32 %v494
  %v559 = vcvt.s32.f32 %v495
  %v560 = vcvt.s32.f32 %v496
  %v561 = vcvt.s32.f32 %v497
  %v562 = vcvt.s32.f32 %v498
  %v563 = vcvt.s32.f32 %v499
  %v564 = vcvt.s32.f32 %v500
  %v565 = vcvt.s32.f32 %v501
  %v566 = vcvt.s32.f32 %v502
  %v567 = vcvt.s32.f32 %v503
  %v568 = vcvt.s32.f32 %v504
  %v569 = vcvt.s32.f32 %v505
  %v570 = vcvt.s32.f32 %v506
  %v571 = vcvt.s32.f32 %v507
  %v572 = vcvt.s32.f32 %v508
  %v573 = vcvt.s32.f32 %v509
  %v574 = vcvt.s32.f32 %v510
  %v575 = vcvt.s32.f32 %v511
  %v576 = vcvt.s32.f32 %v512
  %578 = vset.pattern.permute.xlu0 0
  %579 = vperm.xlu0 %578, %v65
  %v580 = vpop.permute.xlu0 %579
  %583 = vset.pattern.permute.xlu0 0
  %584 = vperm.xlu0 %583, %v66
  %v585 = vpop.permute.xlu0 %584
  %588 = vset.pattern.permute.xlu0 0
  %589 = vperm.xlu0 %588, %v67
  %v590 = vpop.permute.xlu0 %589
  %593 = vset.pattern.permute.xlu0 0
  %594 = vperm.xlu0 %593, %v68
  %v595 = vpop.permute.xlu0 %594
  %598 = vset.pattern.permute.xlu0 0
  %599 = vperm.xlu0 %598, %v69
  %v600 = vpop.permute.xlu0 %599
  %603 = vset.pattern.permute.xlu0 0
  %604 = vperm.xlu0 %603, %v70
  %v605 = vpop.permute.xlu0 %604
  %608 = vset.pattern.permute.xlu0 0
  %609 = vperm.xlu0 %608, %v71
  %v610 = vpop.permute.xlu0 %609
  %613 = vset.pattern.permute.xlu0 0
  %614 = vperm.xlu0 %613, %v72
  %v615 = vpop.permute.xlu0 %614
  %618 = vset.pattern.permute.xlu0 0
  %619 = vperm.xlu0 %618, %v73
  %v620 = vpop.permute.xlu0 %619
  %623 = vset.pattern.permute.xlu0 0
  %624 = vperm.xlu0 %623, %v74
  %v625 = vpop.permute.xlu0 %624
  %628 = vset.pattern.permute.xlu0 0
  %629 = vperm.xlu0 %628, %v75
  %v630 = vpop.permute.xlu0 %629
  %633 = vset.pattern.permute.xlu0 0
  %634 = vperm.xlu0 %633, %v76
  %v635 = vpop.permute.xlu0 %634
  %638 = vset.pattern.permute.xlu0 0
  %639 = vperm.xlu0 %638, %v77
  %v640 = vpop.permute.xlu0 %639
  %643 = vset.pattern.permute.xlu0 0
  %644 = vperm.xlu0 %643, %v78
  %v645 = vpop.permute.xlu0 %644
  %648 = vset.pattern.permute.xlu0 0
  %649 = vperm.xlu0 %648, %v79
  %v650 = vpop.permute.xlu0 %649
  %653 = vset.pattern.permute.xlu0 0
  %654 = vperm.xlu0 %653, %v80
  %v655 = vpop.permute.xlu0 %654
  %658 = vset.pattern.permute.xlu0 0
  %659 = vperm.xlu0 %658, %v81
  %v660 = vpop.permute.xlu0 %659
  %663 = vset.pattern.permute.xlu0 0
  %664 = vperm.xlu0 %663, %v82
  %v665 = vpop.permute.xlu0 %664
  %668 = vset.pattern.permute.xlu0 0
  %669 = vperm.xlu0 %668, %v83
  %v670 = vpop.permute.xlu0 %669
  %673 = vset.pattern.permute.xlu0 0
  %674 = vperm.xlu0 %673, %v84
  %v675 = vpop.permute.xlu0 %674
  %678 = vset.pattern.permute.xlu0 0
  %679 = vperm.xlu0 %678, %v85
  %v680 = vpop.permute.xlu0 %679
  %683 = vset.pattern.permute.xlu0 0
  %684 = vperm.xlu0 %683, %v86
  %v685 = vpop.permute.xlu0 %684
  %688 = vset.pattern.permute.xlu0 0
  %689 = vperm.xlu0 %688, %v87
  %v690 = vpop.permute.xlu0 %689
  %693 = vset.pattern.permute.xlu0 0
  %694 = vperm.xlu0 %693, %v88
  %v695 = vpop.permute.xlu0 %694
  %698 = vset.pattern.permute.xlu0 0
  %699 = vperm.xlu0 %698, %v89
  %v700 = vpop.permute.xlu0 %699
  %703 = vset.pattern.permute.xlu0 0
  %704 = vperm.xlu0 %703, %v90
  %v705 = vpop.permute.xlu0 %704
  %708 = vset.pattern.permute.xlu0 0
  %709 = vperm.xlu0 %708, %v91
  %v710 = vpop.permute.xlu0 %709
  %713 = vset.pattern.permute.xlu0 0
  %714 = vperm.xlu0 %713, %v92
  %v715 = vpop.permute.xlu0 %714
  %718 = vset.pattern.permute.xlu0 0
  %719 = vperm.xlu0 %718, %v93
  %v720 = vpop.permute.xlu0 %719
  %723 = vset.pattern.permute.xlu0 0
  %724 = vperm.xlu0 %723, %v94
  %v725 = vpop.permute.xlu0 %724
  %728 = vset.pattern.permute.xlu0 0
  %729 = vperm.xlu0 %728, %v95
  %v730 = vpop.permute.xlu0 %729
  %733 = vset.pattern.permute.xlu0 0
  %734 = vperm.xlu0 %733, %v96
  %v735 = vpop.permute.xlu0 %734
  %v737 = vmul.f32 %v33, %v580
  %v738 = vmul.f32 %v34, %v585
  %v739 = vmul.f32 %v35, %v590
  %v740 = vmul.f32 %v36, %v595
  %v741 = vmul.f32 %v37, %v600
  %v742 = vmul.f32 %v38, %v605
  %v743 = vmul.f32 %v39, %v610
  %v744 = vmul.f32 %v40, %v615
  %v745 = vmul.f32 %v41, %v620
  %v746 = vmul.f32 %v42, %v625
  %v747 = vmul.f32 %v43, %v630
  %v748 = vmul.f32 %v44, %v635
  %v749 = vmul.f32 %v45, %v640
  %v750 = vmul.f32 %v46, %v645
  %v751 = vmul.f32 %v47, %v650
  %v752 = vmul.f32 %v48, %v655
  %v753 = vmul.f32 %v49, %v660
  %v754 = vmul.f32 %v50, %v665
  %v755 = vmul.f32 %v51, %v670
  %v756 = vmul.f32 %v52, %v675
  %v757 = vmul.f32 %v53, %v680
  %v758 = vmul.f32 %v54, %v685
  %v759 = vmul.f32 %v55, %v690
  %v760 = vmul.f32 %v56, %v695
  %v761 = vmul.f32 %v57, %v700
  %v762 = vmul.f32 %v58, %v705
  %v763 = vmul.f32 %v59, %v710
  %v764 = vmul.f32 %v60, %v715
  %v765 = vmul.f32 %v61, %v720
  %v766 = vmul.f32 %v62, %v725
  %v767 = vmul.f32 %v63, %v730
  %v768 = vmul.f32 %v64, %v735
  %769 = vxpose.xlu0.b32.start [1/16] %v545, 128
  %770 = vxpose.xlu0.b32.cont [2/16] %v546, 128
  %771 = vxpose.xlu0.b32.cont [3/16] %v547, 128
  %772 = vxpose.xlu0.b32.cont [4/16] %v548, 128
  %773 = vxpose.xlu0.b32.cont [5/16] %v549, 128
  %774 = vxpose.xlu0.b32.cont [6/16] %v550, 128
  %775 = vxpose.xlu0.b32.cont [7/16] %v551, 128
  %776 = vxpose.xlu0.b32.cont [8/16] %v552, 128
  %777 = vxpose.xlu0.b32.cont [9/16] %v553, 128
  %778 = vxpose.xlu0.b32.cont [10/16] %v554, 128
  %779 = vxpose.xlu0.b32.cont [11/16] %v555, 128
  %780 = vxpose.xlu0.b32.cont [12/16] %v556, 128
  %781 = vxpose.xlu0.b32.cont [13/16] %v557, 128
  %782 = vxpose.xlu0.b32.cont [14/16] %v558, 128
  %783 = vxpose.xlu0.b32.cont [15/16] %v559, 128
  %784 = vxpose.xlu0.b32.end [16/16] %v560, 128
  %v785 = vpop.trf.xlu0
  %v786 = vpop.trf.xlu0
  %v787 = vpop.trf.xlu0
  %v788 = vpop.trf.xlu0
  %v789 = vpop.trf.xlu0
  %v790 = vpop.trf.xlu0
  %v791 = vpop.trf.xlu0
  %v792 = vpop.trf.xlu0
  %v793 = vpop.trf.xlu0
  %v794 = vpop.trf.xlu0
  %v795 = vpop.trf.xlu0
  %v796 = vpop.trf.xlu0
  %v797 = vpop.trf.xlu0
  %v798 = vpop.trf.xlu0
  %v799 = vpop.trf.xlu0
  %v800 = vpop.trf.xlu0
  %801 = vxpose.xlu0.b32.start [1/16] %v561, 128
  %802 = vxpose.xlu0.b32.cont [2/16] %v562, 128
  %803 = vxpose.xlu0.b32.cont [3/16] %v563, 128
  %804 = vxpose.xlu0.b32.cont [4/16] %v564, 128
  %805 = vxpose.xlu0.b32.cont [5/16] %v565, 128
  %806 = vxpose.xlu0.b32.cont [6/16] %v566, 128
  %807 = vxpose.xlu0.b32.cont [7/16] %v567, 128
  %808 = vxpose.xlu0.b32.cont [8/16] %v568, 128
  %809 = vxpose.xlu0.b32.cont [9/16] %v569, 128
  %810 = vxpose.xlu0.b32.cont [10/16] %v570, 128
  %811 = vxpose.xlu0.b32.cont [11/16] %v571, 128
  %812 = vxpose.xlu0.b32.cont [12/16] %v572, 128
  %813 = vxpose.xlu0.b32.cont [13/16] %v573, 128
  %814 = vxpose.xlu0.b32.cont [14/16] %v574, 128
  %815 = vxpose.xlu0.b32.cont [15/16] %v575, 128
  %816 = vxpose.xlu0.b32.end [16/16] %v576, 128
  %v817 = vpop.trf.xlu0
  %v818 = vpop.trf.xlu0
  %v819 = vpop.trf.xlu0
  %v820 = vpop.trf.xlu0
  %v821 = vpop.trf.xlu0
  %v822 = vpop.trf.xlu0
  %v823 = vpop.trf.xlu0
  %v824 = vpop.trf.xlu0
  %v825 = vpop.trf.xlu0
  %v826 = vpop.trf.xlu0
  %v827 = vpop.trf.xlu0
  %v828 = vpop.trf.xlu0
  %v829 = vpop.trf.xlu0
  %v830 = vpop.trf.xlu0
  %v831 = vpop.trf.xlu0
  %v832 = vpop.trf.xlu0
  %833 = vmatprep.subr.mxu0 0.0
  %834 = vmatpush1.msra.mxu0 %v737
  %835 = vmatprep.subr.mxu0 0.0
  %836 = vmatpush1.msra.mxu0 %v738
  %837 = vmatprep.subr.mxu0 0.0
  %838 = vmatpush1.msra.mxu0 %v739
  %839 = vmatprep.subr.mxu0 0.0
  %840 = vmatpush1.msra.mxu0 %v740
  %841 = vmatprep.subr.mxu0 0.0
  %842 = vmatpush1.msra.mxu0 %v741
  %843 = vmatprep.subr.mxu0 0.0
  %844 = vmatpush1.msra.mxu0 %v742
  %845 = vmatprep.subr.mxu0 0.0
  %846 = vmatpush1.msra.mxu0 %v743
  %847 = vmatprep.subr.mxu0 0.0
  %848 = vmatpush1.msra.mxu0 %v744
  %849 = vmatprep.subr.mxu0 0.0
  %850 = vmatpush1.msra.mxu0 %v745
  %851 = vmatprep.subr.mxu0 0.0
  %852 = vmatpush1.msra.mxu0 %v746
  %853 = vmatprep.subr.mxu0 0.0
  %854 = vmatpush1.msra.mxu0 %v747
  %855 = vmatprep.subr.mxu0 0.0
  %856 = vmatpush1.msra.mxu0 %v748
  %857 = vmatprep.subr.mxu0 0.0
  %858 = vmatpush1.msra.mxu0 %v749
  %859 = vmatprep.subr.mxu0 0.0
  %860 = vmatpush1.msra.mxu0 %v750
  %861 = vmatprep.subr.mxu0 0.0
  %862 = vmatpush1.msra.mxu0 %v751
  %863 = vmatprep.subr.mxu0 0.0
  %864 = vmatpush1.msra.mxu0 %v752
  %865 = vmatprep.subr.mxu0 0.0
  %866 = vmatpush1.msra.mxu0 %v753
  %867 = vmatprep.subr.mxu0 0.0
  %868 = vmatpush1.msra.mxu0 %v754
  %869 = vmatprep.subr.mxu0 0.0
  %870 = vmatpush1.msra.mxu0 %v755
  %871 = vmatprep.subr.mxu0 0.0
  %872 = vmatpush1.msra.mxu0 %v756
  %873 = vmatprep.subr.mxu0 0.0
  %874 = vmatpush1.msra.mxu0 %v757
  %875 = vmatprep.subr.mxu0 0.0
  %876 = vmatpush1.msra.mxu0 %v758
  %877 = vmatprep.subr.mxu0 0.0
  %878 = vmatpush1.msra.mxu0 %v759
  %879 = vmatprep.subr.mxu0 0.0
  %880 = vmatpush1.msra.mxu0 %v760
  %881 = vmatprep.subr.mxu0 0.0
  %882 = vmatpush1.msra.mxu0 %v761
  %883 = vmatprep.subr.mxu0 0.0
  %884 = vmatpush1.msra.mxu0 %v762
  %885 = vmatprep.subr.mxu0 0.0
  %886 = vmatpush1.msra.mxu0 %v763
  %887 = vmatprep.subr.mxu0 0.0
  %888 = vmatpush1.msra.mxu0 %v764
  %889 = vmatprep.subr.mxu0 0.0
  %890 = vmatpush1.msra.mxu0 %v765
  %891 = vmatprep.subr.mxu0 0.0
  %892 = vmatpush1.msra.mxu0 %v766
  %893 = vmatprep.subr.mxu0 0.0
  %894 = vmatpush1.msra.mxu0 %v767
  %895 = vmatprep.subr.mxu0 0.0
  %896 = vmatpush1.msra.mxu0 %v768
  %897 = vmatprep.mubr.f32.mxu0 %v817
  %898 = vmatmul.mubr.f32.gmra.mrb[0].mxu0 %v785
  %v899 = vpop.f32.mrb[0].mxu0
  %v900 = vadd.f32 0.0, %v899
  %v901 = vpop.f32.mrb[0].mxu0
  %902 = vmatprep.mubr.f32.mxu0 %v818
  %903 = vmatmul.mubr.f32.gmra.mrb[0].mxu0 %v786
  %v904 = vpop.f32.mrb[0].mxu0
  %v905 = vadd.f32 0.0, %v904
  %v906 = vpop.f32.mrb[0].mxu0
  %907 = vmatprep.mubr.f32.mxu0 %v819
  %908 = vmatmul.mubr.f32.gmra.mrb[0].mxu0 %v787
  %v909 = vpop.f32.mrb[0].mxu0
  %v910 = vadd.f32 0.0, %v909
  %v911 = vpop.f32.mrb[0].mxu0
  %912 = vmatprep.mubr.f32.mxu0 %v820
  %913 = vmatmul.mubr.f32.gmra.mrb[0].mxu0 %v788
  %v914 = vpop.f32.mrb[0].mxu0
  %v915 = vadd.f32 0.0, %v914
  %v916 = vpop.f32.mrb[0].mxu0
  %917 = vmatprep.mubr.f32.mxu0 %v821
  %918 = vmatmul.mubr.f32.gmra.mrb[0].mxu0 %v789
  %v919 = vpop.f32.mrb[0].mxu0
  %v920 = vadd.f32 0.0, %v919
  %v921 = vpop.f32.mrb[0].mxu0
  %922 = vmatprep.mubr.f32.mxu0 %v822
  %923 = vmatmul.mubr.f32.gmra.mrb[0].mxu0 %v790
  %v924 = vpop.f32.mrb[0].mxu0
  %v925 = vadd.f32 0.0, %v924
  %v926 = vpop.f32.mrb[0].mxu0
  %927 = vmatprep.mubr.f32.mxu0 %v823
  %928 = vmatmul.mubr.f32.gmra.mrb[0].mxu0 %v791
  %v929 = vpop.f32.mrb[0].mxu0
  %v930 = vadd.f32 0.0, %v929
  %v931 = vpop.f32.mrb[0].mxu0
  %932 = vmatprep.mubr.f32.mxu0 %v824
  %933 = vmatmul.mubr.f32.gmra.mrb[0].mxu0 %v792
  %v934 = vpop.f32.mrb[0].mxu0
  %v935 = vadd.f32 0.0, %v934
  %v936 = vpop.f32.mrb[0].mxu0
  %937 = vdwg.mxu0
  %946 = vrot.lane.b32.xlu0 %v900, 32
  %v947 = vpop.permute.xlu0 %946
  %948 = vrot.lane.b32.xlu0 %v905, 32
  %v949 = vpop.permute.xlu0 %948
  %950 = vrot.lane.b32.xlu0 %v910, 32
  %v951 = vpop.permute.xlu0 %950
  %952 = vrot.lane.b32.xlu0 %v915, 32
  %v953 = vpop.permute.xlu0 %952
  %954 = vrot.lane.b32.xlu0 %v920, 32
  %v955 = vpop.permute.xlu0 %954
  %956 = vrot.lane.b32.xlu0 %v925, 32
  %v957 = vpop.permute.xlu0 %956
  %958 = vrot.lane.b32.xlu0 %v930, 32
  %v959 = vpop.permute.xlu0 %958
  %960 = vrot.lane.b32.xlu0 %v935, 32
  %v961 = vpop.permute.xlu0 %960
  %vm970 = vcmask 261120
  %v971 = vsel %vm970, %v25, %v947
  %v972 = vsel %vm970, %v26, %v949
  %v973 = vsel %vm970, %v27, %v951
  %v974 = vsel %vm970, %v28, %v953
  %v975 = vsel %vm970, %v29, %v955
  %v976 = vsel %vm970, %v30, %v957
  %v977 = vsel %vm970, %v31, %v959
  %v978 = vsel %vm970, %v32, %v961
  %v979 = vlaneseq
  %v980 = vshrl.u32 %v979, 7
  %v981 = vsub.s32 0, %v980
  %v982 = vrot.slane %v125, %v981
  %vm983 = vcmask 523264
  %v985 = vsel %vm983, %v971, 0
  %v988 = vsel %vm983, %v972, 0
  %v991 = vsel %vm983, %v973, 0
  %v994 = vsel %vm983, %v974, 0
  %v997 = vsel %vm983, %v975, 0
  %v1000 = vsel %vm983, %v976, 0
  %v1003 = vsel %vm983, %v977, 0
  %v1006 = vsel %vm983, %v978, 0
  %1008 = vmatprep.subr.mxu0 0.0
  %1009 = vmatpush1.msra.mxu0 %v97
  %1010 = vmatprep.subr.mxu0 0.0
  %1011 = vmatpush1.msra.mxu0 %v98
  %1012 = vmatprep.subr.mxu0 0.0
  %1013 = vmatpush1.msra.mxu0 %v99
  %1014 = vmatprep.subr.mxu0 0.0
  %1015 = vmatpush1.msra.mxu0 %v100
  %1016 = vmatprep.subr.mxu0 0.0
  %1017 = vmatpush1.msra.mxu0 %v101
  %1018 = vmatprep.subr.mxu0 0.0
  %1019 = vmatpush1.msra.mxu0 %v102
  %1020 = vmatprep.subr.mxu0 0.0
  %1021 = vmatpush1.msra.mxu0 %v103
  %1022 = vmatprep.subr.mxu0 0.0
  %1023 = vmatpush1.msra.mxu0 %v104
  %1024 = vmatprep.subr.mxu0 0.0
  %1025 = vmatpush1.msra.mxu0 0.0
  %1026 = vmatprep.subr.mxu0 0.0
  %1027 = vmatpush1.msra.mxu0 0.0
  %1028 = vmatprep.subr.mxu0 0.0
  %1029 = vmatpush1.msra.mxu0 0.0
  %1030 = vmatprep.subr.mxu0 0.0
  %1031 = vmatpush1.msra.mxu0 0.0
  %1032 = vmatprep.subr.mxu0 0.0
  %1033 = vmatpush1.msra.mxu0 0.0
  %1034 = vmatprep.subr.mxu0 0.0
  %1035 = vmatpush1.msra.mxu0 0.0
  %1036 = vmatprep.subr.mxu0 0.0
  %1037 = vmatpush1.msra.mxu0 0.0
  %1038 = vmatprep.subr.mxu0 0.0
  %1039 = vmatpush1.msra.mxu0 0.0
  %1040 = vmatprep.subr.mxu0 0.0
  %1041 = vmatpush1.msra.mxu0 0.0
  %1042 = vmatprep.subr.mxu0 0.0
  %1043 = vmatpush1.msra.mxu0 0.0
  %1044 = vmatprep.subr.mxu0 0.0
  %1045 = vmatpush1.msra.mxu0 0.0
  %1046 = vmatprep.subr.mxu0 0.0
  %1047 = vmatpush1.msra.mxu0 0.0
  %1048 = vmatprep.subr.mxu0 0.0
  %1049 = vmatpush1.msra.mxu0 0.0
  %1050 = vmatprep.subr.mxu0 0.0
  %1051 = vmatpush1.msra.mxu0 0.0
  %1052 = vmatprep.subr.mxu0 0.0
  %1053 = vmatpush1.msra.mxu0 0.0
  %1054 = vmatprep.subr.mxu0 0.0
  %1055 = vmatpush1.msra.mxu0 0.0
  %1056 = vmatprep.subr.mxu0 0.0
  %1057 = vmatpush1.msra.mxu0 0.0
  %1058 = vmatprep.subr.mxu0 0.0
  %1059 = vmatpush1.msra.mxu0 0.0
  %1060 = vmatprep.subr.mxu0 0.0
  %1061 = vmatpush1.msra.mxu0 0.0
  %1062 = vmatprep.subr.mxu0 0.0
  %1063 = vmatpush1.msra.mxu0 0.0
  %1064 = vmatprep.subr.mxu0 0.0
  %1065 = vmatpush1.msra.mxu0 0.0
  %1066 = vmatprep.subr.mxu0 0.0
  %1067 = vmatpush1.msra.mxu0 0.0
  %1068 = vmatprep.subr.mxu0 0.0
  %1069 = vmatpush1.msra.mxu0 0.0
  %1070 = vmatprep.subr.mxu0 0.0
  %1071 = vmatpush1.msra.mxu0 0.0
  %1072 = vmatprep.mubr.f32.mxu0 0.0
  %1073 = vmatmul.mubr.f32.gmra.mrb[0].mxu0 %v985
  %v1074 = vpop.f32.mrb[0].mxu0
  %v1075 = vadd.f32 %v982, %v1074
  %v1076 = vpop.f32.mrb[0].mxu0
  %1077 = vmatprep.mubr.f32.mxu0 0.0
  %1078 = vmatmul.mubr.f32.gmra.mrb[0].mxu0 %v988
  %v1079 = vpop.f32.mrb[0].mxu0
  %v1080 = vadd.f32 %v982, %v1079
  %v1081 = vpop.f32.mrb[0].mxu0
  %1082 = vmatprep.mubr.f32.mxu0 0.0
  %1083 = vmatmul.mubr.f32.gmra.mrb[0].mxu0 %v991
  %v1084 = vpop.f32.mrb[0].mxu0
  %v1085 = vadd.f32 %v982, %v1084
  %v1086 = vpop.f32.mrb[0].mxu0
  %1087 = vmatprep.mubr.f32.mxu0 0.0
  %1088 = vmatmul.mubr.f32.gmra.mrb[0].mxu0 %v994
  %v1089 = vpop.f32.mrb[0].mxu0
  %v1090 = vadd.f32 %v982, %v1089
  %v1091 = vpop.f32.mrb[0].mxu0
  %1092 = vmatprep.mubr.f32.mxu0 0.0
  %1093 = vmatmul.mubr.f32.gmra.mrb[0].mxu0 %v997
  %v1094 = vpop.f32.mrb[0].mxu0
  %v1095 = vadd.f32 %v982, %v1094
  %v1096 = vpop.f32.mrb[0].mxu0
  %1097 = vmatprep.mubr.f32.mxu0 0.0
  %1098 = vmatmul.mubr.f32.gmra.mrb[0].mxu0 %v1000
  %v1099 = vpop.f32.mrb[0].mxu0
  %v1100 = vadd.f32 %v982, %v1099
  %v1101 = vpop.f32.mrb[0].mxu0
  %1102 = vmatprep.mubr.f32.mxu0 0.0
  %1103 = vmatmul.mubr.f32.gmra.mrb[0].mxu0 %v1003
  %v1104 = vpop.f32.mrb[0].mxu0
  %v1105 = vadd.f32 %v982, %v1104
  %v1106 = vpop.f32.mrb[0].mxu0
  %1107 = vmatprep.mubr.f32.mxu0 0.0
  %1108 = vmatmul.mubr.f32.gmra.mrb[0].mxu0 %v1006
  %v1109 = vpop.f32.mrb[0].mxu0
  %v1110 = vadd.f32 %v982, %v1109
  %v1111 = vpop.f32.mrb[0].mxu0
  %1112 = vdwg.mxu0
  %v1113 = vsel %vm970, %v1075, 0.0
  %1114 = vadd.xlane.f32.xlu0 %v1113
  %v1115 = vpop.xlane.xlu0 %1114
  %v1116 = vsel %vm970, %v1080, 0.0
  %1117 = vadd.xlane.f32.xlu0 %v1116
  %v1118 = vpop.xlane.xlu0 %1117
  %v1119 = vsel %vm970, %v1085, 0.0
  %1120 = vadd.xlane.f32.xlu0 %v1119
  %v1121 = vpop.xlane.xlu0 %1120
  %v1122 = vsel %vm970, %v1090, 0.0
  %1123 = vadd.xlane.f32.xlu0 %v1122
  %v1124 = vpop.xlane.xlu0 %1123
  %v1125 = vsel %vm970, %v1095, 0.0
  %1126 = vadd.xlane.f32.xlu0 %v1125
  %v1127 = vpop.xlane.xlu0 %1126
  %v1128 = vsel %vm970, %v1100, 0.0
  %1129 = vadd.xlane.f32.xlu0 %v1128
  %v1130 = vpop.xlane.xlu0 %1129
  %v1131 = vsel %vm970, %v1105, 0.0
  %1132 = vadd.xlane.f32.xlu0 %v1131
  %v1133 = vpop.xlane.xlu0 %1132
  %v1134 = vsel %vm970, %v1110, 0.0
  %1135 = vadd.xlane.f32.xlu0 %v1134
  %v1136 = vpop.xlane.xlu0 %1135
  %v1137 = vrcp.pop 32.0
  %v1138 = vmul.f32 %v1115, %v1137
  %v1139 = vmul.f32 %v1118, %v1137
  %v1140 = vmul.f32 %v1121, %v1137
  %v1141 = vmul.f32 %v1124, %v1137
  %v1142 = vmul.f32 %v1127, %v1137
  %v1143 = vmul.f32 %v1130, %v1137
  %v1144 = vmul.f32 %v1133, %v1137
  %v1145 = vmul.f32 %v1136, %v1137
  %v1146 = vsub.f32 %v1075, %v1138
  %v1147 = vsub.f32 %v1080, %v1139
  %v1148 = vsub.f32 %v1085, %v1140
  %v1149 = vsub.f32 %v1090, %v1141
  %v1150 = vsub.f32 %v1095, %v1142
  %v1151 = vsub.f32 %v1100, %v1143
  %v1152 = vsub.f32 %v1105, %v1144
  %v1153 = vsub.f32 %v1110, %v1145
  %v1154 = vmul.f32 %v1146, %v1146
  %v1155 = vmul.f32 %v1147, %v1147
  %v1156 = vmul.f32 %v1148, %v1148
  %v1157 = vmul.f32 %v1149, %v1149
  %v1158 = vmul.f32 %v1150, %v1150
  %v1159 = vmul.f32 %v1151, %v1151
  %v1160 = vmul.f32 %v1152, %v1152
  %v1161 = vmul.f32 %v1153, %v1153
  %v1162 = vsel %vm970, %v1154, 0.0
  %1163 = vadd.xlane.f32.xlu0 %v1162
  %v1164 = vpop.xlane.xlu0 %1163
  %v1165 = vsel %vm970, %v1155, 0.0
  %1166 = vadd.xlane.f32.xlu0 %v1165
  %v1167 = vpop.xlane.xlu0 %1166
  %v1168 = vsel %vm970, %v1156, 0.0
  %1169 = vadd.xlane.f32.xlu0 %v1168
  %v1170 = vpop.xlane.xlu0 %1169
  %v1171 = vsel %vm970, %v1157, 0.0
  %1172 = vadd.xlane.f32.xlu0 %v1171
  %v1173 = vpop.xlane.xlu0 %1172
  %v1174 = vsel %vm970, %v1158, 0.0
  %1175 = vadd.xlane.f32.xlu0 %v1174
  %v1176 = vpop.xlane.xlu0 %1175
  %v1177 = vsel %vm970, %v1159, 0.0
  %1178 = vadd.xlane.f32.xlu0 %v1177
  %v1179 = vpop.xlane.xlu0 %1178
  %v1180 = vsel %vm970, %v1160, 0.0
  %1181 = vadd.xlane.f32.xlu0 %v1180
  %v1182 = vpop.xlane.xlu0 %1181
  %v1183 = vsel %vm970, %v1161, 0.0
  %1184 = vadd.xlane.f32.xlu0 %v1183
  %v1185 = vpop.xlane.xlu0 %1184
  %v1186 = vmul.f32 %v1164, %v1137
  %v1187 = vmul.f32 %v1167, %v1137
  %v1188 = vmul.f32 %v1170, %v1137
  %v1189 = vmul.f32 %v1173, %v1137
  %v1190 = vmul.f32 %v1176, %v1137
  %v1191 = vmul.f32 %v1179, %v1137
  %v1192 = vmul.f32 %v1182, %v1137
  %v1193 = vmul.f32 %v1185, %v1137
  %v1194 = vadd.f32 %v1186, 1e-05
  %v1195 = vadd.f32 %v1187, 1e-05
  %v1196 = vadd.f32 %v1188, 1e-05
  %v1197 = vadd.f32 %v1189, 1e-05
  %v1198 = vadd.f32 %v1190, 1e-05
  %v1199 = vadd.f32 %v1191, 1e-05
  %v1200 = vadd.f32 %v1192, 1e-05
  %v1201 = vadd.f32 %v1193, 1e-05
  %v1202 = vrsqrt.pop %v1194
  %v1203 = vrsqrt.pop %v1195
  %v1204 = vrsqrt.pop %v1196
  %v1205 = vrsqrt.pop %v1197
  %v1206 = vrsqrt.pop %v1198
  %v1207 = vrsqrt.pop %v1199
  %v1208 = vrsqrt.pop %v1200
  %v1209 = vrsqrt.pop %v1201
  %v1210 = vmul.f32 %v1146, %v1202
  %v1211 = vmul.f32 %v1147, %v1203
  %v1212 = vmul.f32 %v1148, %v1204
  %v1213 = vmul.f32 %v1149, %v1205
  %v1214 = vmul.f32 %v1150, %v1206
  %v1215 = vmul.f32 %v1151, %v1207
  %v1216 = vmul.f32 %v1152, %v1208
  %v1217 = vmul.f32 %v1153, %v1209
  %v1218 = vlaneseq
  %v1219 = vshrl.u32 %v1218, 7
  %v1220 = vsub.s32 1, %v1219
  %v1221 = vrot.slane %v125, %v1220
  %v1222 = vmul.f32 %v1210, %v1221
  %v1223 = vmul.f32 %v1211, %v1221
  %v1224 = vmul.f32 %v1212, %v1221
  %v1225 = vmul.f32 %v1213, %v1221
  %v1226 = vmul.f32 %v1214, %v1221
  %v1227 = vmul.f32 %v1215, %v1221
  %v1228 = vmul.f32 %v1216, %v1221
  %v1229 = vmul.f32 %v1217, %v1221
  %v1230 = vlaneseq
  %v1231 = vshrl.u32 %v1230, 7
  %v1232 = vsub.s32 2, %v1231
  %v1233 = vrot.slane %v125, %v1232
  %v1234 = vadd.f32 %v1222, %v1233
  %v1235 = vadd.f32 %v1223, %v1233
  %v1236 = vadd.f32 %v1224, %v1233
  %v1237 = vadd.f32 %v1225, %v1233
  %v1238 = vadd.f32 %v1226, %v1233
  %v1239 = vadd.f32 %v1227, %v1233
  %v1240 = vadd.f32 %v1228, %v1233
  %v1241 = vadd.f32 %v1229, %v1233
  %v1242 = vmax.f32 %v1234, 0.0
  %v1243 = vmax.f32 %v1235, 0.0
  %v1244 = vmax.f32 %v1236, 0.0
  %v1245 = vmax.f32 %v1237, 0.0
  %v1246 = vmax.f32 %v1238, 0.0
  %v1247 = vmax.f32 %v1239, 0.0
  %v1248 = vmax.f32 %v1240, 0.0
  %v1249 = vmax.f32 %v1241, 0.0
  %v1250 = vlaneseq
  %v1251 = vshrl.u32 %v1250, 7
  %v1252 = vsub.s32 3, %v1251
  %v1253 = vrot.slane %v125, %v1252
  %v1255 = vsel %vm970, %v1242, 0
  %v1258 = vsel %vm970, %v1243, 0
  %v1261 = vsel %vm970, %v1244, 0
  %v1264 = vsel %vm970, %v1245, 0
  %v1267 = vsel %vm970, %v1246, 0
  %v1270 = vsel %vm970, %v1247, 0
  %v1273 = vsel %vm970, %v1248, 0
  %v1276 = vsel %vm970, %v1249, 0
  %1278 = vmatprep.subr.mxu0 0.0
  %1279 = vmatpush1.msra.mxu0 %v105
  %1280 = vmatprep.subr.mxu0 0.0
  %1281 = vmatpush1.msra.mxu0 %v106
  %1282 = vmatprep.subr.mxu0 0.0
  %1283 = vmatpush1.msra.mxu0 %v107
  %1284 = vmatprep.subr.mxu0 0.0
  %1285 = vmatpush1.msra.mxu0 %v108
  %1286 = vmatprep.subr.mxu0 0.0
  %1287 = vmatpush1.msra.mxu0 0.0
  %1288 = vmatprep.subr.mxu0 0.0
  %1289 = vmatpush1.msra.mxu0 0.0
  %1290 = vmatprep.subr.mxu0 0.0
  %1291 = vmatpush1.msra.mxu0 0.0
  %1292 = vmatprep.subr.mxu0 0.0
  %1293 = vmatpush1.msra.mxu0 0.0
  %1294 = vmatprep.subr.mxu0 0.0
  %1295 = vmatpush1.msra.mxu0 0.0
  %1296 = vmatprep.subr.mxu0 0.0
  %1297 = vmatpush1.msra.mxu0 0.0
  %1298 = vmatprep.subr.mxu0 0.0
  %1299 = vmatpush1.msra.mxu0 0.0
  %1300 = vmatprep.subr.mxu0 0.0
  %1301 = vmatpush1.msra.mxu0 0.0
  %1302 = vmatprep.subr.mxu0 0.0
  %1303 = vmatpush1.msra.mxu0 0.0
  %1304 = vmatprep.subr.mxu0 0.0
  %1305 = vmatpush1.msra.mxu0 0.0
  %1306 = vmatprep.subr.mxu0 0.0
  %1307 = vmatpush1.msra.mxu0 0.0
  %1308 = vmatprep.subr.mxu0 0.0
  %1309 = vmatpush1.msra.mxu0 0.0
  %1310 = vmatprep.subr.mxu0 0.0
  %1311 = vmatpush1.msra.mxu0 0.0
  %1312 = vmatprep.subr.mxu0 0.0
  %1313 = vmatpush1.msra.mxu0 0.0
  %1314 = vmatprep.subr.mxu0 0.0
  %1315 = vmatpush1.msra.mxu0 0.0
  %1316 = vmatprep.subr.mxu0 0.0
  %1317 = vmatpush1.msra.mxu0 0.0
  %1318 = vmatprep.subr.mxu0 0.0
  %1319 = vmatpush1.msra.mxu0 0.0
  %1320 = vmatprep.subr.mxu0 0.0
  %1321 = vmatpush1.msra.mxu0 0.0
  %1322 = vmatprep.subr.mxu0 0.0
  %1323 = vmatpush1.msra.mxu0 0.0
  %1324 = vmatprep.subr.mxu0 0.0
  %1325 = vmatpush1.msra.mxu0 0.0
  %1326 = vmatprep.subr.mxu0 0.0
  %1327 = vmatpush1.msra.mxu0 0.0
  %1328 = vmatprep.subr.mxu0 0.0
  %1329 = vmatpush1.msra.mxu0 0.0
  %1330 = vmatprep.subr.mxu0 0.0
  %1331 = vmatpush1.msra.mxu0 0.0
  %1332 = vmatprep.subr.mxu0 0.0
  %1333 = vmatpush1.msra.mxu0 0.0
  %1334 = vmatprep.subr.mxu0 0.0
  %1335 = vmatpush1.msra.mxu0 0.0
  %1336 = vmatprep.subr.mxu0 0.0
  %1337 = vmatpush1.msra.mxu0 0.0
  %1338 = vmatprep.subr.mxu0 0.0
  %1339 = vmatpush1.msra.mxu0 0.0
  %1340 = vmatprep.subr.mxu0 0.0
  %1341 = vmatpush1.msra.mxu0 0.0
  %1342 = vmatprep.mubr.f32.mxu0 0.0
  %1343 = vmatmul.mubr.f32.gmra.mrb[0].mxu0 %v1255
  %v1344 = vpop.f32.mrb[0].mxu0
  %v1345 = vadd.f32 %v1253, %v1344
  %v1346 = vpop.f32.mrb[0].mxu0
  %1347 = vmatprep.mubr.f32.mxu0 0.0
  %1348 = vmatmul.mubr.f32.gmra.mrb[0].mxu0 %v1258
  %v1349 = vpop.f32.mrb[0].mxu0
  %v1350 = vadd.f32 %v1253, %v1349
  %v1351 = vpop.f32.mrb[0].mxu0
  %1352 = vmatprep.mubr.f32.mxu0 0.0
  %1353 = vmatmul.mubr.f32.gmra.mrb[0].mxu0 %v1261
  %v1354 = vpop.f32.mrb[0].mxu0
  %v1355 = vadd.f32 %v1253, %v1354
  %v1356 = vpop.f32.mrb[0].mxu0
  %1357 = vmatprep.mubr.f32.mxu0 0.0
  %1358 = vmatmul.mubr.f32.gmra.mrb[0].mxu0 %v1264
  %v1359 = vpop.f32.mrb[0].mxu0
  %v1360 = vadd.f32 %v1253, %v1359
  %v1361 = vpop.f32.mrb[0].mxu0
  %1362 = vmatprep.mubr.f32.mxu0 0.0
  %1363 = vmatmul.mubr.f32.gmra.mrb[0].mxu0 %v1267
  %v1364 = vpop.f32.mrb[0].mxu0
  %v1365 = vadd.f32 %v1253, %v1364
  %v1366 = vpop.f32.mrb[0].mxu0
  %1367 = vmatprep.mubr.f32.mxu0 0.0
  %1368 = vmatmul.mubr.f32.gmra.mrb[0].mxu0 %v1270
  %v1369 = vpop.f32.mrb[0].mxu0
  %v1370 = vadd.f32 %v1253, %v1369
  %v1371 = vpop.f32.mrb[0].mxu0
  %1372 = vmatprep.mubr.f32.mxu0 0.0
  %1373 = vmatmul.mubr.f32.gmra.mrb[0].mxu0 %v1273
  %v1374 = vpop.f32.mrb[0].mxu0
  %v1375 = vadd.f32 %v1253, %v1374
  %v1376 = vpop.f32.mrb[0].mxu0
  %1377 = vmatprep.mubr.f32.mxu0 0.0
  %1378 = vmatmul.mubr.f32.gmra.mrb[0].mxu0 %v1276
  %v1379 = vpop.f32.mrb[0].mxu0
  %v1380 = vadd.f32 %v1253, %v1379
  %v1381 = vpop.f32.mrb[0].mxu0
  %1382 = vdwg.mxu0
  %v1383 = vsel %vm970, %v1345, 0.0
  %1384 = vadd.xlane.f32.xlu0 %v1383
  %v1385 = vpop.xlane.xlu0 %1384
  %v1386 = vsel %vm970, %v1350, 0.0
  %1387 = vadd.xlane.f32.xlu0 %v1386
  %v1388 = vpop.xlane.xlu0 %1387
  %v1389 = vsel %vm970, %v1355, 0.0
  %1390 = vadd.xlane.f32.xlu0 %v1389
  %v1391 = vpop.xlane.xlu0 %1390
  %v1392 = vsel %vm970, %v1360, 0.0
  %1393 = vadd.xlane.f32.xlu0 %v1392
  %v1394 = vpop.xlane.xlu0 %1393
  %v1395 = vsel %vm970, %v1365, 0.0
  %1396 = vadd.xlane.f32.xlu0 %v1395
  %v1397 = vpop.xlane.xlu0 %1396
  %v1398 = vsel %vm970, %v1370, 0.0
  %1399 = vadd.xlane.f32.xlu0 %v1398
  %v1400 = vpop.xlane.xlu0 %1399
  %v1401 = vsel %vm970, %v1375, 0.0
  %1402 = vadd.xlane.f32.xlu0 %v1401
  %v1403 = vpop.xlane.xlu0 %1402
  %v1404 = vsel %vm970, %v1380, 0.0
  %1405 = vadd.xlane.f32.xlu0 %v1404
  %v1406 = vpop.xlane.xlu0 %1405
  %v1407 = vmul.f32 %v1385, %v1137
  %v1408 = vmul.f32 %v1388, %v1137
  %v1409 = vmul.f32 %v1391, %v1137
  %v1410 = vmul.f32 %v1394, %v1137
  %v1411 = vmul.f32 %v1397, %v1137
  %v1412 = vmul.f32 %v1400, %v1137
  %v1413 = vmul.f32 %v1403, %v1137
  %v1414 = vmul.f32 %v1406, %v1137
  %v1415 = vsub.f32 %v1345, %v1407
  %v1416 = vsub.f32 %v1350, %v1408
  %v1417 = vsub.f32 %v1355, %v1409
  %v1418 = vsub.f32 %v1360, %v1410
  %v1419 = vsub.f32 %v1365, %v1411
  %v1420 = vsub.f32 %v1370, %v1412
  %v1421 = vsub.f32 %v1375, %v1413
  %v1422 = vsub.f32 %v1380, %v1414
  %v1423 = vmul.f32 %v1415, %v1415
  %v1424 = vmul.f32 %v1416, %v1416
  %v1425 = vmul.f32 %v1417, %v1417
  %v1426 = vmul.f32 %v1418, %v1418
  %v1427 = vmul.f32 %v1419, %v1419
  %v1428 = vmul.f32 %v1420, %v1420
  %v1429 = vmul.f32 %v1421, %v1421
  %v1430 = vmul.f32 %v1422, %v1422
  %v1431 = vsel %vm970, %v1423, 0.0
  %1432 = vadd.xlane.f32.xlu0 %v1431
  %v1433 = vpop.xlane.xlu0 %1432
  %v1434 = vsel %vm970, %v1424, 0.0
  %1435 = vadd.xlane.f32.xlu0 %v1434
  %v1436 = vpop.xlane.xlu0 %1435
  %v1437 = vsel %vm970, %v1425, 0.0
  %1438 = vadd.xlane.f32.xlu0 %v1437
  %v1439 = vpop.xlane.xlu0 %1438
  %v1440 = vsel %vm970, %v1426, 0.0
  %1441 = vadd.xlane.f32.xlu0 %v1440
  %v1442 = vpop.xlane.xlu0 %1441
  %v1443 = vsel %vm970, %v1427, 0.0
  %1444 = vadd.xlane.f32.xlu0 %v1443
  %v1445 = vpop.xlane.xlu0 %1444
  %v1446 = vsel %vm970, %v1428, 0.0
  %1447 = vadd.xlane.f32.xlu0 %v1446
  %v1448 = vpop.xlane.xlu0 %1447
  %v1449 = vsel %vm970, %v1429, 0.0
  %1450 = vadd.xlane.f32.xlu0 %v1449
  %v1451 = vpop.xlane.xlu0 %1450
  %v1452 = vsel %vm970, %v1430, 0.0
  %1453 = vadd.xlane.f32.xlu0 %v1452
  %v1454 = vpop.xlane.xlu0 %1453
  %v1455 = vmul.f32 %v1433, %v1137
  %v1456 = vmul.f32 %v1436, %v1137
  %v1457 = vmul.f32 %v1439, %v1137
  %v1458 = vmul.f32 %v1442, %v1137
  %v1459 = vmul.f32 %v1445, %v1137
  %v1460 = vmul.f32 %v1448, %v1137
  %v1461 = vmul.f32 %v1451, %v1137
  %v1462 = vmul.f32 %v1454, %v1137
  %v1463 = vadd.f32 %v1455, 1e-05
  %v1464 = vadd.f32 %v1456, 1e-05
  %v1465 = vadd.f32 %v1457, 1e-05
  %v1466 = vadd.f32 %v1458, 1e-05
  %v1467 = vadd.f32 %v1459, 1e-05
  %v1468 = vadd.f32 %v1460, 1e-05
  %v1469 = vadd.f32 %v1461, 1e-05
  %v1470 = vadd.f32 %v1462, 1e-05
  %v1471 = vrsqrt.pop %v1463
  %v1472 = vrsqrt.pop %v1464
  %v1473 = vrsqrt.pop %v1465
  %v1474 = vrsqrt.pop %v1466
  %v1475 = vrsqrt.pop %v1467
  %v1476 = vrsqrt.pop %v1468
  %v1477 = vrsqrt.pop %v1469
  %v1478 = vrsqrt.pop %v1470
  %v1479 = vmul.f32 %v1415, %v1471
  %v1480 = vmul.f32 %v1416, %v1472
  %v1481 = vmul.f32 %v1417, %v1473
  %v1482 = vmul.f32 %v1418, %v1474
  %v1483 = vmul.f32 %v1419, %v1475
  %v1484 = vmul.f32 %v1420, %v1476
  %v1485 = vmul.f32 %v1421, %v1477
  %v1486 = vmul.f32 %v1422, %v1478
  %v1487 = vlaneseq
  %v1488 = vshrl.u32 %v1487, 7
  %v1489 = vsub.s32 4, %v1488
  %v1490 = vrot.slane %v125, %v1489
  %v1491 = vmul.f32 %v1479, %v1490
  %v1492 = vmul.f32 %v1480, %v1490
  %v1493 = vmul.f32 %v1481, %v1490
  %v1494 = vmul.f32 %v1482, %v1490
  %v1495 = vmul.f32 %v1483, %v1490
  %v1496 = vmul.f32 %v1484, %v1490
  %v1497 = vmul.f32 %v1485, %v1490
  %v1498 = vmul.f32 %v1486, %v1490
  %v1499 = vlaneseq
  %v1500 = vshrl.u32 %v1499, 7
  %v1501 = vsub.s32 5, %v1500
  %v1502 = vrot.slane %v125, %v1501
  %v1503 = vadd.f32 %v1491, %v1502
  %v1504 = vadd.f32 %v1492, %v1502
  %v1505 = vadd.f32 %v1493, %v1502
  %v1506 = vadd.f32 %v1494, %v1502
  %v1507 = vadd.f32 %v1495, %v1502
  %v1508 = vadd.f32 %v1496, %v1502
  %v1509 = vadd.f32 %v1497, %v1502
  %v1510 = vadd.f32 %v1498, %v1502
  %v1511 = vmax.f32 %v1503, 0.0
  %v1512 = vmax.f32 %v1504, 0.0
  %v1513 = vmax.f32 %v1505, 0.0
  %v1514 = vmax.f32 %v1506, 0.0
  %v1515 = vmax.f32 %v1507, 0.0
  %v1516 = vmax.f32 %v1508, 0.0
  %v1517 = vmax.f32 %v1509, 0.0
  %v1518 = vmax.f32 %v1510, 0.0
  %v1519 = vadd.f32 %v1511, %v25
  %v1520 = vadd.f32 %v1512, %v26
  %v1521 = vadd.f32 %v1513, %v27
  %v1522 = vadd.f32 %v1514, %v28
  %v1523 = vadd.f32 %v1515, %v29
  %v1524 = vadd.f32 %v1516, %v30
  %v1525 = vadd.f32 %v1517, %v31
  %v1526 = vadd.f32 %v1518, %v32
  %v1528 = vsel %vm983, %v513, 0
  %v1531 = vsel %vm983, %v514, 0
  %v1534 = vsel %vm983, %v515, 0
  %v1537 = vsel %vm983, %v516, 0
  %v1540 = vsel %vm983, %v517, 0
  %v1543 = vsel %vm983, %v518, 0
  %v1546 = vsel %vm983, %v519, 0
  %v1549 = vsel %vm983, %v520, 0
  %v1552 = vsel %vm983, %v521, 0
  %v1555 = vsel %vm983, %v522, 0
  %v1558 = vsel %vm983, %v523, 0
  %v1561 = vsel %vm983, %v524, 0
  %v1564 = vsel %vm983, %v525, 0
  %v1567 = vsel %vm983, %v526, 0
  %v1570 = vsel %vm983, %v527, 0
  %v1573 = vsel %vm983, %v528, 0
  %v1576 = vsel %vm983, %v529, 0
  %v1579 = vsel %vm983, %v530, 0
  %v1582 = vsel %vm983, %v531, 0
  %v1585 = vsel %vm983, %v532, 0
  %v1588 = vsel %vm983, %v533, 0
  %v1591 = vsel %vm983, %v534, 0
  %v1594 = vsel %vm983, %v535, 0
  %v1597 = vsel %vm983, %v536, 0
  %v1600 = vsel %vm983, %v537, 0
  %v1603 = vsel %vm983, %v538, 0
  %v1606 = vsel %vm983, %v539, 0
  %v1609 = vsel %vm983, %v540, 0
  %v1612 = vsel %vm983, %v541, 0
  %v1615 = vsel %vm983, %v542, 0
  %v1618 = vsel %vm983, %v543, 0
  %v1621 = vsel %vm983, %v544, 0
  %v1624 = vsel %vm983, %v545, 0
  %v1627 = vsel %vm983, %v546, 0
  %v1630 = vsel %vm983, %v547, 0
  %v1633 = vsel %vm983, %v548, 0
  %v1636 = vsel %vm983, %v549, 0
  %v1639 = vsel %vm983, %v550, 0
  %v1642 = vsel %vm983, %v551, 0
  %v1645 = vsel %vm983, %v552, 0
  %v1648 = vsel %vm983, %v553, 0
  %v1651 = vsel %vm983, %v554, 0
  %v1654 = vsel %vm983, %v555, 0
  %v1657 = vsel %vm983, %v556, 0
  %v1660 = vsel %vm983, %v557, 0
  %v1663 = vsel %vm983, %v558, 0
  %v1666 = vsel %vm983, %v559, 0
  %v1669 = vsel %vm983, %v560, 0
  %v1672 = vsel %vm983, %v561, 0
  %v1675 = vsel %vm983, %v562, 0
  %v1678 = vsel %vm983, %v563, 0
  %v1681 = vsel %vm983, %v564, 0
  %v1684 = vsel %vm983, %v565, 0
  %v1687 = vsel %vm983, %v566, 0
  %v1690 = vsel %vm983, %v567, 0
  %v1693 = vsel %vm983, %v568, 0
  %v1696 = vsel %vm983, %v569, 0
  %v1699 = vsel %vm983, %v570, 0
  %v1702 = vsel %vm983, %v571, 0
  %v1705 = vsel %vm983, %v572, 0
  %v1708 = vsel %vm983, %v573, 0
  %v1711 = vsel %vm983, %v574, 0
  %v1714 = vsel %vm983, %v575, 0
  %v1717 = vsel %vm983, %v576, 0
  %1719 = vmatprep.subr.mxu0 0.0
  %1720 = vmatpush1.msra.mxu0 %v1519
  %1721 = vmatprep.subr.mxu0 0.0
  %1722 = vmatpush1.msra.mxu0 %v1520
  %1723 = vmatprep.subr.mxu0 0.0
  %1724 = vmatpush1.msra.mxu0 %v1521
  %1725 = vmatprep.subr.mxu0 0.0
  %1726 = vmatpush1.msra.mxu0 %v1522
  %1727 = vmatprep.subr.mxu0 0.0
  %1728 = vmatpush1.msra.mxu0 %v1523
  %1729 = vmatprep.subr.mxu0 0.0
  %1730 = vmatpush1.msra.mxu0 %v1524
  %1731 = vmatprep.subr.mxu0 0.0
  %1732 = vmatpush1.msra.mxu0 %v1525
  %1733 = vmatprep.subr.mxu0 0.0
  %1734 = vmatpush1.msra.mxu0 %v1526
  %1735 = vmatprep.subr.mxu0 0.0
  %1736 = vmatpush1.msra.mxu0 0.0
  %1737 = vmatprep.subr.mxu0 0.0
  %1738 = vmatpush1.msra.mxu0 0.0
  %1739 = vmatprep.subr.mxu0 0.0
  %1740 = vmatpush1.msra.mxu0 0.0
  %1741 = vmatprep.subr.mxu0 0.0
  %1742 = vmatpush1.msra.mxu0 0.0
  %1743 = vmatprep.subr.mxu0 0.0
  %1744 = vmatpush1.msra.mxu0 0.0
  %1745 = vmatprep.subr.mxu0 0.0
  %1746 = vmatpush1.msra.mxu0 0.0
  %1747 = vmatprep.subr.mxu0 0.0
  %1748 = vmatpush1.msra.mxu0 0.0
  %1749 = vmatprep.subr.mxu0 0.0
  %1750 = vmatpush1.msra.mxu0 0.0
  %1751 = vmatprep.subr.mxu0 0.0
  %1752 = vmatpush1.msra.mxu0 0.0
  %1753 = vmatprep.subr.mxu0 0.0
  %1754 = vmatpush1.msra.mxu0 0.0
  %1755 = vmatprep.subr.mxu0 0.0
  %1756 = vmatpush1.msra.mxu0 0.0
  %1757 = vmatprep.subr.mxu0 0.0
  %1758 = vmatpush1.msra.mxu0 0.0
  %1759 = vmatprep.subr.mxu0 0.0
  %1760 = vmatpush1.msra.mxu0 0.0
  %1761 = vmatprep.subr.mxu0 0.0
  %1762 = vmatpush1.msra.mxu0 0.0
  %1763 = vmatprep.subr.mxu0 0.0
  %1764 = vmatpush1.msra.mxu0 0.0
  %1765 = vmatprep.subr.mxu0 0.0
  %1766 = vmatpush1.msra.mxu0 0.0
  %1767 = vmatprep.subr.mxu0 0.0
  %1768 = vmatpush1.msra.mxu0 0.0
  %1769 = vmatprep.subr.mxu0 0.0
  %1770 = vmatpush1.msra.mxu0 0.0
  %1771 = vmatprep.subr.mxu0 0.0
  %1772 = vmatpush1.msra.mxu0 0.0
  %1773 = vmatprep.subr.mxu0 0.0
  %1774 = vmatpush1.msra.mxu0 0.0
  %1775 = vmatprep.subr.mxu0 0.0
  %1776 = vmatpush1.msra.mxu0 0.0
  %1777 = vmatprep.subr.mxu0 0.0
  %1778 = vmatpush1.msra.mxu0 0.0
  %1779 = vmatprep.subr.mxu0 0.0
  %1780 = vmatpush1.msra.mxu0 0.0
  %1781 = vmatprep.subr.mxu0 0.0
  %1782 = vmatpush1.msra.mxu0 0.0
  %1783 = vmatprep.mubr.f32.mxu0 0.0
  %1784 = vmatmul.mubr.f32.gmra.mrb[0].mxu0 %v1528
  %v1785 = vpop.f32.mrb[0].mxu0
  %v1786 = vadd.f32 0.0, %v1785
  %v1787 = vpop.f32.mrb[0].mxu0
  %1788 = vmatprep.mubr.f32.mxu0 0.0
  %1789 = vmatmul.mubr.f32.gmra.mrb[0].mxu0 %v1531
  %v1790 = vpop.f32.mrb[0].mxu0
  %v1791 = vadd.f32 0.0, %v1790
  %v1792 = vpop.f32.mrb[0].mxu0
  %1793 = vmatprep.mubr.f32.mxu0 0.0
  %1794 = vmatmul.mubr.f32.gmra.mrb[0].mxu0 %v1534
  %v1795 = vpop.f32.mrb[0].mxu0
  %v1796 = vadd.f32 0.0, %v1795
  %v1797 = vpop.f32.mrb[0].mxu0
  %1798 = vmatprep.mubr.f32.mxu0 0.0
  %1799 = vmatmul.mubr.f32.gmra.mrb[0].mxu0 %v1537
  %v1800 = vpop.f32.mrb[0].mxu0
  %v1801 = vadd.f32 0.0, %v1800
  %v1802 = vpop.f32.mrb[0].mxu0
  %1803 = vmatprep.mubr.f32.mxu0 0.0
  %1804 = vmatmul.mubr.f32.gmra.mrb[0].mxu0 %v1540
  %v1805 = vpop.f32.mrb[0].mxu0
  %v1806 = vadd.f32 0.0, %v1805
  %v1807 = vpop.f32.mrb[0].mxu0
  %1808 = vmatprep.mubr.f32.mxu0 0.0
  %1809 = vmatmul.mubr.f32.gmra.mrb[0].mxu0 %v1543
  %v1810 = vpop.f32.mrb[0].mxu0
  %v1811 = vadd.f32 0.0, %v1810
  %v1812 = vpop.f32.mrb[0].mxu0
  %1813 = vmatprep.mubr.f32.mxu0 0.0
  %1814 = vmatmul.mubr.f32.gmra.mrb[0].mxu0 %v1546
  %v1815 = vpop.f32.mrb[0].mxu0
  %v1816 = vadd.f32 0.0, %v1815
  %v1817 = vpop.f32.mrb[0].mxu0
  %1818 = vmatprep.mubr.f32.mxu0 0.0
  %1819 = vmatmul.mubr.f32.gmra.mrb[0].mxu0 %v1549
  %v1820 = vpop.f32.mrb[0].mxu0
  %v1821 = vadd.f32 0.0, %v1820
  %v1822 = vpop.f32.mrb[0].mxu0
  %1823 = vmatprep.mubr.f32.mxu0 0.0
  %1824 = vmatmul.mubr.f32.gmra.mrb[0].mxu0 %v1552
  %v1825 = vpop.f32.mrb[0].mxu0
  %v1826 = vadd.f32 0.0, %v1825
  %v1827 = vpop.f32.mrb[0].mxu0
  %1828 = vmatprep.mubr.f32.mxu0 0.0
  %1829 = vmatmul.mubr.f32.gmra.mrb[0].mxu0 %v1555
  %v1830 = vpop.f32.mrb[0].mxu0
  %v1831 = vadd.f32 0.0, %v1830
  %v1832 = vpop.f32.mrb[0].mxu0
  %1833 = vmatprep.mubr.f32.mxu0 0.0
  %1834 = vmatmul.mubr.f32.gmra.mrb[0].mxu0 %v1558
  %v1835 = vpop.f32.mrb[0].mxu0
  %v1836 = vadd.f32 0.0, %v1835
  %v1837 = vpop.f32.mrb[0].mxu0
  %1838 = vmatprep.mubr.f32.mxu0 0.0
  %1839 = vmatmul.mubr.f32.gmra.mrb[0].mxu0 %v1561
  %v1840 = vpop.f32.mrb[0].mxu0
  %v1841 = vadd.f32 0.0, %v1840
  %v1842 = vpop.f32.mrb[0].mxu0
  %1843 = vmatprep.mubr.f32.mxu0 0.0
  %1844 = vmatmul.mubr.f32.gmra.mrb[0].mxu0 %v1564
  %v1845 = vpop.f32.mrb[0].mxu0
  %v1846 = vadd.f32 0.0, %v1845
  %v1847 = vpop.f32.mrb[0].mxu0
  %1848 = vmatprep.mubr.f32.mxu0 0.0
  %1849 = vmatmul.mubr.f32.gmra.mrb[0].mxu0 %v1567
  %v1850 = vpop.f32.mrb[0].mxu0
  %v1851 = vadd.f32 0.0, %v1850
  %v1852 = vpop.f32.mrb[0].mxu0
  %1853 = vmatprep.mubr.f32.mxu0 0.0
  %1854 = vmatmul.mubr.f32.gmra.mrb[0].mxu0 %v1570
  %v1855 = vpop.f32.mrb[0].mxu0
  %v1856 = vadd.f32 0.0, %v1855
  %v1857 = vpop.f32.mrb[0].mxu0
  %1858 = vmatprep.mubr.f32.mxu0 0.0
  %1859 = vmatmul.mubr.f32.gmra.mrb[0].mxu0 %v1573
  %v1860 = vpop.f32.mrb[0].mxu0
  %v1861 = vadd.f32 0.0, %v1860
  %v1862 = vpop.f32.mrb[0].mxu0
  %1863 = vmatprep.mubr.f32.mxu0 0.0
  %1864 = vmatmul.mubr.f32.gmra.mrb[0].mxu0 %v1576
  %v1865 = vpop.f32.mrb[0].mxu0
  %v1866 = vadd.f32 0.0, %v1865
  %v1867 = vpop.f32.mrb[0].mxu0
  %1868 = vmatprep.mubr.f32.mxu0 0.0
  %1869 = vmatmul.mubr.f32.gmra.mrb[0].mxu0 %v1579
  %v1870 = vpop.f32.mrb[0].mxu0
  %v1871 = vadd.f32 0.0, %v1870
  %v1872 = vpop.f32.mrb[0].mxu0
  %1873 = vmatprep.mubr.f32.mxu0 0.0
  %1874 = vmatmul.mubr.f32.gmra.mrb[0].mxu0 %v1582
  %v1875 = vpop.f32.mrb[0].mxu0
  %v1876 = vadd.f32 0.0, %v1875
  %v1877 = vpop.f32.mrb[0].mxu0
  %1878 = vmatprep.mubr.f32.mxu0 0.0
  %1879 = vmatmul.mubr.f32.gmra.mrb[0].mxu0 %v1585
  %v1880 = vpop.f32.mrb[0].mxu0
  %v1881 = vadd.f32 0.0, %v1880
  %v1882 = vpop.f32.mrb[0].mxu0
  %1883 = vmatprep.mubr.f32.mxu0 0.0
  %1884 = vmatmul.mubr.f32.gmra.mrb[0].mxu0 %v1588
  %v1885 = vpop.f32.mrb[0].mxu0
  %v1886 = vadd.f32 0.0, %v1885
  %v1887 = vpop.f32.mrb[0].mxu0
  %1888 = vmatprep.mubr.f32.mxu0 0.0
  %1889 = vmatmul.mubr.f32.gmra.mrb[0].mxu0 %v1591
  %v1890 = vpop.f32.mrb[0].mxu0
  %v1891 = vadd.f32 0.0, %v1890
  %v1892 = vpop.f32.mrb[0].mxu0
  %1893 = vmatprep.mubr.f32.mxu0 0.0
  %1894 = vmatmul.mubr.f32.gmra.mrb[0].mxu0 %v1594
  %v1895 = vpop.f32.mrb[0].mxu0
  %v1896 = vadd.f32 0.0, %v1895
  %v1897 = vpop.f32.mrb[0].mxu0
  %1898 = vmatprep.mubr.f32.mxu0 0.0
  %1899 = vmatmul.mubr.f32.gmra.mrb[0].mxu0 %v1597
  %v1900 = vpop.f32.mrb[0].mxu0
  %v1901 = vadd.f32 0.0, %v1900
  %v1902 = vpop.f32.mrb[0].mxu0
  %1903 = vmatprep.mubr.f32.mxu0 0.0
  %1904 = vmatmul.mubr.f32.gmra.mrb[0].mxu0 %v1600
  %v1905 = vpop.f32.mrb[0].mxu0
  %v1906 = vadd.f32 0.0, %v1905
  %v1907 = vpop.f32.mrb[0].mxu0
  %1908 = vmatprep.mubr.f32.mxu0 0.0
  %1909 = vmatmul.mubr.f32.gmra.mrb[0].mxu0 %v1603
  %v1910 = vpop.f32.mrb[0].mxu0
  %v1911 = vadd.f32 0.0, %v1910
  %v1912 = vpop.f32.mrb[0].mxu0
  %1913 = vmatprep.mubr.f32.mxu0 0.0
  %1914 = vmatmul.mubr.f32.gmra.mrb[0].mxu0 %v1606
  %v1915 = vpop.f32.mrb[0].mxu0
  %v1916 = vadd.f32 0.0, %v1915
  %v1917 = vpop.f32.mrb[0].mxu0
  %1918 = vmatprep.mubr.f32.mxu0 0.0
  %1919 = vmatmul.mubr.f32.gmra.mrb[0].mxu0 %v1609
  %v1920 = vpop.f32.mrb[0].mxu0
  %v1921 = vadd.f32 0.0, %v1920
  %v1922 = vpop.f32.mrb[0].mxu0
  %1923 = vmatprep.mubr.f32.mxu0 0.0
  %1924 = vmatmul.mubr.f32.gmra.mrb[0].mxu0 %v1612
  %v1925 = vpop.f32.mrb[0].mxu0
  %v1926 = vadd.f32 0.0, %v1925
  %v1927 = vpop.f32.mrb[0].mxu0
  %1928 = vmatprep.mubr.f32.mxu0 0.0
  %1929 = vmatmul.mubr.f32.gmra.mrb[0].mxu0 %v1615
  %v1930 = vpop.f32.mrb[0].mxu0
  %v1931 = vadd.f32 0.0, %v1930
  %v1932 = vpop.f32.mrb[0].mxu0
  %1933 = vmatprep.mubr.f32.mxu0 0.0
  %1934 = vmatmul.mubr.f32.gmra.mrb[0].mxu0 %v1618
  %v1935 = vpop.f32.mrb[0].mxu0
  %v1936 = vadd.f32 0.0, %v1935
  %v1937 = vpop.f32.mrb[0].mxu0
  %1938 = vmatprep.mubr.f32.mxu0 0.0
  %1939 = vmatmul.mubr.f32.gmra.mrb[0].mxu0 %v1621
  %v1940 = vpop.f32.mrb[0].mxu0
  %v1941 = vadd.f32 0.0, %v1940
  %v1942 = vpop.f32.mrb[0].mxu0
  %1943 = vmatprep.mubr.f32.mxu0 0.0
  %1944 = vmatmul.mubr.f32.gmra.mrb[0].mxu0 %v1624
  %v1945 = vpop.f32.mrb[0].mxu0
  %v1946 = vadd.f32 0.0, %v1945
  %v1947 = vpop.f32.mrb[0].mxu0
  %1948 = vmatprep.mubr.f32.mxu0 0.0
  %1949 = vmatmul.mubr.f32.gmra.mrb[0].mxu0 %v1627
  %v1950 = vpop.f32.mrb[0].mxu0
  %v1951 = vadd.f32 0.0, %v1950
  %v1952 = vpop.f32.mrb[0].mxu0
  %1953 = vmatprep.mubr.f32.mxu0 0.0
  %1954 = vmatmul.mubr.f32.gmra.mrb[0].mxu0 %v1630
  %v1955 = vpop.f32.mrb[0].mxu0
  %v1956 = vadd.f32 0.0, %v1955
  %v1957 = vpop.f32.mrb[0].mxu0
  %1958 = vmatprep.mubr.f32.mxu0 0.0
  %1959 = vmatmul.mubr.f32.gmra.mrb[0].mxu0 %v1633
  %v1960 = vpop.f32.mrb[0].mxu0
  %v1961 = vadd.f32 0.0, %v1960
  %v1962 = vpop.f32.mrb[0].mxu0
  %1963 = vmatprep.mubr.f32.mxu0 0.0
  %1964 = vmatmul.mubr.f32.gmra.mrb[0].mxu0 %v1636
  %v1965 = vpop.f32.mrb[0].mxu0
  %v1966 = vadd.f32 0.0, %v1965
  %v1967 = vpop.f32.mrb[0].mxu0
  %1968 = vmatprep.mubr.f32.mxu0 0.0
  %1969 = vmatmul.mubr.f32.gmra.mrb[0].mxu0 %v1639
  %v1970 = vpop.f32.mrb[0].mxu0
  %v1971 = vadd.f32 0.0, %v1970
  %v1972 = vpop.f32.mrb[0].mxu0
  %1973 = vmatprep.mubr.f32.mxu0 0.0
  %1974 = vmatmul.mubr.f32.gmra.mrb[0].mxu0 %v1642
  %v1975 = vpop.f32.mrb[0].mxu0
  %v1976 = vadd.f32 0.0, %v1975
  %v1977 = vpop.f32.mrb[0].mxu0
  %1978 = vmatprep.mubr.f32.mxu0 0.0
  %1979 = vmatmul.mubr.f32.gmra.mrb[0].mxu0 %v1645
  %v1980 = vpop.f32.mrb[0].mxu0
  %v1981 = vadd.f32 0.0, %v1980
  %v1982 = vpop.f32.mrb[0].mxu0
  %1983 = vmatprep.mubr.f32.mxu0 0.0
  %1984 = vmatmul.mubr.f32.gmra.mrb[0].mxu0 %v1648
  %v1985 = vpop.f32.mrb[0].mxu0
  %v1986 = vadd.f32 0.0, %v1985
  %v1987 = vpop.f32.mrb[0].mxu0
  %1988 = vmatprep.mubr.f32.mxu0 0.0
  %1989 = vmatmul.mubr.f32.gmra.mrb[0].mxu0 %v1651
  %v1990 = vpop.f32.mrb[0].mxu0
  %v1991 = vadd.f32 0.0, %v1990
  %v1992 = vpop.f32.mrb[0].mxu0
  %1993 = vmatprep.mubr.f32.mxu0 0.0
  %1994 = vmatmul.mubr.f32.gmra.mrb[0].mxu0 %v1654
  %v1995 = vpop.f32.mrb[0].mxu0
  %v1996 = vadd.f32 0.0, %v1995
  %v1997 = vpop.f32.mrb[0].mxu0
  %1998 = vmatprep.mubr.f32.mxu0 0.0
  %1999 = vmatmul.mubr.f32.gmra.mrb[0].mxu0 %v1657
  %v2000 = vpop.f32.mrb[0].mxu0
  %v2001 = vadd.f32 0.0, %v2000
  %v2002 = vpop.f32.mrb[0].mxu0
  %2003 = vmatprep.mubr.f32.mxu0 0.0
  %2004 = vmatmul.mubr.f32.gmra.mrb[0].mxu0 %v1660
  %v2005 = vpop.f32.mrb[0].mxu0
  %v2006 = vadd.f32 0.0, %v2005
  %v2007 = vpop.f32.mrb[0].mxu0
  %2008 = vmatprep.mubr.f32.mxu0 0.0
  %2009 = vmatmul.mubr.f32.gmra.mrb[0].mxu0 %v1663
  %v2010 = vpop.f32.mrb[0].mxu0
  %v2011 = vadd.f32 0.0, %v2010
  %v2012 = vpop.f32.mrb[0].mxu0
  %2013 = vmatprep.mubr.f32.mxu0 0.0
  %2014 = vmatmul.mubr.f32.gmra.mrb[0].mxu0 %v1666
  %v2015 = vpop.f32.mrb[0].mxu0
  %v2016 = vadd.f32 0.0, %v2015
  %v2017 = vpop.f32.mrb[0].mxu0
  %2018 = vmatprep.mubr.f32.mxu0 0.0
  %2019 = vmatmul.mubr.f32.gmra.mrb[0].mxu0 %v1669
  %v2020 = vpop.f32.mrb[0].mxu0
  %v2021 = vadd.f32 0.0, %v2020
  %v2022 = vpop.f32.mrb[0].mxu0
  %2023 = vmatprep.mubr.f32.mxu0 0.0
  %2024 = vmatmul.mubr.f32.gmra.mrb[0].mxu0 %v1672
  %v2025 = vpop.f32.mrb[0].mxu0
  %v2026 = vadd.f32 0.0, %v2025
  %v2027 = vpop.f32.mrb[0].mxu0
  %2028 = vmatprep.mubr.f32.mxu0 0.0
  %2029 = vmatmul.mubr.f32.gmra.mrb[0].mxu0 %v1675
  %v2030 = vpop.f32.mrb[0].mxu0
  %v2031 = vadd.f32 0.0, %v2030
  %v2032 = vpop.f32.mrb[0].mxu0
  %2033 = vmatprep.mubr.f32.mxu0 0.0
  %2034 = vmatmul.mubr.f32.gmra.mrb[0].mxu0 %v1678
  %v2035 = vpop.f32.mrb[0].mxu0
  %v2036 = vadd.f32 0.0, %v2035
  %v2037 = vpop.f32.mrb[0].mxu0
  %2038 = vmatprep.mubr.f32.mxu0 0.0
  %2039 = vmatmul.mubr.f32.gmra.mrb[0].mxu0 %v1681
  %v2040 = vpop.f32.mrb[0].mxu0
  %v2041 = vadd.f32 0.0, %v2040
  %v2042 = vpop.f32.mrb[0].mxu0
  %2043 = vmatprep.mubr.f32.mxu0 0.0
  %2044 = vmatmul.mubr.f32.gmra.mrb[0].mxu0 %v1684
  %v2045 = vpop.f32.mrb[0].mxu0
  %v2046 = vadd.f32 0.0, %v2045
  %v2047 = vpop.f32.mrb[0].mxu0
  %2048 = vmatprep.mubr.f32.mxu0 0.0
  %2049 = vmatmul.mubr.f32.gmra.mrb[0].mxu0 %v1687
  %v2050 = vpop.f32.mrb[0].mxu0
  %v2051 = vadd.f32 0.0, %v2050
  %v2052 = vpop.f32.mrb[0].mxu0
  %2053 = vmatprep.mubr.f32.mxu0 0.0
  %2054 = vmatmul.mubr.f32.gmra.mrb[0].mxu0 %v1690
  %v2055 = vpop.f32.mrb[0].mxu0
  %v2056 = vadd.f32 0.0, %v2055
  %v2057 = vpop.f32.mrb[0].mxu0
  %2058 = vmatprep.mubr.f32.mxu0 0.0
  %2059 = vmatmul.mubr.f32.gmra.mrb[0].mxu0 %v1693
  %v2060 = vpop.f32.mrb[0].mxu0
  %v2061 = vadd.f32 0.0, %v2060
  %v2062 = vpop.f32.mrb[0].mxu0
  %2063 = vmatprep.mubr.f32.mxu0 0.0
  %2064 = vmatmul.mubr.f32.gmra.mrb[0].mxu0 %v1696
  %v2065 = vpop.f32.mrb[0].mxu0
  %v2066 = vadd.f32 0.0, %v2065
  %v2067 = vpop.f32.mrb[0].mxu0
  %2068 = vmatprep.mubr.f32.mxu0 0.0
  %2069 = vmatmul.mubr.f32.gmra.mrb[0].mxu0 %v1699
  %v2070 = vpop.f32.mrb[0].mxu0
  %v2071 = vadd.f32 0.0, %v2070
  %v2072 = vpop.f32.mrb[0].mxu0
  %2073 = vmatprep.mubr.f32.mxu0 0.0
  %2074 = vmatmul.mubr.f32.gmra.mrb[0].mxu0 %v1702
  %v2075 = vpop.f32.mrb[0].mxu0
  %v2076 = vadd.f32 0.0, %v2075
  %v2077 = vpop.f32.mrb[0].mxu0
  %2078 = vmatprep.mubr.f32.mxu0 0.0
  %2079 = vmatmul.mubr.f32.gmra.mrb[0].mxu0 %v1705
  %v2080 = vpop.f32.mrb[0].mxu0
  %v2081 = vadd.f32 0.0, %v2080
  %v2082 = vpop.f32.mrb[0].mxu0
  %2083 = vmatprep.mubr.f32.mxu0 0.0
  %2084 = vmatmul.mubr.f32.gmra.mrb[0].mxu0 %v1708
  %v2085 = vpop.f32.mrb[0].mxu0
  %v2086 = vadd.f32 0.0, %v2085
  %v2087 = vpop.f32.mrb[0].mxu0
  %2088 = vmatprep.mubr.f32.mxu0 0.0
  %2089 = vmatmul.mubr.f32.gmra.mrb[0].mxu0 %v1711
  %v2090 = vpop.f32.mrb[0].mxu0
  %v2091 = vadd.f32 0.0, %v2090
  %v2092 = vpop.f32.mrb[0].mxu0
  %2093 = vmatprep.mubr.f32.mxu0 0.0
  %2094 = vmatmul.mubr.f32.gmra.mrb[0].mxu0 %v1714
  %v2095 = vpop.f32.mrb[0].mxu0
  %v2096 = vadd.f32 0.0, %v2095
  %v2097 = vpop.f32.mrb[0].mxu0
  %2098 = vmatprep.mubr.f32.mxu0 0.0
  %2099 = vmatmul.mubr.f32.gmra.mrb[0].mxu0 %v1717
  %v2100 = vpop.f32.mrb[0].mxu0
  %v2101 = vadd.f32 0.0, %v2100
  %v2102 = vpop.f32.mrb[0].mxu0
  %2103 = vdwg.mxu0
  %2136 = vrot.lane.b32.xlu0 %v1946, 32
  %v2137 = vpop.permute.xlu0 %2136
  %2138 = vrot.lane.b32.xlu0 %v1951, 32
  %v2139 = vpop.permute.xlu0 %2138
  %2140 = vrot.lane.b32.xlu0 %v1956, 32
  %v2141 = vpop.permute.xlu0 %2140
  %2142 = vrot.lane.b32.xlu0 %v1961, 32
  %v2143 = vpop.permute.xlu0 %2142
  %2144 = vrot.lane.b32.xlu0 %v1966, 32
  %v2145 = vpop.permute.xlu0 %2144
  %2146 = vrot.lane.b32.xlu0 %v1971, 32
  %v2147 = vpop.permute.xlu0 %2146
  %2148 = vrot.lane.b32.xlu0 %v1976, 32
  %v2149 = vpop.permute.xlu0 %2148
  %2150 = vrot.lane.b32.xlu0 %v1981, 32
  %v2151 = vpop.permute.xlu0 %2150
  %2152 = vrot.lane.b32.xlu0 %v1986, 32
  %v2153 = vpop.permute.xlu0 %2152
  %2154 = vrot.lane.b32.xlu0 %v1991, 32
  %v2155 = vpop.permute.xlu0 %2154
  %2156 = vrot.lane.b32.xlu0 %v1996, 32
  %v2157 = vpop.permute.xlu0 %2156
  %2158 = vrot.lane.b32.xlu0 %v2001, 32
  %v2159 = vpop.permute.xlu0 %2158
  %2160 = vrot.lane.b32.xlu0 %v2006, 32
  %v2161 = vpop.permute.xlu0 %2160
  %2162 = vrot.lane.b32.xlu0 %v2011, 32
  %v2163 = vpop.permute.xlu0 %2162
  %2164 = vrot.lane.b32.xlu0 %v2016, 32
  %v2165 = vpop.permute.xlu0 %2164
  %2166 = vrot.lane.b32.xlu0 %v2021, 32
  %v2167 = vpop.permute.xlu0 %2166
  %2168 = vrot.lane.b32.xlu0 %v2026, 32
  %v2169 = vpop.permute.xlu0 %2168
  %2170 = vrot.lane.b32.xlu0 %v2031, 32
  %v2171 = vpop.permute.xlu0 %2170
  %2172 = vrot.lane.b32.xlu0 %v2036, 32
  %v2173 = vpop.permute.xlu0 %2172
  %2174 = vrot.lane.b32.xlu0 %v2041, 32
  %v2175 = vpop.permute.xlu0 %2174
  %2176 = vrot.lane.b32.xlu0 %v2046, 32
  %v2177 = vpop.permute.xlu0 %2176
  %2178 = vrot.lane.b32.xlu0 %v2051, 32
  %v2179 = vpop.permute.xlu0 %2178
  %2180 = vrot.lane.b32.xlu0 %v2056, 32
  %v2181 = vpop.permute.xlu0 %2180
  %2182 = vrot.lane.b32.xlu0 %v2061, 32
  %v2183 = vpop.permute.xlu0 %2182
  %2184 = vrot.lane.b32.xlu0 %v2066, 32
  %v2185 = vpop.permute.xlu0 %2184
  %2186 = vrot.lane.b32.xlu0 %v2071, 32
  %v2187 = vpop.permute.xlu0 %2186
  %2188 = vrot.lane.b32.xlu0 %v2076, 32
  %v2189 = vpop.permute.xlu0 %2188
  %2190 = vrot.lane.b32.xlu0 %v2081, 32
  %v2191 = vpop.permute.xlu0 %2190
  %2192 = vrot.lane.b32.xlu0 %v2086, 32
  %v2193 = vpop.permute.xlu0 %2192
  %2194 = vrot.lane.b32.xlu0 %v2091, 32
  %v2195 = vpop.permute.xlu0 %2194
  %2196 = vrot.lane.b32.xlu0 %v2096, 32
  %v2197 = vpop.permute.xlu0 %2196
  %2198 = vrot.lane.b32.xlu0 %v2101, 32
  %v2199 = vpop.permute.xlu0 %2198
  %2264 = vrot.lane.b32.xlu0 %v33, 64
  %v2265 = vpop.permute.xlu0 %2264
  %2266 = vrot.lane.b32.xlu0 %v34, 64
  %v2267 = vpop.permute.xlu0 %2266
  %2268 = vrot.lane.b32.xlu0 %v35, 64
  %v2269 = vpop.permute.xlu0 %2268
  %2270 = vrot.lane.b32.xlu0 %v36, 64
  %v2271 = vpop.permute.xlu0 %2270
  %2272 = vrot.lane.b32.xlu0 %v37, 64
  %v2273 = vpop.permute.xlu0 %2272
  %2274 = vrot.lane.b32.xlu0 %v38, 64
  %v2275 = vpop.permute.xlu0 %2274
  %2276 = vrot.lane.b32.xlu0 %v39, 64
  %v2277 = vpop.permute.xlu0 %2276
  %2278 = vrot.lane.b32.xlu0 %v40, 64
  %v2279 = vpop.permute.xlu0 %2278
  %2280 = vrot.lane.b32.xlu0 %v41, 64
  %v2281 = vpop.permute.xlu0 %2280
  %2282 = vrot.lane.b32.xlu0 %v42, 64
  %v2283 = vpop.permute.xlu0 %2282
  %2284 = vrot.lane.b32.xlu0 %v43, 64
  %v2285 = vpop.permute.xlu0 %2284
  %2286 = vrot.lane.b32.xlu0 %v44, 64
  %v2287 = vpop.permute.xlu0 %2286
  %2288 = vrot.lane.b32.xlu0 %v45, 64
  %v2289 = vpop.permute.xlu0 %2288
  %2290 = vrot.lane.b32.xlu0 %v46, 64
  %v2291 = vpop.permute.xlu0 %2290
  %2292 = vrot.lane.b32.xlu0 %v47, 64
  %v2293 = vpop.permute.xlu0 %2292
  %2294 = vrot.lane.b32.xlu0 %v48, 64
  %v2295 = vpop.permute.xlu0 %2294
  %2296 = vrot.lane.b32.xlu0 %v49, 64
  %v2297 = vpop.permute.xlu0 %2296
  %2298 = vrot.lane.b32.xlu0 %v50, 64
  %v2299 = vpop.permute.xlu0 %2298
  %2300 = vrot.lane.b32.xlu0 %v51, 64
  %v2301 = vpop.permute.xlu0 %2300
  %2302 = vrot.lane.b32.xlu0 %v52, 64
  %v2303 = vpop.permute.xlu0 %2302
  %2304 = vrot.lane.b32.xlu0 %v53, 64
  %v2305 = vpop.permute.xlu0 %2304
  %2306 = vrot.lane.b32.xlu0 %v54, 64
  %v2307 = vpop.permute.xlu0 %2306
  %2308 = vrot.lane.b32.xlu0 %v55, 64
  %v2309 = vpop.permute.xlu0 %2308
  %2310 = vrot.lane.b32.xlu0 %v56, 64
  %v2311 = vpop.permute.xlu0 %2310
  %2312 = vrot.lane.b32.xlu0 %v57, 64
  %v2313 = vpop.permute.xlu0 %2312
  %2314 = vrot.lane.b32.xlu0 %v58, 64
  %v2315 = vpop.permute.xlu0 %2314
  %2316 = vrot.lane.b32.xlu0 %v59, 64
  %v2317 = vpop.permute.xlu0 %2316
  %2318 = vrot.lane.b32.xlu0 %v60, 64
  %v2319 = vpop.permute.xlu0 %2318
  %2320 = vrot.lane.b32.xlu0 %v61, 64
  %v2321 = vpop.permute.xlu0 %2320
  %2322 = vrot.lane.b32.xlu0 %v62, 64
  %v2323 = vpop.permute.xlu0 %2322
  %2324 = vrot.lane.b32.xlu0 %v63, 64
  %v2325 = vpop.permute.xlu0 %2324
  %2326 = vrot.lane.b32.xlu0 %v64, 64
  %v2327 = vpop.permute.xlu0 %2326
  %v2360 = vsel %vm970, %v1786, %v2137
  %v2361 = vsel %vm970, %v1791, %v2139
  %v2362 = vsel %vm970, %v1796, %v2141
  %v2363 = vsel %vm970, %v1801, %v2143
  %v2364 = vsel %vm970, %v1806, %v2145
  %v2365 = vsel %vm970, %v1811, %v2147
  %v2366 = vsel %vm970, %v1816, %v2149
  %v2367 = vsel %vm970, %v1821, %v2151
  %v2368 = vsel %vm970, %v1826, %v2153
  %v2369 = vsel %vm970, %v1831, %v2155
  %v2370 = vsel %vm970, %v1836, %v2157
  %v2371 = vsel %vm970, %v1841, %v2159
  %v2372 = vsel %vm970, %v1846, %v2161
  %v2373 = vsel %vm970, %v1851, %v2163
  %v2374 = vsel %vm970, %v1856, %v2165
  %v2375 = vsel %vm970, %v1861, %v2167
  %v2376 = vsel %vm970, %v1866, %v2169
  %v2377 = vsel %vm970, %v1871, %v2171
  %v2378 = vsel %vm970, %v1876, %v2173
  %v2379 = vsel %vm970, %v1881, %v2175
  %v2380 = vsel %vm970, %v1886, %v2177
  %v2381 = vsel %vm970, %v1891, %v2179
  %v2382 = vsel %vm970, %v1896, %v2181
  %v2383 = vsel %vm970, %v1901, %v2183
  %v2384 = vsel %vm970, %v1906, %v2185
  %v2385 = vsel %vm970, %v1911, %v2187
  %v2386 = vsel %vm970, %v1916, %v2189
  %v2387 = vsel %vm970, %v1921, %v2191
  %v2388 = vsel %vm970, %v1926, %v2193
  %v2389 = vsel %vm970, %v1931, %v2195
  %v2390 = vsel %vm970, %v1936, %v2197
  %v2391 = vsel %vm970, %v1941, %v2199
  %v2392 = vsel %vm983, %v2360, %v2265
  %v2393 = vsel %vm983, %v2361, %v2267
  %v2394 = vsel %vm983, %v2362, %v2269
  %v2395 = vsel %vm983, %v2363, %v2271
  %v2396 = vsel %vm983, %v2364, %v2273
  %v2397 = vsel %vm983, %v2365, %v2275
  %v2398 = vsel %vm983, %v2366, %v2277
  %v2399 = vsel %vm983, %v2367, %v2279
  %v2400 = vsel %vm983, %v2368, %v2281
  %v2401 = vsel %vm983, %v2369, %v2283
  %v2402 = vsel %vm983, %v2370, %v2285
  %v2403 = vsel %vm983, %v2371, %v2287
  %v2404 = vsel %vm983, %v2372, %v2289
  %v2405 = vsel %vm983, %v2373, %v2291
  %v2406 = vsel %vm983, %v2374, %v2293
  %v2407 = vsel %vm983, %v2375, %v2295
  %v2408 = vsel %vm983, %v2376, %v2297
  %v2409 = vsel %vm983, %v2377, %v2299
  %v2410 = vsel %vm983, %v2378, %v2301
  %v2411 = vsel %vm983, %v2379, %v2303
  %v2412 = vsel %vm983, %v2380, %v2305
  %v2413 = vsel %vm983, %v2381, %v2307
  %v2414 = vsel %vm983, %v2382, %v2309
  %v2415 = vsel %vm983, %v2383, %v2311
  %v2416 = vsel %vm983, %v2384, %v2313
  %v2417 = vsel %vm983, %v2385, %v2315
  %v2418 = vsel %vm983, %v2386, %v2317
  %v2419 = vsel %vm983, %v2387, %v2319
  %v2420 = vsel %vm983, %v2388, %v2321
  %v2421 = vsel %vm983, %v2389, %v2323
  %v2422 = vsel %vm983, %v2390, %v2325
  %v2423 = vsel %vm983, %v2391, %v2327
  %v2424 = vlaneseq
  %v2425 = vshrl.u32 %v2424, 7
  %v2426 = vsub.s32 6, %v2425
  %v2427 = vrot.slane %v125, %v2426
  %vm2428 = vcmask 785408
  %v2430 = vsel %vm2428, %v2392, 0
  %v2433 = vsel %vm2428, %v2393, 0
  %v2436 = vsel %vm2428, %v2394, 0
  %v2439 = vsel %vm2428, %v2395, 0
  %v2442 = vsel %vm2428, %v2396, 0
  %v2445 = vsel %vm2428, %v2397, 0
  %v2448 = vsel %vm2428, %v2398, 0
  %v2451 = vsel %vm2428, %v2399, 0
  %v2454 = vsel %vm2428, %v2400, 0
  %v2457 = vsel %vm2428, %v2401, 0
  %v2460 = vsel %vm2428, %v2402, 0
  %v2463 = vsel %vm2428, %v2403, 0
  %v2466 = vsel %vm2428, %v2404, 0
  %v2469 = vsel %vm2428, %v2405, 0
  %v2472 = vsel %vm2428, %v2406, 0
  %v2475 = vsel %vm2428, %v2407, 0
  %v2478 = vsel %vm2428, %v2408, 0
  %v2481 = vsel %vm2428, %v2409, 0
  %v2484 = vsel %vm2428, %v2410, 0
  %v2487 = vsel %vm2428, %v2411, 0
  %v2490 = vsel %vm2428, %v2412, 0
  %v2493 = vsel %vm2428, %v2413, 0
  %v2496 = vsel %vm2428, %v2414, 0
  %v2499 = vsel %vm2428, %v2415, 0
  %v2502 = vsel %vm2428, %v2416, 0
  %v2505 = vsel %vm2428, %v2417, 0
  %v2508 = vsel %vm2428, %v2418, 0
  %v2511 = vsel %vm2428, %v2419, 0
  %v2514 = vsel %vm2428, %v2420, 0
  %v2517 = vsel %vm2428, %v2421, 0
  %v2520 = vsel %vm2428, %v2422, 0
  %v2523 = vsel %vm2428, %v2423, 0
  %2525 = vmatprep.subr.mxu0 0.0
  %2526 = vmatpush1.msra.mxu0 %v109
  %2527 = vmatprep.subr.mxu0 0.0
  %2528 = vmatpush1.msra.mxu0 %v110
  %2529 = vmatprep.subr.mxu0 0.0
  %2530 = vmatpush1.msra.mxu0 %v111
  %2531 = vmatprep.subr.mxu0 0.0
  %2532 = vmatpush1.msra.mxu0 %v112
  %2533 = vmatprep.subr.mxu0 0.0
  %2534 = vmatpush1.msra.mxu0 %v113
  %2535 = vmatprep.subr.mxu0 0.0
  %2536 = vmatpush1.msra.mxu0 %v114
  %2537 = vmatprep.subr.mxu0 0.0
  %2538 = vmatpush1.msra.mxu0 %v115
  %2539 = vmatprep.subr.mxu0 0.0
  %2540 = vmatpush1.msra.mxu0 %v116
  %2541 = vmatprep.subr.mxu0 0.0
  %2542 = vmatpush1.msra.mxu0 %v117
  %2543 = vmatprep.subr.mxu0 0.0
  %2544 = vmatpush1.msra.mxu0 %v118
  %2545 = vmatprep.subr.mxu0 0.0
  %2546 = vmatpush1.msra.mxu0 %v119
  %2547 = vmatprep.subr.mxu0 0.0
  %2548 = vmatpush1.msra.mxu0 %v120
  %2549 = vmatprep.subr.mxu0 0.0
  %2550 = vmatpush1.msra.mxu0 0.0
  %2551 = vmatprep.subr.mxu0 0.0
  %2552 = vmatpush1.msra.mxu0 0.0
  %2553 = vmatprep.subr.mxu0 0.0
  %2554 = vmatpush1.msra.mxu0 0.0
  %2555 = vmatprep.subr.mxu0 0.0
  %2556 = vmatpush1.msra.mxu0 0.0
  %2557 = vmatprep.subr.mxu0 0.0
  %2558 = vmatpush1.msra.mxu0 0.0
  %2559 = vmatprep.subr.mxu0 0.0
  %2560 = vmatpush1.msra.mxu0 0.0
  %2561 = vmatprep.subr.mxu0 0.0
  %2562 = vmatpush1.msra.mxu0 0.0
  %2563 = vmatprep.subr.mxu0 0.0
  %2564 = vmatpush1.msra.mxu0 0.0
  %2565 = vmatprep.subr.mxu0 0.0
  %2566 = vmatpush1.msra.mxu0 0.0
  %2567 = vmatprep.subr.mxu0 0.0
  %2568 = vmatpush1.msra.mxu0 0.0
  %2569 = vmatprep.subr.mxu0 0.0
  %2570 = vmatpush1.msra.mxu0 0.0
  %2571 = vmatprep.subr.mxu0 0.0
  %2572 = vmatpush1.msra.mxu0 0.0
  %2573 = vmatprep.subr.mxu0 0.0
  %2574 = vmatpush1.msra.mxu0 0.0
  %2575 = vmatprep.subr.mxu0 0.0
  %2576 = vmatpush1.msra.mxu0 0.0
  %2577 = vmatprep.subr.mxu0 0.0
  %2578 = vmatpush1.msra.mxu0 0.0
  %2579 = vmatprep.subr.mxu0 0.0
  %2580 = vmatpush1.msra.mxu0 0.0
  %2581 = vmatprep.subr.mxu0 0.0
  %2582 = vmatpush1.msra.mxu0 0.0
  %2583 = vmatprep.subr.mxu0 0.0
  %2584 = vmatpush1.msra.mxu0 0.0
  %2585 = vmatprep.subr.mxu0 0.0
  %2586 = vmatpush1.msra.mxu0 0.0
  %2587 = vmatprep.subr.mxu0 0.0
  %2588 = vmatpush1.msra.mxu0 0.0
  %2589 = vmatprep.mubr.f32.mxu0 0.0
  %2590 = vmatmul.mubr.f32.gmra.mrb[0].mxu0 %v2430
  %v2591 = vpop.f32.mrb[0].mxu0
  %v2592 = vadd.f32 %v2427, %v2591
  %v2593 = vpop.f32.mrb[0].mxu0
  %2594 = vmatprep.mubr.f32.mxu0 0.0
  %2595 = vmatmul.mubr.f32.gmra.mrb[0].mxu0 %v2433
  %v2596 = vpop.f32.mrb[0].mxu0
  %v2597 = vadd.f32 %v2427, %v2596
  %v2598 = vpop.f32.mrb[0].mxu0
  %2599 = vmatprep.mubr.f32.mxu0 0.0
  %2600 = vmatmul.mubr.f32.gmra.mrb[0].mxu0 %v2436
  %v2601 = vpop.f32.mrb[0].mxu0
  %v2602 = vadd.f32 %v2427, %v2601
  %v2603 = vpop.f32.mrb[0].mxu0
  %2604 = vmatprep.mubr.f32.mxu0 0.0
  %2605 = vmatmul.mubr.f32.gmra.mrb[0].mxu0 %v2439
  %v2606 = vpop.f32.mrb[0].mxu0
  %v2607 = vadd.f32 %v2427, %v2606
  %v2608 = vpop.f32.mrb[0].mxu0
  %2609 = vmatprep.mubr.f32.mxu0 0.0
  %2610 = vmatmul.mubr.f32.gmra.mrb[0].mxu0 %v2442
  %v2611 = vpop.f32.mrb[0].mxu0
  %v2612 = vadd.f32 %v2427, %v2611
  %v2613 = vpop.f32.mrb[0].mxu0
  %2614 = vmatprep.mubr.f32.mxu0 0.0
  %2615 = vmatmul.mubr.f32.gmra.mrb[0].mxu0 %v2445
  %v2616 = vpop.f32.mrb[0].mxu0
  %v2617 = vadd.f32 %v2427, %v2616
  %v2618 = vpop.f32.mrb[0].mxu0
  %2619 = vmatprep.mubr.f32.mxu0 0.0
  %2620 = vmatmul.mubr.f32.gmra.mrb[0].mxu0 %v2448
  %v2621 = vpop.f32.mrb[0].mxu0
  %v2622 = vadd.f32 %v2427, %v2621
  %v2623 = vpop.f32.mrb[0].mxu0
  %2624 = vmatprep.mubr.f32.mxu0 0.0
  %2625 = vmatmul.mubr.f32.gmra.mrb[0].mxu0 %v2451
  %v2626 = vpop.f32.mrb[0].mxu0
  %v2627 = vadd.f32 %v2427, %v2626
  %v2628 = vpop.f32.mrb[0].mxu0
  %2629 = vmatprep.mubr.f32.mxu0 0.0
  %2630 = vmatmul.mubr.f32.gmra.mrb[0].mxu0 %v2454
  %v2631 = vpop.f32.mrb[0].mxu0
  %v2632 = vadd.f32 %v2427, %v2631
  %v2633 = vpop.f32.mrb[0].mxu0
  %2634 = vmatprep.mubr.f32.mxu0 0.0
  %2635 = vmatmul.mubr.f32.gmra.mrb[0].mxu0 %v2457
  %v2636 = vpop.f32.mrb[0].mxu0
  %v2637 = vadd.f32 %v2427, %v2636
  %v2638 = vpop.f32.mrb[0].mxu0
  %2639 = vmatprep.mubr.f32.mxu0 0.0
  %2640 = vmatmul.mubr.f32.gmra.mrb[0].mxu0 %v2460
  %v2641 = vpop.f32.mrb[0].mxu0
  %v2642 = vadd.f32 %v2427, %v2641
  %v2643 = vpop.f32.mrb[0].mxu0
  %2644 = vmatprep.mubr.f32.mxu0 0.0
  %2645 = vmatmul.mubr.f32.gmra.mrb[0].mxu0 %v2463
  %v2646 = vpop.f32.mrb[0].mxu0
  %v2647 = vadd.f32 %v2427, %v2646
  %v2648 = vpop.f32.mrb[0].mxu0
  %2649 = vmatprep.mubr.f32.mxu0 0.0
  %2650 = vmatmul.mubr.f32.gmra.mrb[0].mxu0 %v2466
  %v2651 = vpop.f32.mrb[0].mxu0
  %v2652 = vadd.f32 %v2427, %v2651
  %v2653 = vpop.f32.mrb[0].mxu0
  %2654 = vmatprep.mubr.f32.mxu0 0.0
  %2655 = vmatmul.mubr.f32.gmra.mrb[0].mxu0 %v2469
  %v2656 = vpop.f32.mrb[0].mxu0
  %v2657 = vadd.f32 %v2427, %v2656
  %v2658 = vpop.f32.mrb[0].mxu0
  %2659 = vmatprep.mubr.f32.mxu0 0.0
  %2660 = vmatmul.mubr.f32.gmra.mrb[0].mxu0 %v2472
  %v2661 = vpop.f32.mrb[0].mxu0
  %v2662 = vadd.f32 %v2427, %v2661
  %v2663 = vpop.f32.mrb[0].mxu0
  %2664 = vmatprep.mubr.f32.mxu0 0.0
  %2665 = vmatmul.mubr.f32.gmra.mrb[0].mxu0 %v2475
  %v2666 = vpop.f32.mrb[0].mxu0
  %v2667 = vadd.f32 %v2427, %v2666
  %v2668 = vpop.f32.mrb[0].mxu0
  %2669 = vmatprep.mubr.f32.mxu0 0.0
  %2670 = vmatmul.mubr.f32.gmra.mrb[0].mxu0 %v2478
  %v2671 = vpop.f32.mrb[0].mxu0
  %v2672 = vadd.f32 %v2427, %v2671
  %v2673 = vpop.f32.mrb[0].mxu0
  %2674 = vmatprep.mubr.f32.mxu0 0.0
  %2675 = vmatmul.mubr.f32.gmra.mrb[0].mxu0 %v2481
  %v2676 = vpop.f32.mrb[0].mxu0
  %v2677 = vadd.f32 %v2427, %v2676
  %v2678 = vpop.f32.mrb[0].mxu0
  %2679 = vmatprep.mubr.f32.mxu0 0.0
  %2680 = vmatmul.mubr.f32.gmra.mrb[0].mxu0 %v2484
  %v2681 = vpop.f32.mrb[0].mxu0
  %v2682 = vadd.f32 %v2427, %v2681
  %v2683 = vpop.f32.mrb[0].mxu0
  %2684 = vmatprep.mubr.f32.mxu0 0.0
  %2685 = vmatmul.mubr.f32.gmra.mrb[0].mxu0 %v2487
  %v2686 = vpop.f32.mrb[0].mxu0
  %v2687 = vadd.f32 %v2427, %v2686
  %v2688 = vpop.f32.mrb[0].mxu0
  %2689 = vmatprep.mubr.f32.mxu0 0.0
  %2690 = vmatmul.mubr.f32.gmra.mrb[0].mxu0 %v2490
  %v2691 = vpop.f32.mrb[0].mxu0
  %v2692 = vadd.f32 %v2427, %v2691
  %v2693 = vpop.f32.mrb[0].mxu0
  %2694 = vmatprep.mubr.f32.mxu0 0.0
  %2695 = vmatmul.mubr.f32.gmra.mrb[0].mxu0 %v2493
  %v2696 = vpop.f32.mrb[0].mxu0
  %v2697 = vadd.f32 %v2427, %v2696
  %v2698 = vpop.f32.mrb[0].mxu0
  %2699 = vmatprep.mubr.f32.mxu0 0.0
  %2700 = vmatmul.mubr.f32.gmra.mrb[0].mxu0 %v2496
  %v2701 = vpop.f32.mrb[0].mxu0
  %v2702 = vadd.f32 %v2427, %v2701
  %v2703 = vpop.f32.mrb[0].mxu0
  %2704 = vmatprep.mubr.f32.mxu0 0.0
  %2705 = vmatmul.mubr.f32.gmra.mrb[0].mxu0 %v2499
  %v2706 = vpop.f32.mrb[0].mxu0
  %v2707 = vadd.f32 %v2427, %v2706
  %v2708 = vpop.f32.mrb[0].mxu0
  %2709 = vmatprep.mubr.f32.mxu0 0.0
  %2710 = vmatmul.mubr.f32.gmra.mrb[0].mxu0 %v2502
  %v2711 = vpop.f32.mrb[0].mxu0
  %v2712 = vadd.f32 %v2427, %v2711
  %v2713 = vpop.f32.mrb[0].mxu0
  %2714 = vmatprep.mubr.f32.mxu0 0.0
  %2715 = vmatmul.mubr.f32.gmra.mrb[0].mxu0 %v2505
  %v2716 = vpop.f32.mrb[0].mxu0
  %v2717 = vadd.f32 %v2427, %v2716
  %v2718 = vpop.f32.mrb[0].mxu0
  %2719 = vmatprep.mubr.f32.mxu0 0.0
  %2720 = vmatmul.mubr.f32.gmra.mrb[0].mxu0 %v2508
  %v2721 = vpop.f32.mrb[0].mxu0
  %v2722 = vadd.f32 %v2427, %v2721
  %v2723 = vpop.f32.mrb[0].mxu0
  %2724 = vmatprep.mubr.f32.mxu0 0.0
  %2725 = vmatmul.mubr.f32.gmra.mrb[0].mxu0 %v2511
  %v2726 = vpop.f32.mrb[0].mxu0
  %v2727 = vadd.f32 %v2427, %v2726
  %v2728 = vpop.f32.mrb[0].mxu0
  %2729 = vmatprep.mubr.f32.mxu0 0.0
  %2730 = vmatmul.mubr.f32.gmra.mrb[0].mxu0 %v2514
  %v2731 = vpop.f32.mrb[0].mxu0
  %v2732 = vadd.f32 %v2427, %v2731
  %v2733 = vpop.f32.mrb[0].mxu0
  %2734 = vmatprep.mubr.f32.mxu0 0.0
  %2735 = vmatmul.mubr.f32.gmra.mrb[0].mxu0 %v2517
  %v2736 = vpop.f32.mrb[0].mxu0
  %v2737 = vadd.f32 %v2427, %v2736
  %v2738 = vpop.f32.mrb[0].mxu0
  %2739 = vmatprep.mubr.f32.mxu0 0.0
  %2740 = vmatmul.mubr.f32.gmra.mrb[0].mxu0 %v2520
  %v2741 = vpop.f32.mrb[0].mxu0
  %v2742 = vadd.f32 %v2427, %v2741
  %v2743 = vpop.f32.mrb[0].mxu0
  %2744 = vmatprep.mubr.f32.mxu0 0.0
  %2745 = vmatmul.mubr.f32.gmra.mrb[0].mxu0 %v2523
  %v2746 = vpop.f32.mrb[0].mxu0
  %v2747 = vadd.f32 %v2427, %v2746
  %v2748 = vpop.f32.mrb[0].mxu0
  %2749 = vdwg.mxu0
  %v2750 = vsel %vm970, %v2592, 0.0
  %2751 = vadd.xlane.f32.xlu0 %v2750
  %v2752 = vpop.xlane.xlu0 %2751
  %v2753 = vsel %vm970, %v2597, 0.0
  %2754 = vadd.xlane.f32.xlu0 %v2753
  %v2755 = vpop.xlane.xlu0 %2754
  %v2756 = vsel %vm970, %v2602, 0.0
  %2757 = vadd.xlane.f32.xlu0 %v2756
  %v2758 = vpop.xlane.xlu0 %2757
  %v2759 = vsel %vm970, %v2607, 0.0
  %2760 = vadd.xlane.f32.xlu0 %v2759
  %v2761 = vpop.xlane.xlu0 %2760
  %v2762 = vsel %vm970, %v2612, 0.0
  %2763 = vadd.xlane.f32.xlu0 %v2762
  %v2764 = vpop.xlane.xlu0 %2763
  %v2765 = vsel %vm970, %v2617, 0.0
  %2766 = vadd.xlane.f32.xlu0 %v2765
  %v2767 = vpop.xlane.xlu0 %2766
  %v2768 = vsel %vm970, %v2622, 0.0
  %2769 = vadd.xlane.f32.xlu0 %v2768
  %v2770 = vpop.xlane.xlu0 %2769
  %v2771 = vsel %vm970, %v2627, 0.0
  %2772 = vadd.xlane.f32.xlu0 %v2771
  %v2773 = vpop.xlane.xlu0 %2772
  %v2774 = vsel %vm970, %v2632, 0.0
  %2775 = vadd.xlane.f32.xlu0 %v2774
  %v2776 = vpop.xlane.xlu0 %2775
  %v2777 = vsel %vm970, %v2637, 0.0
  %2778 = vadd.xlane.f32.xlu0 %v2777
  %v2779 = vpop.xlane.xlu0 %2778
  %v2780 = vsel %vm970, %v2642, 0.0
  %2781 = vadd.xlane.f32.xlu0 %v2780
  %v2782 = vpop.xlane.xlu0 %2781
  %v2783 = vsel %vm970, %v2647, 0.0
  %2784 = vadd.xlane.f32.xlu0 %v2783
  %v2785 = vpop.xlane.xlu0 %2784
  %v2786 = vsel %vm970, %v2652, 0.0
  %2787 = vadd.xlane.f32.xlu0 %v2786
  %v2788 = vpop.xlane.xlu0 %2787
  %v2789 = vsel %vm970, %v2657, 0.0
  %2790 = vadd.xlane.f32.xlu0 %v2789
  %v2791 = vpop.xlane.xlu0 %2790
  %v2792 = vsel %vm970, %v2662, 0.0
  %2793 = vadd.xlane.f32.xlu0 %v2792
  %v2794 = vpop.xlane.xlu0 %2793
  %v2795 = vsel %vm970, %v2667, 0.0
  %2796 = vadd.xlane.f32.xlu0 %v2795
  %v2797 = vpop.xlane.xlu0 %2796
  %v2798 = vsel %vm970, %v2672, 0.0
  %2799 = vadd.xlane.f32.xlu0 %v2798
  %v2800 = vpop.xlane.xlu0 %2799
  %v2801 = vsel %vm970, %v2677, 0.0
  %2802 = vadd.xlane.f32.xlu0 %v2801
  %v2803 = vpop.xlane.xlu0 %2802
  %v2804 = vsel %vm970, %v2682, 0.0
  %2805 = vadd.xlane.f32.xlu0 %v2804
  %v2806 = vpop.xlane.xlu0 %2805
  %v2807 = vsel %vm970, %v2687, 0.0
  %2808 = vadd.xlane.f32.xlu0 %v2807
  %v2809 = vpop.xlane.xlu0 %2808
  %v2810 = vsel %vm970, %v2692, 0.0
  %2811 = vadd.xlane.f32.xlu0 %v2810
  %v2812 = vpop.xlane.xlu0 %2811
  %v2813 = vsel %vm970, %v2697, 0.0
  %2814 = vadd.xlane.f32.xlu0 %v2813
  %v2815 = vpop.xlane.xlu0 %2814
  %v2816 = vsel %vm970, %v2702, 0.0
  %2817 = vadd.xlane.f32.xlu0 %v2816
  %v2818 = vpop.xlane.xlu0 %2817
  %v2819 = vsel %vm970, %v2707, 0.0
  %2820 = vadd.xlane.f32.xlu0 %v2819
  %v2821 = vpop.xlane.xlu0 %2820
  %v2822 = vsel %vm970, %v2712, 0.0
  %2823 = vadd.xlane.f32.xlu0 %v2822
  %v2824 = vpop.xlane.xlu0 %2823
  %v2825 = vsel %vm970, %v2717, 0.0
  %2826 = vadd.xlane.f32.xlu0 %v2825
  %v2827 = vpop.xlane.xlu0 %2826
  %v2828 = vsel %vm970, %v2722, 0.0
  %2829 = vadd.xlane.f32.xlu0 %v2828
  %v2830 = vpop.xlane.xlu0 %2829
  %v2831 = vsel %vm970, %v2727, 0.0
  %2832 = vadd.xlane.f32.xlu0 %v2831
  %v2833 = vpop.xlane.xlu0 %2832
  %v2834 = vsel %vm970, %v2732, 0.0
  %2835 = vadd.xlane.f32.xlu0 %v2834
  %v2836 = vpop.xlane.xlu0 %2835
  %v2837 = vsel %vm970, %v2737, 0.0
  %2838 = vadd.xlane.f32.xlu0 %v2837
  %v2839 = vpop.xlane.xlu0 %2838
  %v2840 = vsel %vm970, %v2742, 0.0
  %2841 = vadd.xlane.f32.xlu0 %v2840
  %v2842 = vpop.xlane.xlu0 %2841
  %v2843 = vsel %vm970, %v2747, 0.0
  %2844 = vadd.xlane.f32.xlu0 %v2843
  %v2845 = vpop.xlane.xlu0 %2844
  %v2846 = vmul.f32 %v2752, %v1137
  %v2847 = vmul.f32 %v2755, %v1137
  %v2848 = vmul.f32 %v2758, %v1137
  %v2849 = vmul.f32 %v2761, %v1137
  %v2850 = vmul.f32 %v2764, %v1137
  %v2851 = vmul.f32 %v2767, %v1137
  %v2852 = vmul.f32 %v2770, %v1137
  %v2853 = vmul.f32 %v2773, %v1137
  %v2854 = vmul.f32 %v2776, %v1137
  %v2855 = vmul.f32 %v2779, %v1137
  %v2856 = vmul.f32 %v2782, %v1137
  %v2857 = vmul.f32 %v2785, %v1137
  %v2858 = vmul.f32 %v2788, %v1137
  %v2859 = vmul.f32 %v2791, %v1137
  %v2860 = vmul.f32 %v2794, %v1137
  %v2861 = vmul.f32 %v2797, %v1137
  %v2862 = vmul.f32 %v2800, %v1137
  %v2863 = vmul.f32 %v2803, %v1137
  %v2864 = vmul.f32 %v2806, %v1137
  %v2865 = vmul.f32 %v2809, %v1137
  %v2866 = vmul.f32 %v2812, %v1137
  %v2867 = vmul.f32 %v2815, %v1137
  %v2868 = vmul.f32 %v2818, %v1137
  %v2869 = vmul.f32 %v2821, %v1137
  %v2870 = vmul.f32 %v2824, %v1137
  %v2871 = vmul.f32 %v2827, %v1137
  %v2872 = vmul.f32 %v2830, %v1137
  %v2873 = vmul.f32 %v2833, %v1137
  %v2874 = vmul.f32 %v2836, %v1137
  %v2875 = vmul.f32 %v2839, %v1137
  %v2876 = vmul.f32 %v2842, %v1137
  %v2877 = vmul.f32 %v2845, %v1137
  %v2878 = vsub.f32 %v2592, %v2846
  %v2879 = vsub.f32 %v2597, %v2847
  %v2880 = vsub.f32 %v2602, %v2848
  %v2881 = vsub.f32 %v2607, %v2849
  %v2882 = vsub.f32 %v2612, %v2850
  %v2883 = vsub.f32 %v2617, %v2851
  %v2884 = vsub.f32 %v2622, %v2852
  %v2885 = vsub.f32 %v2627, %v2853
  %v2886 = vsub.f32 %v2632, %v2854
  %v2887 = vsub.f32 %v2637, %v2855
  %v2888 = vsub.f32 %v2642, %v2856
  %v2889 = vsub.f32 %v2647, %v2857
  %v2890 = vsub.f32 %v2652, %v2858
  %v2891 = vsub.f32 %v2657, %v2859
  %v2892 = vsub.f32 %v2662, %v2860
  %v2893 = vsub.f32 %v2667, %v2861
  %v2894 = vsub.f32 %v2672, %v2862
  %v2895 = vsub.f32 %v2677, %v2863
  %v2896 = vsub.f32 %v2682, %v2864
  %v2897 = vsub.f32 %v2687, %v2865
  %v2898 = vsub.f32 %v2692, %v2866
  %v2899 = vsub.f32 %v2697, %v2867
  %v2900 = vsub.f32 %v2702, %v2868
  %v2901 = vsub.f32 %v2707, %v2869
  %v2902 = vsub.f32 %v2712, %v2870
  %v2903 = vsub.f32 %v2717, %v2871
  %v2904 = vsub.f32 %v2722, %v2872
  %v2905 = vsub.f32 %v2727, %v2873
  %v2906 = vsub.f32 %v2732, %v2874
  %v2907 = vsub.f32 %v2737, %v2875
  %v2908 = vsub.f32 %v2742, %v2876
  %v2909 = vsub.f32 %v2747, %v2877
  %v2910 = vmul.f32 %v2878, %v2878
  %v2911 = vmul.f32 %v2879, %v2879
  %v2912 = vmul.f32 %v2880, %v2880
  %v2913 = vmul.f32 %v2881, %v2881
  %v2914 = vmul.f32 %v2882, %v2882
  %v2915 = vmul.f32 %v2883, %v2883
  %v2916 = vmul.f32 %v2884, %v2884
  %v2917 = vmul.f32 %v2885, %v2885
  %v2918 = vmul.f32 %v2886, %v2886
  %v2919 = vmul.f32 %v2887, %v2887
  %v2920 = vmul.f32 %v2888, %v2888
  %v2921 = vmul.f32 %v2889, %v2889
  %v2922 = vmul.f32 %v2890, %v2890
  %v2923 = vmul.f32 %v2891, %v2891
  %v2924 = vmul.f32 %v2892, %v2892
  %v2925 = vmul.f32 %v2893, %v2893
  %v2926 = vmul.f32 %v2894, %v2894
  %v2927 = vmul.f32 %v2895, %v2895
  %v2928 = vmul.f32 %v2896, %v2896
  %v2929 = vmul.f32 %v2897, %v2897
  %v2930 = vmul.f32 %v2898, %v2898
  %v2931 = vmul.f32 %v2899, %v2899
  %v2932 = vmul.f32 %v2900, %v2900
  %v2933 = vmul.f32 %v2901, %v2901
  %v2934 = vmul.f32 %v2902, %v2902
  %v2935 = vmul.f32 %v2903, %v2903
  %v2936 = vmul.f32 %v2904, %v2904
  %v2937 = vmul.f32 %v2905, %v2905
  %v2938 = vmul.f32 %v2906, %v2906
  %v2939 = vmul.f32 %v2907, %v2907
  %v2940 = vmul.f32 %v2908, %v2908
  %v2941 = vmul.f32 %v2909, %v2909
  %v2942 = vsel %vm970, %v2910, 0.0
  %2943 = vadd.xlane.f32.xlu0 %v2942
  %v2944 = vpop.xlane.xlu0 %2943
  %v2945 = vsel %vm970, %v2911, 0.0
  %2946 = vadd.xlane.f32.xlu0 %v2945
  %v2947 = vpop.xlane.xlu0 %2946
  %v2948 = vsel %vm970, %v2912, 0.0
  %2949 = vadd.xlane.f32.xlu0 %v2948
  %v2950 = vpop.xlane.xlu0 %2949
  %v2951 = vsel %vm970, %v2913, 0.0
  %2952 = vadd.xlane.f32.xlu0 %v2951
  %v2953 = vpop.xlane.xlu0 %2952
  %v2954 = vsel %vm970, %v2914, 0.0
  %2955 = vadd.xlane.f32.xlu0 %v2954
  %v2956 = vpop.xlane.xlu0 %2955
  %v2957 = vsel %vm970, %v2915, 0.0
  %2958 = vadd.xlane.f32.xlu0 %v2957
  %v2959 = vpop.xlane.xlu0 %2958
  %v2960 = vsel %vm970, %v2916, 0.0
  %2961 = vadd.xlane.f32.xlu0 %v2960
  %v2962 = vpop.xlane.xlu0 %2961
  %v2963 = vsel %vm970, %v2917, 0.0
  %2964 = vadd.xlane.f32.xlu0 %v2963
  %v2965 = vpop.xlane.xlu0 %2964
  %v2966 = vsel %vm970, %v2918, 0.0
  %2967 = vadd.xlane.f32.xlu0 %v2966
  %v2968 = vpop.xlane.xlu0 %2967
  %v2969 = vsel %vm970, %v2919, 0.0
  %2970 = vadd.xlane.f32.xlu0 %v2969
  %v2971 = vpop.xlane.xlu0 %2970
  %v2972 = vsel %vm970, %v2920, 0.0
  %2973 = vadd.xlane.f32.xlu0 %v2972
  %v2974 = vpop.xlane.xlu0 %2973
  %v2975 = vsel %vm970, %v2921, 0.0
  %2976 = vadd.xlane.f32.xlu0 %v2975
  %v2977 = vpop.xlane.xlu0 %2976
  %v2978 = vsel %vm970, %v2922, 0.0
  %2979 = vadd.xlane.f32.xlu0 %v2978
  %v2980 = vpop.xlane.xlu0 %2979
  %v2981 = vsel %vm970, %v2923, 0.0
  %2982 = vadd.xlane.f32.xlu0 %v2981
  %v2983 = vpop.xlane.xlu0 %2982
  %v2984 = vsel %vm970, %v2924, 0.0
  %2985 = vadd.xlane.f32.xlu0 %v2984
  %v2986 = vpop.xlane.xlu0 %2985
  %v2987 = vsel %vm970, %v2925, 0.0
  %2988 = vadd.xlane.f32.xlu0 %v2987
  %v2989 = vpop.xlane.xlu0 %2988
  %v2990 = vsel %vm970, %v2926, 0.0
  %2991 = vadd.xlane.f32.xlu0 %v2990
  %v2992 = vpop.xlane.xlu0 %2991
  %v2993 = vsel %vm970, %v2927, 0.0
  %2994 = vadd.xlane.f32.xlu0 %v2993
  %v2995 = vpop.xlane.xlu0 %2994
  %v2996 = vsel %vm970, %v2928, 0.0
  %2997 = vadd.xlane.f32.xlu0 %v2996
  %v2998 = vpop.xlane.xlu0 %2997
  %v2999 = vsel %vm970, %v2929, 0.0
  %3000 = vadd.xlane.f32.xlu0 %v2999
  %v3001 = vpop.xlane.xlu0 %3000
  %v3002 = vsel %vm970, %v2930, 0.0
  %3003 = vadd.xlane.f32.xlu0 %v3002
  %v3004 = vpop.xlane.xlu0 %3003
  %v3005 = vsel %vm970, %v2931, 0.0
  %3006 = vadd.xlane.f32.xlu0 %v3005
  %v3007 = vpop.xlane.xlu0 %3006
  %v3008 = vsel %vm970, %v2932, 0.0
  %3009 = vadd.xlane.f32.xlu0 %v3008
  %v3010 = vpop.xlane.xlu0 %3009
  %v3011 = vsel %vm970, %v2933, 0.0
  %3012 = vadd.xlane.f32.xlu0 %v3011
  %v3013 = vpop.xlane.xlu0 %3012
  %v3014 = vsel %vm970, %v2934, 0.0
  %3015 = vadd.xlane.f32.xlu0 %v3014
  %v3016 = vpop.xlane.xlu0 %3015
  %v3017 = vsel %vm970, %v2935, 0.0
  %3018 = vadd.xlane.f32.xlu0 %v3017
  %v3019 = vpop.xlane.xlu0 %3018
  %v3020 = vsel %vm970, %v2936, 0.0
  %3021 = vadd.xlane.f32.xlu0 %v3020
  %v3022 = vpop.xlane.xlu0 %3021
  %v3023 = vsel %vm970, %v2937, 0.0
  %3024 = vadd.xlane.f32.xlu0 %v3023
  %v3025 = vpop.xlane.xlu0 %3024
  %v3026 = vsel %vm970, %v2938, 0.0
  %3027 = vadd.xlane.f32.xlu0 %v3026
  %v3028 = vpop.xlane.xlu0 %3027
  %v3029 = vsel %vm970, %v2939, 0.0
  %3030 = vadd.xlane.f32.xlu0 %v3029
  %v3031 = vpop.xlane.xlu0 %3030
  %v3032 = vsel %vm970, %v2940, 0.0
  %3033 = vadd.xlane.f32.xlu0 %v3032
  %v3034 = vpop.xlane.xlu0 %3033
  %v3035 = vsel %vm970, %v2941, 0.0
  %3036 = vadd.xlane.f32.xlu0 %v3035
  %v3037 = vpop.xlane.xlu0 %3036
  %v3038 = vmul.f32 %v2944, %v1137
  %v3039 = vmul.f32 %v2947, %v1137
  %v3040 = vmul.f32 %v2950, %v1137
  %v3041 = vmul.f32 %v2953, %v1137
  %v3042 = vmul.f32 %v2956, %v1137
  %v3043 = vmul.f32 %v2959, %v1137
  %v3044 = vmul.f32 %v2962, %v1137
  %v3045 = vmul.f32 %v2965, %v1137
  %v3046 = vmul.f32 %v2968, %v1137
  %v3047 = vmul.f32 %v2971, %v1137
  %v3048 = vmul.f32 %v2974, %v1137
  %v3049 = vmul.f32 %v2977, %v1137
  %v3050 = vmul.f32 %v2980, %v1137
  %v3051 = vmul.f32 %v2983, %v1137
  %v3052 = vmul.f32 %v2986, %v1137
  %v3053 = vmul.f32 %v2989, %v1137
  %v3054 = vmul.f32 %v2992, %v1137
  %v3055 = vmul.f32 %v2995, %v1137
  %v3056 = vmul.f32 %v2998, %v1137
  %v3057 = vmul.f32 %v3001, %v1137
  %v3058 = vmul.f32 %v3004, %v1137
  %v3059 = vmul.f32 %v3007, %v1137
  %v3060 = vmul.f32 %v3010, %v1137
  %v3061 = vmul.f32 %v3013, %v1137
  %v3062 = vmul.f32 %v3016, %v1137
  %v3063 = vmul.f32 %v3019, %v1137
  %v3064 = vmul.f32 %v3022, %v1137
  %v3065 = vmul.f32 %v3025, %v1137
  %v3066 = vmul.f32 %v3028, %v1137
  %v3067 = vmul.f32 %v3031, %v1137
  %v3068 = vmul.f32 %v3034, %v1137
  %v3069 = vmul.f32 %v3037, %v1137
  %v3070 = vadd.f32 %v3038, 1e-05
  %v3071 = vadd.f32 %v3039, 1e-05
  %v3072 = vadd.f32 %v3040, 1e-05
  %v3073 = vadd.f32 %v3041, 1e-05
  %v3074 = vadd.f32 %v3042, 1e-05
  %v3075 = vadd.f32 %v3043, 1e-05
  %v3076 = vadd.f32 %v3044, 1e-05
  %v3077 = vadd.f32 %v3045, 1e-05
  %v3078 = vadd.f32 %v3046, 1e-05
  %v3079 = vadd.f32 %v3047, 1e-05
  %v3080 = vadd.f32 %v3048, 1e-05
  %v3081 = vadd.f32 %v3049, 1e-05
  %v3082 = vadd.f32 %v3050, 1e-05
  %v3083 = vadd.f32 %v3051, 1e-05
  %v3084 = vadd.f32 %v3052, 1e-05
  %v3085 = vadd.f32 %v3053, 1e-05
  %v3086 = vadd.f32 %v3054, 1e-05
  %v3087 = vadd.f32 %v3055, 1e-05
  %v3088 = vadd.f32 %v3056, 1e-05
  %v3089 = vadd.f32 %v3057, 1e-05
  %v3090 = vadd.f32 %v3058, 1e-05
  %v3091 = vadd.f32 %v3059, 1e-05
  %v3092 = vadd.f32 %v3060, 1e-05
  %v3093 = vadd.f32 %v3061, 1e-05
  %v3094 = vadd.f32 %v3062, 1e-05
  %v3095 = vadd.f32 %v3063, 1e-05
  %v3096 = vadd.f32 %v3064, 1e-05
  %v3097 = vadd.f32 %v3065, 1e-05
  %v3098 = vadd.f32 %v3066, 1e-05
  %v3099 = vadd.f32 %v3067, 1e-05
  %v3100 = vadd.f32 %v3068, 1e-05
  %v3101 = vadd.f32 %v3069, 1e-05
  %v3102 = vrsqrt.pop %v3070
  %v3103 = vrsqrt.pop %v3071
  %v3104 = vrsqrt.pop %v3072
  %v3105 = vrsqrt.pop %v3073
  %v3106 = vrsqrt.pop %v3074
  %v3107 = vrsqrt.pop %v3075
  %v3108 = vrsqrt.pop %v3076
  %v3109 = vrsqrt.pop %v3077
  %v3110 = vrsqrt.pop %v3078
  %v3111 = vrsqrt.pop %v3079
  %v3112 = vrsqrt.pop %v3080
  %v3113 = vrsqrt.pop %v3081
  %v3114 = vrsqrt.pop %v3082
  %v3115 = vrsqrt.pop %v3083
  %v3116 = vrsqrt.pop %v3084
  %v3117 = vrsqrt.pop %v3085
  %v3118 = vrsqrt.pop %v3086
  %v3119 = vrsqrt.pop %v3087
  %v3120 = vrsqrt.pop %v3088
  %v3121 = vrsqrt.pop %v3089
  %v3122 = vrsqrt.pop %v3090
  %v3123 = vrsqrt.pop %v3091
  %v3124 = vrsqrt.pop %v3092
  %v3125 = vrsqrt.pop %v3093
  %v3126 = vrsqrt.pop %v3094
  %v3127 = vrsqrt.pop %v3095
  %v3128 = vrsqrt.pop %v3096
  %v3129 = vrsqrt.pop %v3097
  %v3130 = vrsqrt.pop %v3098
  %v3131 = vrsqrt.pop %v3099
  %v3132 = vrsqrt.pop %v3100
  %v3133 = vrsqrt.pop %v3101
  %v3134 = vmul.f32 %v2878, %v3102
  %v3135 = vmul.f32 %v2879, %v3103
  %v3136 = vmul.f32 %v2880, %v3104
  %v3137 = vmul.f32 %v2881, %v3105
  %v3138 = vmul.f32 %v2882, %v3106
  %v3139 = vmul.f32 %v2883, %v3107
  %v3140 = vmul.f32 %v2884, %v3108
  %v3141 = vmul.f32 %v2885, %v3109
  %v3142 = vmul.f32 %v2886, %v3110
  %v3143 = vmul.f32 %v2887, %v3111
  %v3144 = vmul.f32 %v2888, %v3112
  %v3145 = vmul.f32 %v2889, %v3113
  %v3146 = vmul.f32 %v2890, %v3114
  %v3147 = vmul.f32 %v2891, %v3115
  %v3148 = vmul.f32 %v2892, %v3116
  %v3149 = vmul.f32 %v2893, %v3117
  %v3150 = vmul.f32 %v2894, %v3118
  %v3151 = vmul.f32 %v2895, %v3119
  %v3152 = vmul.f32 %v2896, %v3120
  %v3153 = vmul.f32 %v2897, %v3121
  %v3154 = vmul.f32 %v2898, %v3122
  %v3155 = vmul.f32 %v2899, %v3123
  %v3156 = vmul.f32 %v2900, %v3124
  %v3157 = vmul.f32 %v2901, %v3125
  %v3158 = vmul.f32 %v2902, %v3126
  %v3159 = vmul.f32 %v2903, %v3127
  %v3160 = vmul.f32 %v2904, %v3128
  %v3161 = vmul.f32 %v2905, %v3129
  %v3162 = vmul.f32 %v2906, %v3130
  %v3163 = vmul.f32 %v2907, %v3131
  %v3164 = vmul.f32 %v2908, %v3132
  %v3165 = vmul.f32 %v2909, %v3133
  %v3166 = vlaneseq
  %v3167 = vshrl.u32 %v3166, 7
  %v3168 = vsub.s32 7, %v3167
  %v3169 = vrot.slane %v125, %v3168
  %v3170 = vmul.f32 %v3134, %v3169
  %v3171 = vmul.f32 %v3135, %v3169
  %v3172 = vmul.f32 %v3136, %v3169
  %v3173 = vmul.f32 %v3137, %v3169
  %v3174 = vmul.f32 %v3138, %v3169
  %v3175 = vmul.f32 %v3139, %v3169
  %v3176 = vmul.f32 %v3140, %v3169
  %v3177 = vmul.f32 %v3141, %v3169
  %v3178 = vmul.f32 %v3142, %v3169
  %v3179 = vmul.f32 %v3143, %v3169
  %v3180 = vmul.f32 %v3144, %v3169
  %v3181 = vmul.f32 %v3145, %v3169
  %v3182 = vmul.f32 %v3146, %v3169
  %v3183 = vmul.f32 %v3147, %v3169
  %v3184 = vmul.f32 %v3148, %v3169
  %v3185 = vmul.f32 %v3149, %v3169
  %v3186 = vmul.f32 %v3150, %v3169
  %v3187 = vmul.f32 %v3151, %v3169
  %v3188 = vmul.f32 %v3152, %v3169
  %v3189 = vmul.f32 %v3153, %v3169
  %v3190 = vmul.f32 %v3154, %v3169
  %v3191 = vmul.f32 %v3155, %v3169
  %v3192 = vmul.f32 %v3156, %v3169
  %v3193 = vmul.f32 %v3157, %v3169
  %v3194 = vmul.f32 %v3158, %v3169
  %v3195 = vmul.f32 %v3159, %v3169
  %v3196 = vmul.f32 %v3160, %v3169
  %v3197 = vmul.f32 %v3161, %v3169
  %v3198 = vmul.f32 %v3162, %v3169
  %v3199 = vmul.f32 %v3163, %v3169
  %v3200 = vmul.f32 %v3164, %v3169
  %v3201 = vmul.f32 %v3165, %v3169
  %v3202 = vlaneseq
  %v3203 = vshrl.u32 %v3202, 7
  %v3204 = vsub.s32 0, %v3203
  %v3205 = vrot.slane %v126, %v3204
  %v3206 = vadd.f32 %v3170, %v3205
  %v3207 = vadd.f32 %v3171, %v3205
  %v3208 = vadd.f32 %v3172, %v3205
  %v3209 = vadd.f32 %v3173, %v3205
  %v3210 = vadd.f32 %v3174, %v3205
  %v3211 = vadd.f32 %v3175, %v3205
  %v3212 = vadd.f32 %v3176, %v3205
  %v3213 = vadd.f32 %v3177, %v3205
  %v3214 = vadd.f32 %v3178, %v3205
  %v3215 = vadd.f32 %v3179, %v3205
  %v3216 = vadd.f32 %v3180, %v3205
  %v3217 = vadd.f32 %v3181, %v3205
  %v3218 = vadd.f32 %v3182, %v3205
  %v3219 = vadd.f32 %v3183, %v3205
  %v3220 = vadd.f32 %v3184, %v3205
  %v3221 = vadd.f32 %v3185, %v3205
  %v3222 = vadd.f32 %v3186, %v3205
  %v3223 = vadd.f32 %v3187, %v3205
  %v3224 = vadd.f32 %v3188, %v3205
  %v3225 = vadd.f32 %v3189, %v3205
  %v3226 = vadd.f32 %v3190, %v3205
  %v3227 = vadd.f32 %v3191, %v3205
  %v3228 = vadd.f32 %v3192, %v3205
  %v3229 = vadd.f32 %v3193, %v3205
  %v3230 = vadd.f32 %v3194, %v3205
  %v3231 = vadd.f32 %v3195, %v3205
  %v3232 = vadd.f32 %v3196, %v3205
  %v3233 = vadd.f32 %v3197, %v3205
  %v3234 = vadd.f32 %v3198, %v3205
  %v3235 = vadd.f32 %v3199, %v3205
  %v3236 = vadd.f32 %v3200, %v3205
  %v3237 = vadd.f32 %v3201, %v3205
  %v3238 = vmax.f32 %v3206, 0.0
  %v3239 = vmax.f32 %v3207, 0.0
  %v3240 = vmax.f32 %v3208, 0.0
  %v3241 = vmax.f32 %v3209, 0.0
  %v3242 = vmax.f32 %v3210, 0.0
  %v3243 = vmax.f32 %v3211, 0.0
  %v3244 = vmax.f32 %v3212, 0.0
  %v3245 = vmax.f32 %v3213, 0.0
  %v3246 = vmax.f32 %v3214, 0.0
  %v3247 = vmax.f32 %v3215, 0.0
  %v3248 = vmax.f32 %v3216, 0.0
  %v3249 = vmax.f32 %v3217, 0.0
  %v3250 = vmax.f32 %v3218, 0.0
  %v3251 = vmax.f32 %v3219, 0.0
  %v3252 = vmax.f32 %v3220, 0.0
  %v3253 = vmax.f32 %v3221, 0.0
  %v3254 = vmax.f32 %v3222, 0.0
  %v3255 = vmax.f32 %v3223, 0.0
  %v3256 = vmax.f32 %v3224, 0.0
  %v3257 = vmax.f32 %v3225, 0.0
  %v3258 = vmax.f32 %v3226, 0.0
  %v3259 = vmax.f32 %v3227, 0.0
  %v3260 = vmax.f32 %v3228, 0.0
  %v3261 = vmax.f32 %v3229, 0.0
  %v3262 = vmax.f32 %v3230, 0.0
  %v3263 = vmax.f32 %v3231, 0.0
  %v3264 = vmax.f32 %v3232, 0.0
  %v3265 = vmax.f32 %v3233, 0.0
  %v3266 = vmax.f32 %v3234, 0.0
  %v3267 = vmax.f32 %v3235, 0.0
  %v3268 = vmax.f32 %v3236, 0.0
  %v3269 = vmax.f32 %v3237, 0.0
  %v3270 = vlaneseq
  %v3271 = vshrl.u32 %v3270, 7
  %v3272 = vsub.s32 1, %v3271
  %v3273 = vrot.slane %v126, %v3272
  %v3275 = vsel %vm970, %v3238, 0
  %v3278 = vsel %vm970, %v3239, 0
  %v3281 = vsel %vm970, %v3240, 0
  %v3284 = vsel %vm970, %v3241, 0
  %v3287 = vsel %vm970, %v3242, 0
  %v3290 = vsel %vm970, %v3243, 0
  %v3293 = vsel %vm970, %v3244, 0
  %v3296 = vsel %vm970, %v3245, 0
  %v3299 = vsel %vm970, %v3246, 0
  %v3302 = vsel %vm970, %v3247, 0
  %v3305 = vsel %vm970, %v3248, 0
  %v3308 = vsel %vm970, %v3249, 0
  %v3311 = vsel %vm970, %v3250, 0
  %v3314 = vsel %vm970, %v3251, 0
  %v3317 = vsel %vm970, %v3252, 0
  %v3320 = vsel %vm970, %v3253, 0
  %v3323 = vsel %vm970, %v3254, 0
  %v3326 = vsel %vm970, %v3255, 0
  %v3329 = vsel %vm970, %v3256, 0
  %v3332 = vsel %vm970, %v3257, 0
  %v3335 = vsel %vm970, %v3258, 0
  %v3338 = vsel %vm970, %v3259, 0
  %v3341 = vsel %vm970, %v3260, 0
  %v3344 = vsel %vm970, %v3261, 0
  %v3347 = vsel %vm970, %v3262, 0
  %v3350 = vsel %vm970, %v3263, 0
  %v3353 = vsel %vm970, %v3264, 0
  %v3356 = vsel %vm970, %v3265, 0
  %v3359 = vsel %vm970, %v3266, 0
  %v3362 = vsel %vm970, %v3267, 0
  %v3365 = vsel %vm970, %v3268, 0
  %v3368 = vsel %vm970, %v3269, 0
  %3370 = vmatprep.subr.mxu0 0.0
  %3371 = vmatpush1.msra.mxu0 %v121
  %3372 = vmatprep.subr.mxu0 0.0
  %3373 = vmatpush1.msra.mxu0 %v122
  %3374 = vmatprep.subr.mxu0 0.0
  %3375 = vmatpush1.msra.mxu0 %v123
  %3376 = vmatprep.subr.mxu0 0.0
  %3377 = vmatpush1.msra.mxu0 %v124
  %3378 = vmatprep.subr.mxu0 0.0
  %3379 = vmatpush1.msra.mxu0 0.0
  %3380 = vmatprep.subr.mxu0 0.0
  %3381 = vmatpush1.msra.mxu0 0.0
  %3382 = vmatprep.subr.mxu0 0.0
  %3383 = vmatpush1.msra.mxu0 0.0
  %3384 = vmatprep.subr.mxu0 0.0
  %3385 = vmatpush1.msra.mxu0 0.0
  %3386 = vmatprep.subr.mxu0 0.0
  %3387 = vmatpush1.msra.mxu0 0.0
  %3388 = vmatprep.subr.mxu0 0.0
  %3389 = vmatpush1.msra.mxu0 0.0
  %3390 = vmatprep.subr.mxu0 0.0
  %3391 = vmatpush1.msra.mxu0 0.0
  %3392 = vmatprep.subr.mxu0 0.0
  %3393 = vmatpush1.msra.mxu0 0.0
  %3394 = vmatprep.subr.mxu0 0.0
  %3395 = vmatpush1.msra.mxu0 0.0
  %3396 = vmatprep.subr.mxu0 0.0
  %3397 = vmatpush1.msra.mxu0 0.0
  %3398 = vmatprep.subr.mxu0 0.0
  %3399 = vmatpush1.msra.mxu0 0.0
  %3400 = vmatprep.subr.mxu0 0.0
  %3401 = vmatpush1.msra.mxu0 0.0
  %3402 = vmatprep.subr.mxu0 0.0
  %3403 = vmatpush1.msra.mxu0 0.0
  %3404 = vmatprep.subr.mxu0 0.0
  %3405 = vmatpush1.msra.mxu0 0.0
  %3406 = vmatprep.subr.mxu0 0.0
  %3407 = vmatpush1.msra.mxu0 0.0
  %3408 = vmatprep.subr.mxu0 0.0
  %3409 = vmatpush1.msra.mxu0 0.0
  %3410 = vmatprep.subr.mxu0 0.0
  %3411 = vmatpush1.msra.mxu0 0.0
  %3412 = vmatprep.subr.mxu0 0.0
  %3413 = vmatpush1.msra.mxu0 0.0
  %3414 = vmatprep.subr.mxu0 0.0
  %3415 = vmatpush1.msra.mxu0 0.0
  %3416 = vmatprep.subr.mxu0 0.0
  %3417 = vmatpush1.msra.mxu0 0.0
  %3418 = vmatprep.subr.mxu0 0.0
  %3419 = vmatpush1.msra.mxu0 0.0
  %3420 = vmatprep.subr.mxu0 0.0
  %3421 = vmatpush1.msra.mxu0 0.0
  %3422 = vmatprep.subr.mxu0 0.0
  %3423 = vmatpush1.msra.mxu0 0.0
  %3424 = vmatprep.subr.mxu0 0.0
  %3425 = vmatpush1.msra.mxu0 0.0
  %3426 = vmatprep.subr.mxu0 0.0
  %3427 = vmatpush1.msra.mxu0 0.0
  %3428 = vmatprep.subr.mxu0 0.0
  %3429 = vmatpush1.msra.mxu0 0.0
  %3430 = vmatprep.subr.mxu0 0.0
  %3431 = vmatpush1.msra.mxu0 0.0
  %3432 = vmatprep.subr.mxu0 0.0
  %3433 = vmatpush1.msra.mxu0 0.0
  %3434 = vmatprep.mubr.f32.mxu0 0.0
  %3435 = vmatmul.mubr.f32.gmra.mrb[0].mxu0 %v3275
  %v3436 = vpop.f32.mrb[0].mxu0
  %v3437 = vadd.f32 %v3273, %v3436
  %v3438 = vpop.f32.mrb[0].mxu0
  %3439 = vmatprep.mubr.f32.mxu0 0.0
  %3440 = vmatmul.mubr.f32.gmra.mrb[0].mxu0 %v3278
  %v3441 = vpop.f32.mrb[0].mxu0
  %v3442 = vadd.f32 %v3273, %v3441
  %v3443 = vpop.f32.mrb[0].mxu0
  %3444 = vmatprep.mubr.f32.mxu0 0.0
  %3445 = vmatmul.mubr.f32.gmra.mrb[0].mxu0 %v3281
  %v3446 = vpop.f32.mrb[0].mxu0
  %v3447 = vadd.f32 %v3273, %v3446
  %v3448 = vpop.f32.mrb[0].mxu0
  %3449 = vmatprep.mubr.f32.mxu0 0.0
  %3450 = vmatmul.mubr.f32.gmra.mrb[0].mxu0 %v3284
  %v3451 = vpop.f32.mrb[0].mxu0
  %v3452 = vadd.f32 %v3273, %v3451
  %v3453 = vpop.f32.mrb[0].mxu0
  %3454 = vmatprep.mubr.f32.mxu0 0.0
  %3455 = vmatmul.mubr.f32.gmra.mrb[0].mxu0 %v3287
  %v3456 = vpop.f32.mrb[0].mxu0
  %v3457 = vadd.f32 %v3273, %v3456
  %v3458 = vpop.f32.mrb[0].mxu0
  %3459 = vmatprep.mubr.f32.mxu0 0.0
  %3460 = vmatmul.mubr.f32.gmra.mrb[0].mxu0 %v3290
  %v3461 = vpop.f32.mrb[0].mxu0
  %v3462 = vadd.f32 %v3273, %v3461
  %v3463 = vpop.f32.mrb[0].mxu0
  %3464 = vmatprep.mubr.f32.mxu0 0.0
  %3465 = vmatmul.mubr.f32.gmra.mrb[0].mxu0 %v3293
  %v3466 = vpop.f32.mrb[0].mxu0
  %v3467 = vadd.f32 %v3273, %v3466
  %v3468 = vpop.f32.mrb[0].mxu0
  %3469 = vmatprep.mubr.f32.mxu0 0.0
  %3470 = vmatmul.mubr.f32.gmra.mrb[0].mxu0 %v3296
  %v3471 = vpop.f32.mrb[0].mxu0
  %v3472 = vadd.f32 %v3273, %v3471
  %v3473 = vpop.f32.mrb[0].mxu0
  %3474 = vmatprep.mubr.f32.mxu0 0.0
  %3475 = vmatmul.mubr.f32.gmra.mrb[0].mxu0 %v3299
  %v3476 = vpop.f32.mrb[0].mxu0
  %v3477 = vadd.f32 %v3273, %v3476
  %v3478 = vpop.f32.mrb[0].mxu0
  %3479 = vmatprep.mubr.f32.mxu0 0.0
  %3480 = vmatmul.mubr.f32.gmra.mrb[0].mxu0 %v3302
  %v3481 = vpop.f32.mrb[0].mxu0
  %v3482 = vadd.f32 %v3273, %v3481
  %v3483 = vpop.f32.mrb[0].mxu0
  %3484 = vmatprep.mubr.f32.mxu0 0.0
  %3485 = vmatmul.mubr.f32.gmra.mrb[0].mxu0 %v3305
  %v3486 = vpop.f32.mrb[0].mxu0
  %v3487 = vadd.f32 %v3273, %v3486
  %v3488 = vpop.f32.mrb[0].mxu0
  %3489 = vmatprep.mubr.f32.mxu0 0.0
  %3490 = vmatmul.mubr.f32.gmra.mrb[0].mxu0 %v3308
  %v3491 = vpop.f32.mrb[0].mxu0
  %v3492 = vadd.f32 %v3273, %v3491
  %v3493 = vpop.f32.mrb[0].mxu0
  %3494 = vmatprep.mubr.f32.mxu0 0.0
  %3495 = vmatmul.mubr.f32.gmra.mrb[0].mxu0 %v3311
  %v3496 = vpop.f32.mrb[0].mxu0
  %v3497 = vadd.f32 %v3273, %v3496
  %v3498 = vpop.f32.mrb[0].mxu0
  %3499 = vmatprep.mubr.f32.mxu0 0.0
  %3500 = vmatmul.mubr.f32.gmra.mrb[0].mxu0 %v3314
  %v3501 = vpop.f32.mrb[0].mxu0
  %v3502 = vadd.f32 %v3273, %v3501
  %v3503 = vpop.f32.mrb[0].mxu0
  %3504 = vmatprep.mubr.f32.mxu0 0.0
  %3505 = vmatmul.mubr.f32.gmra.mrb[0].mxu0 %v3317
  %v3506 = vpop.f32.mrb[0].mxu0
  %v3507 = vadd.f32 %v3273, %v3506
  %v3508 = vpop.f32.mrb[0].mxu0
  %3509 = vmatprep.mubr.f32.mxu0 0.0
  %3510 = vmatmul.mubr.f32.gmra.mrb[0].mxu0 %v3320
  %v3511 = vpop.f32.mrb[0].mxu0
  %v3512 = vadd.f32 %v3273, %v3511
  %v3513 = vpop.f32.mrb[0].mxu0
  %3514 = vmatprep.mubr.f32.mxu0 0.0
  %3515 = vmatmul.mubr.f32.gmra.mrb[0].mxu0 %v3323
  %v3516 = vpop.f32.mrb[0].mxu0
  %v3517 = vadd.f32 %v3273, %v3516
  %v3518 = vpop.f32.mrb[0].mxu0
  %3519 = vmatprep.mubr.f32.mxu0 0.0
  %3520 = vmatmul.mubr.f32.gmra.mrb[0].mxu0 %v3326
  %v3521 = vpop.f32.mrb[0].mxu0
  %v3522 = vadd.f32 %v3273, %v3521
  %v3523 = vpop.f32.mrb[0].mxu0
  %3524 = vmatprep.mubr.f32.mxu0 0.0
  %3525 = vmatmul.mubr.f32.gmra.mrb[0].mxu0 %v3329
  %v3526 = vpop.f32.mrb[0].mxu0
  %v3527 = vadd.f32 %v3273, %v3526
  %v3528 = vpop.f32.mrb[0].mxu0
  %3529 = vmatprep.mubr.f32.mxu0 0.0
  %3530 = vmatmul.mubr.f32.gmra.mrb[0].mxu0 %v3332
  %v3531 = vpop.f32.mrb[0].mxu0
  %v3532 = vadd.f32 %v3273, %v3531
  %v3533 = vpop.f32.mrb[0].mxu0
  %3534 = vmatprep.mubr.f32.mxu0 0.0
  %3535 = vmatmul.mubr.f32.gmra.mrb[0].mxu0 %v3335
  %v3536 = vpop.f32.mrb[0].mxu0
  %v3537 = vadd.f32 %v3273, %v3536
  %v3538 = vpop.f32.mrb[0].mxu0
  %3539 = vmatprep.mubr.f32.mxu0 0.0
  %3540 = vmatmul.mubr.f32.gmra.mrb[0].mxu0 %v3338
  %v3541 = vpop.f32.mrb[0].mxu0
  %v3542 = vadd.f32 %v3273, %v3541
  %v3543 = vpop.f32.mrb[0].mxu0
  %3544 = vmatprep.mubr.f32.mxu0 0.0
  %3545 = vmatmul.mubr.f32.gmra.mrb[0].mxu0 %v3341
  %v3546 = vpop.f32.mrb[0].mxu0
  %v3547 = vadd.f32 %v3273, %v3546
  %v3548 = vpop.f32.mrb[0].mxu0
  %3549 = vmatprep.mubr.f32.mxu0 0.0
  %3550 = vmatmul.mubr.f32.gmra.mrb[0].mxu0 %v3344
  %v3551 = vpop.f32.mrb[0].mxu0
  %v3552 = vadd.f32 %v3273, %v3551
  %v3553 = vpop.f32.mrb[0].mxu0
  %3554 = vmatprep.mubr.f32.mxu0 0.0
  %3555 = vmatmul.mubr.f32.gmra.mrb[0].mxu0 %v3347
  %v3556 = vpop.f32.mrb[0].mxu0
  %v3557 = vadd.f32 %v3273, %v3556
  %v3558 = vpop.f32.mrb[0].mxu0
  %3559 = vmatprep.mubr.f32.mxu0 0.0
  %3560 = vmatmul.mubr.f32.gmra.mrb[0].mxu0 %v3350
  %v3561 = vpop.f32.mrb[0].mxu0
  %v3562 = vadd.f32 %v3273, %v3561
  %v3563 = vpop.f32.mrb[0].mxu0
  %3564 = vmatprep.mubr.f32.mxu0 0.0
  %3565 = vmatmul.mubr.f32.gmra.mrb[0].mxu0 %v3353
  %v3566 = vpop.f32.mrb[0].mxu0
  %v3567 = vadd.f32 %v3273, %v3566
  %v3568 = vpop.f32.mrb[0].mxu0
  %3569 = vmatprep.mubr.f32.mxu0 0.0
  %3570 = vmatmul.mubr.f32.gmra.mrb[0].mxu0 %v3356
  %v3571 = vpop.f32.mrb[0].mxu0
  %v3572 = vadd.f32 %v3273, %v3571
  %v3573 = vpop.f32.mrb[0].mxu0
  %3574 = vmatprep.mubr.f32.mxu0 0.0
  %3575 = vmatmul.mubr.f32.gmra.mrb[0].mxu0 %v3359
  %v3576 = vpop.f32.mrb[0].mxu0
  %v3577 = vadd.f32 %v3273, %v3576
  %v3578 = vpop.f32.mrb[0].mxu0
  %3579 = vmatprep.mubr.f32.mxu0 0.0
  %3580 = vmatmul.mubr.f32.gmra.mrb[0].mxu0 %v3362
  %v3581 = vpop.f32.mrb[0].mxu0
  %v3582 = vadd.f32 %v3273, %v3581
  %v3583 = vpop.f32.mrb[0].mxu0
  %3584 = vmatprep.mubr.f32.mxu0 0.0
  %3585 = vmatmul.mubr.f32.gmra.mrb[0].mxu0 %v3365
  %v3586 = vpop.f32.mrb[0].mxu0
  %v3587 = vadd.f32 %v3273, %v3586
  %v3588 = vpop.f32.mrb[0].mxu0
  %3589 = vmatprep.mubr.f32.mxu0 0.0
  %3590 = vmatmul.mubr.f32.gmra.mrb[0].mxu0 %v3368
  %v3591 = vpop.f32.mrb[0].mxu0
  %v3592 = vadd.f32 %v3273, %v3591
  %v3593 = vpop.f32.mrb[0].mxu0
  %3594 = vdwg.mxu0
  %v3595 = vsel %vm970, %v3437, 0.0
  %3596 = vadd.xlane.f32.xlu0 %v3595
  %v3597 = vpop.xlane.xlu0 %3596
  %v3598 = vsel %vm970, %v3442, 0.0
  %3599 = vadd.xlane.f32.xlu0 %v3598
  %v3600 = vpop.xlane.xlu0 %3599
  %v3601 = vsel %vm970, %v3447, 0.0
  %3602 = vadd.xlane.f32.xlu0 %v3601
  %v3603 = vpop.xlane.xlu0 %3602
  %v3604 = vsel %vm970, %v3452, 0.0
  %3605 = vadd.xlane.f32.xlu0 %v3604
  %v3606 = vpop.xlane.xlu0 %3605
  %v3607 = vsel %vm970, %v3457, 0.0
  %3608 = vadd.xlane.f32.xlu0 %v3607
  %v3609 = vpop.xlane.xlu0 %3608
  %v3610 = vsel %vm970, %v3462, 0.0
  %3611 = vadd.xlane.f32.xlu0 %v3610
  %v3612 = vpop.xlane.xlu0 %3611
  %v3613 = vsel %vm970, %v3467, 0.0
  %3614 = vadd.xlane.f32.xlu0 %v3613
  %v3615 = vpop.xlane.xlu0 %3614
  %v3616 = vsel %vm970, %v3472, 0.0
  %3617 = vadd.xlane.f32.xlu0 %v3616
  %v3618 = vpop.xlane.xlu0 %3617
  %v3619 = vsel %vm970, %v3477, 0.0
  %3620 = vadd.xlane.f32.xlu0 %v3619
  %v3621 = vpop.xlane.xlu0 %3620
  %v3622 = vsel %vm970, %v3482, 0.0
  %3623 = vadd.xlane.f32.xlu0 %v3622
  %v3624 = vpop.xlane.xlu0 %3623
  %v3625 = vsel %vm970, %v3487, 0.0
  %3626 = vadd.xlane.f32.xlu0 %v3625
  %v3627 = vpop.xlane.xlu0 %3626
  %v3628 = vsel %vm970, %v3492, 0.0
  %3629 = vadd.xlane.f32.xlu0 %v3628
  %v3630 = vpop.xlane.xlu0 %3629
  %v3631 = vsel %vm970, %v3497, 0.0
  %3632 = vadd.xlane.f32.xlu0 %v3631
  %v3633 = vpop.xlane.xlu0 %3632
  %v3634 = vsel %vm970, %v3502, 0.0
  %3635 = vadd.xlane.f32.xlu0 %v3634
  %v3636 = vpop.xlane.xlu0 %3635
  %v3637 = vsel %vm970, %v3507, 0.0
  %3638 = vadd.xlane.f32.xlu0 %v3637
  %v3639 = vpop.xlane.xlu0 %3638
  %v3640 = vsel %vm970, %v3512, 0.0
  %3641 = vadd.xlane.f32.xlu0 %v3640
  %v3642 = vpop.xlane.xlu0 %3641
  %v3643 = vsel %vm970, %v3517, 0.0
  %3644 = vadd.xlane.f32.xlu0 %v3643
  %v3645 = vpop.xlane.xlu0 %3644
  %v3646 = vsel %vm970, %v3522, 0.0
  %3647 = vadd.xlane.f32.xlu0 %v3646
  %v3648 = vpop.xlane.xlu0 %3647
  %v3649 = vsel %vm970, %v3527, 0.0
  %3650 = vadd.xlane.f32.xlu0 %v3649
  %v3651 = vpop.xlane.xlu0 %3650
  %v3652 = vsel %vm970, %v3532, 0.0
  %3653 = vadd.xlane.f32.xlu0 %v3652
  %v3654 = vpop.xlane.xlu0 %3653
  %v3655 = vsel %vm970, %v3537, 0.0
  %3656 = vadd.xlane.f32.xlu0 %v3655
  %v3657 = vpop.xlane.xlu0 %3656
  %v3658 = vsel %vm970, %v3542, 0.0
  %3659 = vadd.xlane.f32.xlu0 %v3658
  %v3660 = vpop.xlane.xlu0 %3659
  %v3661 = vsel %vm970, %v3547, 0.0
  %3662 = vadd.xlane.f32.xlu0 %v3661
  %v3663 = vpop.xlane.xlu0 %3662
  %v3664 = vsel %vm970, %v3552, 0.0
  %3665 = vadd.xlane.f32.xlu0 %v3664
  %v3666 = vpop.xlane.xlu0 %3665
  %v3667 = vsel %vm970, %v3557, 0.0
  %3668 = vadd.xlane.f32.xlu0 %v3667
  %v3669 = vpop.xlane.xlu0 %3668
  %v3670 = vsel %vm970, %v3562, 0.0
  %3671 = vadd.xlane.f32.xlu0 %v3670
  %v3672 = vpop.xlane.xlu0 %3671
  %v3673 = vsel %vm970, %v3567, 0.0
  %3674 = vadd.xlane.f32.xlu0 %v3673
  %v3675 = vpop.xlane.xlu0 %3674
  %v3676 = vsel %vm970, %v3572, 0.0
  %3677 = vadd.xlane.f32.xlu0 %v3676
  %v3678 = vpop.xlane.xlu0 %3677
  %v3679 = vsel %vm970, %v3577, 0.0
  %3680 = vadd.xlane.f32.xlu0 %v3679
  %v3681 = vpop.xlane.xlu0 %3680
  %v3682 = vsel %vm970, %v3582, 0.0
  %3683 = vadd.xlane.f32.xlu0 %v3682
  %v3684 = vpop.xlane.xlu0 %3683
  %v3685 = vsel %vm970, %v3587, 0.0
  %3686 = vadd.xlane.f32.xlu0 %v3685
  %v3687 = vpop.xlane.xlu0 %3686
  %v3688 = vsel %vm970, %v3592, 0.0
  %3689 = vadd.xlane.f32.xlu0 %v3688
  %v3690 = vpop.xlane.xlu0 %3689
  %v3691 = vmul.f32 %v3597, %v1137
  %v3692 = vmul.f32 %v3600, %v1137
  %v3693 = vmul.f32 %v3603, %v1137
  %v3694 = vmul.f32 %v3606, %v1137
  %v3695 = vmul.f32 %v3609, %v1137
  %v3696 = vmul.f32 %v3612, %v1137
  %v3697 = vmul.f32 %v3615, %v1137
  %v3698 = vmul.f32 %v3618, %v1137
  %v3699 = vmul.f32 %v3621, %v1137
  %v3700 = vmul.f32 %v3624, %v1137
  %v3701 = vmul.f32 %v3627, %v1137
  %v3702 = vmul.f32 %v3630, %v1137
  %v3703 = vmul.f32 %v3633, %v1137
  %v3704 = vmul.f32 %v3636, %v1137
  %v3705 = vmul.f32 %v3639, %v1137
  %v3706 = vmul.f32 %v3642, %v1137
  %v3707 = vmul.f32 %v3645, %v1137
  %v3708 = vmul.f32 %v3648, %v1137
  %v3709 = vmul.f32 %v3651, %v1137
  %v3710 = vmul.f32 %v3654, %v1137
  %v3711 = vmul.f32 %v3657, %v1137
  %v3712 = vmul.f32 %v3660, %v1137
  %v3713 = vmul.f32 %v3663, %v1137
  %v3714 = vmul.f32 %v3666, %v1137
  %v3715 = vmul.f32 %v3669, %v1137
  %v3716 = vmul.f32 %v3672, %v1137
  %v3717 = vmul.f32 %v3675, %v1137
  %v3718 = vmul.f32 %v3678, %v1137
  %v3719 = vmul.f32 %v3681, %v1137
  %v3720 = vmul.f32 %v3684, %v1137
  %v3721 = vmul.f32 %v3687, %v1137
  %v3722 = vmul.f32 %v3690, %v1137
  %v3723 = vsub.f32 %v3437, %v3691
  %v3724 = vsub.f32 %v3442, %v3692
  %v3725 = vsub.f32 %v3447, %v3693
  %v3726 = vsub.f32 %v3452, %v3694
  %v3727 = vsub.f32 %v3457, %v3695
  %v3728 = vsub.f32 %v3462, %v3696
  %v3729 = vsub.f32 %v3467, %v3697
  %v3730 = vsub.f32 %v3472, %v3698
  %v3731 = vsub.f32 %v3477, %v3699
  %v3732 = vsub.f32 %v3482, %v3700
  %v3733 = vsub.f32 %v3487, %v3701
  %v3734 = vsub.f32 %v3492, %v3702
  %v3735 = vsub.f32 %v3497, %v3703
  %v3736 = vsub.f32 %v3502, %v3704
  %v3737 = vsub.f32 %v3507, %v3705
  %v3738 = vsub.f32 %v3512, %v3706
  %v3739 = vsub.f32 %v3517, %v3707
  %v3740 = vsub.f32 %v3522, %v3708
  %v3741 = vsub.f32 %v3527, %v3709
  %v3742 = vsub.f32 %v3532, %v3710
  %v3743 = vsub.f32 %v3537, %v3711
  %v3744 = vsub.f32 %v3542, %v3712
  %v3745 = vsub.f32 %v3547, %v3713
  %v3746 = vsub.f32 %v3552, %v3714
  %v3747 = vsub.f32 %v3557, %v3715
  %v3748 = vsub.f32 %v3562, %v3716
  %v3749 = vsub.f32 %v3567, %v3717
  %v3750 = vsub.f32 %v3572, %v3718
  %v3751 = vsub.f32 %v3577, %v3719
  %v3752 = vsub.f32 %v3582, %v3720
  %v3753 = vsub.f32 %v3587, %v3721
  %v3754 = vsub.f32 %v3592, %v3722
  %v3755 = vmul.f32 %v3723, %v3723
  %v3756 = vmul.f32 %v3724, %v3724
  %v3757 = vmul.f32 %v3725, %v3725
  %v3758 = vmul.f32 %v3726, %v3726
  %v3759 = vmul.f32 %v3727, %v3727
  %v3760 = vmul.f32 %v3728, %v3728
  %v3761 = vmul.f32 %v3729, %v3729
  %v3762 = vmul.f32 %v3730, %v3730
  %v3763 = vmul.f32 %v3731, %v3731
  %v3764 = vmul.f32 %v3732, %v3732
  %v3765 = vmul.f32 %v3733, %v3733
  %v3766 = vmul.f32 %v3734, %v3734
  %v3767 = vmul.f32 %v3735, %v3735
  %v3768 = vmul.f32 %v3736, %v3736
  %v3769 = vmul.f32 %v3737, %v3737
  %v3770 = vmul.f32 %v3738, %v3738
  %v3771 = vmul.f32 %v3739, %v3739
  %v3772 = vmul.f32 %v3740, %v3740
  %v3773 = vmul.f32 %v3741, %v3741
  %v3774 = vmul.f32 %v3742, %v3742
  %v3775 = vmul.f32 %v3743, %v3743
  %v3776 = vmul.f32 %v3744, %v3744
  %v3777 = vmul.f32 %v3745, %v3745
  %v3778 = vmul.f32 %v3746, %v3746
  %v3779 = vmul.f32 %v3747, %v3747
  %v3780 = vmul.f32 %v3748, %v3748
  %v3781 = vmul.f32 %v3749, %v3749
  %v3782 = vmul.f32 %v3750, %v3750
  %v3783 = vmul.f32 %v3751, %v3751
  %v3784 = vmul.f32 %v3752, %v3752
  %v3785 = vmul.f32 %v3753, %v3753
  %v3786 = vmul.f32 %v3754, %v3754
  %v3787 = vsel %vm970, %v3755, 0.0
  %3788 = vadd.xlane.f32.xlu0 %v3787
  %v3789 = vpop.xlane.xlu0 %3788
  %v3790 = vsel %vm970, %v3756, 0.0
  %3791 = vadd.xlane.f32.xlu0 %v3790
  %v3792 = vpop.xlane.xlu0 %3791
  %v3793 = vsel %vm970, %v3757, 0.0
  %3794 = vadd.xlane.f32.xlu0 %v3793
  %v3795 = vpop.xlane.xlu0 %3794
  %v3796 = vsel %vm970, %v3758, 0.0
  %3797 = vadd.xlane.f32.xlu0 %v3796
  %v3798 = vpop.xlane.xlu0 %3797
  %v3799 = vsel %vm970, %v3759, 0.0
  %3800 = vadd.xlane.f32.xlu0 %v3799
  %v3801 = vpop.xlane.xlu0 %3800
  %v3802 = vsel %vm970, %v3760, 0.0
  %3803 = vadd.xlane.f32.xlu0 %v3802
  %v3804 = vpop.xlane.xlu0 %3803
  %v3805 = vsel %vm970, %v3761, 0.0
  %3806 = vadd.xlane.f32.xlu0 %v3805
  %v3807 = vpop.xlane.xlu0 %3806
  %v3808 = vsel %vm970, %v3762, 0.0
  %3809 = vadd.xlane.f32.xlu0 %v3808
  %v3810 = vpop.xlane.xlu0 %3809
  %v3811 = vsel %vm970, %v3763, 0.0
  %3812 = vadd.xlane.f32.xlu0 %v3811
  %v3813 = vpop.xlane.xlu0 %3812
  %v3814 = vsel %vm970, %v3764, 0.0
  %3815 = vadd.xlane.f32.xlu0 %v3814
  %v3816 = vpop.xlane.xlu0 %3815
  %v3817 = vsel %vm970, %v3765, 0.0
  %3818 = vadd.xlane.f32.xlu0 %v3817
  %v3819 = vpop.xlane.xlu0 %3818
  %v3820 = vsel %vm970, %v3766, 0.0
  %3821 = vadd.xlane.f32.xlu0 %v3820
  %v3822 = vpop.xlane.xlu0 %3821
  %v3823 = vsel %vm970, %v3767, 0.0
  %3824 = vadd.xlane.f32.xlu0 %v3823
  %v3825 = vpop.xlane.xlu0 %3824
  %v3826 = vsel %vm970, %v3768, 0.0
  %3827 = vadd.xlane.f32.xlu0 %v3826
  %v3828 = vpop.xlane.xlu0 %3827
  %v3829 = vsel %vm970, %v3769, 0.0
  %3830 = vadd.xlane.f32.xlu0 %v3829
  %v3831 = vpop.xlane.xlu0 %3830
  %v3832 = vsel %vm970, %v3770, 0.0
  %3833 = vadd.xlane.f32.xlu0 %v3832
  %v3834 = vpop.xlane.xlu0 %3833
  %v3835 = vsel %vm970, %v3771, 0.0
  %3836 = vadd.xlane.f32.xlu0 %v3835
  %v3837 = vpop.xlane.xlu0 %3836
  %v3838 = vsel %vm970, %v3772, 0.0
  %3839 = vadd.xlane.f32.xlu0 %v3838
  %v3840 = vpop.xlane.xlu0 %3839
  %v3841 = vsel %vm970, %v3773, 0.0
  %3842 = vadd.xlane.f32.xlu0 %v3841
  %v3843 = vpop.xlane.xlu0 %3842
  %v3844 = vsel %vm970, %v3774, 0.0
  %3845 = vadd.xlane.f32.xlu0 %v3844
  %v3846 = vpop.xlane.xlu0 %3845
  %v3847 = vsel %vm970, %v3775, 0.0
  %3848 = vadd.xlane.f32.xlu0 %v3847
  %v3849 = vpop.xlane.xlu0 %3848
  %v3850 = vsel %vm970, %v3776, 0.0
  %3851 = vadd.xlane.f32.xlu0 %v3850
  %v3852 = vpop.xlane.xlu0 %3851
  %v3853 = vsel %vm970, %v3777, 0.0
  %3854 = vadd.xlane.f32.xlu0 %v3853
  %v3855 = vpop.xlane.xlu0 %3854
  %v3856 = vsel %vm970, %v3778, 0.0
  %3857 = vadd.xlane.f32.xlu0 %v3856
  %v3858 = vpop.xlane.xlu0 %3857
  %v3859 = vsel %vm970, %v3779, 0.0
  %3860 = vadd.xlane.f32.xlu0 %v3859
  %v3861 = vpop.xlane.xlu0 %3860
  %v3862 = vsel %vm970, %v3780, 0.0
  %3863 = vadd.xlane.f32.xlu0 %v3862
  %v3864 = vpop.xlane.xlu0 %3863
  %v3865 = vsel %vm970, %v3781, 0.0
  %3866 = vadd.xlane.f32.xlu0 %v3865
  %v3867 = vpop.xlane.xlu0 %3866
  %v3868 = vsel %vm970, %v3782, 0.0
  %3869 = vadd.xlane.f32.xlu0 %v3868
  %v3870 = vpop.xlane.xlu0 %3869
  %v3871 = vsel %vm970, %v3783, 0.0
  %3872 = vadd.xlane.f32.xlu0 %v3871
  %v3873 = vpop.xlane.xlu0 %3872
  %v3874 = vsel %vm970, %v3784, 0.0
  %3875 = vadd.xlane.f32.xlu0 %v3874
  %v3876 = vpop.xlane.xlu0 %3875
  %v3877 = vsel %vm970, %v3785, 0.0
  %3878 = vadd.xlane.f32.xlu0 %v3877
  %v3879 = vpop.xlane.xlu0 %3878
  %v3880 = vsel %vm970, %v3786, 0.0
  %3881 = vadd.xlane.f32.xlu0 %v3880
  %v3882 = vpop.xlane.xlu0 %3881
  %v3883 = vmul.f32 %v3789, %v1137
  %v3884 = vmul.f32 %v3792, %v1137
  %v3885 = vmul.f32 %v3795, %v1137
  %v3886 = vmul.f32 %v3798, %v1137
  %v3887 = vmul.f32 %v3801, %v1137
  %v3888 = vmul.f32 %v3804, %v1137
  %v3889 = vmul.f32 %v3807, %v1137
  %v3890 = vmul.f32 %v3810, %v1137
  %v3891 = vmul.f32 %v3813, %v1137
  %v3892 = vmul.f32 %v3816, %v1137
  %v3893 = vmul.f32 %v3819, %v1137
  %v3894 = vmul.f32 %v3822, %v1137
  %v3895 = vmul.f32 %v3825, %v1137
  %v3896 = vmul.f32 %v3828, %v1137
  %v3897 = vmul.f32 %v3831, %v1137
  %v3898 = vmul.f32 %v3834, %v1137
  %v3899 = vmul.f32 %v3837, %v1137
  %v3900 = vmul.f32 %v3840, %v1137
  %v3901 = vmul.f32 %v3843, %v1137
  %v3902 = vmul.f32 %v3846, %v1137
  %v3903 = vmul.f32 %v3849, %v1137
  %v3904 = vmul.f32 %v3852, %v1137
  %v3905 = vmul.f32 %v3855, %v1137
  %v3906 = vmul.f32 %v3858, %v1137
  %v3907 = vmul.f32 %v3861, %v1137
  %v3908 = vmul.f32 %v3864, %v1137
  %v3909 = vmul.f32 %v3867, %v1137
  %v3910 = vmul.f32 %v3870, %v1137
  %v3911 = vmul.f32 %v3873, %v1137
  %v3912 = vmul.f32 %v3876, %v1137
  %v3913 = vmul.f32 %v3879, %v1137
  %v3914 = vmul.f32 %v3882, %v1137
  %v3915 = vadd.f32 %v3883, 1e-05
  %v3916 = vadd.f32 %v3884, 1e-05
  %v3917 = vadd.f32 %v3885, 1e-05
  %v3918 = vadd.f32 %v3886, 1e-05
  %v3919 = vadd.f32 %v3887, 1e-05
  %v3920 = vadd.f32 %v3888, 1e-05
  %v3921 = vadd.f32 %v3889, 1e-05
  %v3922 = vadd.f32 %v3890, 1e-05
  %v3923 = vadd.f32 %v3891, 1e-05
  %v3924 = vadd.f32 %v3892, 1e-05
  %v3925 = vadd.f32 %v3893, 1e-05
  %v3926 = vadd.f32 %v3894, 1e-05
  %v3927 = vadd.f32 %v3895, 1e-05
  %v3928 = vadd.f32 %v3896, 1e-05
  %v3929 = vadd.f32 %v3897, 1e-05
  %v3930 = vadd.f32 %v3898, 1e-05
  %v3931 = vadd.f32 %v3899, 1e-05
  %v3932 = vadd.f32 %v3900, 1e-05
  %v3933 = vadd.f32 %v3901, 1e-05
  %v3934 = vadd.f32 %v3902, 1e-05
  %v3935 = vadd.f32 %v3903, 1e-05
  %v3936 = vadd.f32 %v3904, 1e-05
  %v3937 = vadd.f32 %v3905, 1e-05
  %v3938 = vadd.f32 %v3906, 1e-05
  %v3939 = vadd.f32 %v3907, 1e-05
  %v3940 = vadd.f32 %v3908, 1e-05
  %v3941 = vadd.f32 %v3909, 1e-05
  %v3942 = vadd.f32 %v3910, 1e-05
  %v3943 = vadd.f32 %v3911, 1e-05
  %v3944 = vadd.f32 %v3912, 1e-05
  %v3945 = vadd.f32 %v3913, 1e-05
  %v3946 = vadd.f32 %v3914, 1e-05
  %v3947 = vrsqrt.pop %v3915
  %v3948 = vrsqrt.pop %v3916
  %v3949 = vrsqrt.pop %v3917
  %v3950 = vrsqrt.pop %v3918
  %v3951 = vrsqrt.pop %v3919
  %v3952 = vrsqrt.pop %v3920
  %v3953 = vrsqrt.pop %v3921
  %v3954 = vrsqrt.pop %v3922
  %v3955 = vrsqrt.pop %v3923
  %v3956 = vrsqrt.pop %v3924
  %v3957 = vrsqrt.pop %v3925
  %v3958 = vrsqrt.pop %v3926
  %v3959 = vrsqrt.pop %v3927
  %v3960 = vrsqrt.pop %v3928
  %v3961 = vrsqrt.pop %v3929
  %v3962 = vrsqrt.pop %v3930
  %v3963 = vrsqrt.pop %v3931
  %v3964 = vrsqrt.pop %v3932
  %v3965 = vrsqrt.pop %v3933
  %v3966 = vrsqrt.pop %v3934
  %v3967 = vrsqrt.pop %v3935
  %v3968 = vrsqrt.pop %v3936
  %v3969 = vrsqrt.pop %v3937
  %v3970 = vrsqrt.pop %v3938
  %v3971 = vrsqrt.pop %v3939
  %v3972 = vrsqrt.pop %v3940
  %v3973 = vrsqrt.pop %v3941
  %v3974 = vrsqrt.pop %v3942
  %v3975 = vrsqrt.pop %v3943
  %v3976 = vrsqrt.pop %v3944
  %v3977 = vrsqrt.pop %v3945
  %v3978 = vrsqrt.pop %v3946
  %v3979 = vmul.f32 %v3723, %v3947
  %v3980 = vmul.f32 %v3724, %v3948
  %v3981 = vmul.f32 %v3725, %v3949
  %v3982 = vmul.f32 %v3726, %v3950
  %v3983 = vmul.f32 %v3727, %v3951
  %v3984 = vmul.f32 %v3728, %v3952
  %v3985 = vmul.f32 %v3729, %v3953
  %v3986 = vmul.f32 %v3730, %v3954
  %v3987 = vmul.f32 %v3731, %v3955
  %v3988 = vmul.f32 %v3732, %v3956
  %v3989 = vmul.f32 %v3733, %v3957
  %v3990 = vmul.f32 %v3734, %v3958
  %v3991 = vmul.f32 %v3735, %v3959
  %v3992 = vmul.f32 %v3736, %v3960
  %v3993 = vmul.f32 %v3737, %v3961
  %v3994 = vmul.f32 %v3738, %v3962
  %v3995 = vmul.f32 %v3739, %v3963
  %v3996 = vmul.f32 %v3740, %v3964
  %v3997 = vmul.f32 %v3741, %v3965
  %v3998 = vmul.f32 %v3742, %v3966
  %v3999 = vmul.f32 %v3743, %v3967
  %v4000 = vmul.f32 %v3744, %v3968
  %v4001 = vmul.f32 %v3745, %v3969
  %v4002 = vmul.f32 %v3746, %v3970
  %v4003 = vmul.f32 %v3747, %v3971
  %v4004 = vmul.f32 %v3748, %v3972
  %v4005 = vmul.f32 %v3749, %v3973
  %v4006 = vmul.f32 %v3750, %v3974
  %v4007 = vmul.f32 %v3751, %v3975
  %v4008 = vmul.f32 %v3752, %v3976
  %v4009 = vmul.f32 %v3753, %v3977
  %v4010 = vmul.f32 %v3754, %v3978
  %v4011 = vlaneseq
  %v4012 = vshrl.u32 %v4011, 7
  %v4013 = vsub.s32 2, %v4012
  %v4014 = vrot.slane %v126, %v4013
  %v4015 = vmul.f32 %v3979, %v4014
  %v4016 = vmul.f32 %v3980, %v4014
  %v4017 = vmul.f32 %v3981, %v4014
  %v4018 = vmul.f32 %v3982, %v4014
  %v4019 = vmul.f32 %v3983, %v4014
  %v4020 = vmul.f32 %v3984, %v4014
  %v4021 = vmul.f32 %v3985, %v4014
  %v4022 = vmul.f32 %v3986, %v4014
  %v4023 = vmul.f32 %v3987, %v4014
  %v4024 = vmul.f32 %v3988, %v4014
  %v4025 = vmul.f32 %v3989, %v4014
  %v4026 = vmul.f32 %v3990, %v4014
  %v4027 = vmul.f32 %v3991, %v4014
  %v4028 = vmul.f32 %v3992, %v4014
  %v4029 = vmul.f32 %v3993, %v4014
  %v4030 = vmul.f32 %v3994, %v4014
  %v4031 = vmul.f32 %v3995, %v4014
  %v4032 = vmul.f32 %v3996, %v4014
  %v4033 = vmul.f32 %v3997, %v4014
  %v4034 = vmul.f32 %v3998, %v4014
  %v4035 = vmul.f32 %v3999, %v4014
  %v4036 = vmul.f32 %v4000, %v4014
  %v4037 = vmul.f32 %v4001, %v4014
  %v4038 = vmul.f32 %v4002, %v4014
  %v4039 = vmul.f32 %v4003, %v4014
  %v4040 = vmul.f32 %v4004, %v4014
  %v4041 = vmul.f32 %v4005, %v4014
  %v4042 = vmul.f32 %v4006, %v4014
  %v4043 = vmul.f32 %v4007, %v4014
  %v4044 = vmul.f32 %v4008, %v4014
  %v4045 = vmul.f32 %v4009, %v4014
  %v4046 = vmul.f32 %v4010, %v4014
  %v4047 = vlaneseq
  %v4048 = vshrl.u32 %v4047, 7
  %v4049 = vsub.s32 3, %v4048
  %v4050 = vrot.slane %v126, %v4049
  %v4051 = vadd.f32 %v4015, %v4050
  %v4052 = vadd.f32 %v4016, %v4050
  %v4053 = vadd.f32 %v4017, %v4050
  %v4054 = vadd.f32 %v4018, %v4050
  %v4055 = vadd.f32 %v4019, %v4050
  %v4056 = vadd.f32 %v4020, %v4050
  %v4057 = vadd.f32 %v4021, %v4050
  %v4058 = vadd.f32 %v4022, %v4050
  %v4059 = vadd.f32 %v4023, %v4050
  %v4060 = vadd.f32 %v4024, %v4050
  %v4061 = vadd.f32 %v4025, %v4050
  %v4062 = vadd.f32 %v4026, %v4050
  %v4063 = vadd.f32 %v4027, %v4050
  %v4064 = vadd.f32 %v4028, %v4050
  %v4065 = vadd.f32 %v4029, %v4050
  %v4066 = vadd.f32 %v4030, %v4050
  %v4067 = vadd.f32 %v4031, %v4050
  %v4068 = vadd.f32 %v4032, %v4050
  %v4069 = vadd.f32 %v4033, %v4050
  %v4070 = vadd.f32 %v4034, %v4050
  %v4071 = vadd.f32 %v4035, %v4050
  %v4072 = vadd.f32 %v4036, %v4050
  %v4073 = vadd.f32 %v4037, %v4050
  %v4074 = vadd.f32 %v4038, %v4050
  %v4075 = vadd.f32 %v4039, %v4050
  %v4076 = vadd.f32 %v4040, %v4050
  %v4077 = vadd.f32 %v4041, %v4050
  %v4078 = vadd.f32 %v4042, %v4050
  %v4079 = vadd.f32 %v4043, %v4050
  %v4080 = vadd.f32 %v4044, %v4050
  %v4081 = vadd.f32 %v4045, %v4050
  %v4082 = vadd.f32 %v4046, %v4050
  %v4083 = vtanh.pop %v4051
  %v4084 = vtanh.pop %v4052
  %v4085 = vtanh.pop %v4053
  %v4086 = vtanh.pop %v4054
  %v4087 = vtanh.pop %v4055
  %v4088 = vtanh.pop %v4056
  %v4089 = vtanh.pop %v4057
  %v4090 = vtanh.pop %v4058
  %v4091 = vtanh.pop %v4059
  %v4092 = vtanh.pop %v4060
  %v4093 = vtanh.pop %v4061
  %v4094 = vtanh.pop %v4062
  %v4095 = vtanh.pop %v4063
  %v4096 = vtanh.pop %v4064
  %v4097 = vtanh.pop %v4065
  %v4098 = vtanh.pop %v4066
  %v4099 = vtanh.pop %v4067
  %v4100 = vtanh.pop %v4068
  %v4101 = vtanh.pop %v4069
  %v4102 = vtanh.pop %v4070
  %v4103 = vtanh.pop %v4071
  %v4104 = vtanh.pop %v4072
  %v4105 = vtanh.pop %v4073
  %v4106 = vtanh.pop %v4074
  %v4107 = vtanh.pop %v4075
  %v4108 = vtanh.pop %v4076
  %v4109 = vtanh.pop %v4077
  %v4110 = vtanh.pop %v4078
  %v4111 = vtanh.pop %v4079
  %v4112 = vtanh.pop %v4080
  %v4113 = vtanh.pop %v4081
  %v4114 = vtanh.pop %v4082
  %v4115 = vadd.f32 %v4083, %v33
  %v4116 = vadd.f32 %v4084, %v34
  %v4117 = vadd.f32 %v4085, %v35
  %v4118 = vadd.f32 %v4086, %v36
  %v4119 = vadd.f32 %v4087, %v37
  %v4120 = vadd.f32 %v4088, %v38
  %v4121 = vadd.f32 %v4089, %v39
  %v4122 = vadd.f32 %v4090, %v40
  %v4123 = vadd.f32 %v4091, %v41
  %v4124 = vadd.f32 %v4092, %v42
  %v4125 = vadd.f32 %v4093, %v43
  %v4126 = vadd.f32 %v4094, %v44
  %v4127 = vadd.f32 %v4095, %v45
  %v4128 = vadd.f32 %v4096, %v46
  %v4129 = vadd.f32 %v4097, %v47
  %v4130 = vadd.f32 %v4098, %v48
  %v4131 = vadd.f32 %v4099, %v49
  %v4132 = vadd.f32 %v4100, %v50
  %v4133 = vadd.f32 %v4101, %v51
  %v4134 = vadd.f32 %v4102, %v52
  %v4135 = vadd.f32 %v4103, %v53
  %v4136 = vadd.f32 %v4104, %v54
  %v4137 = vadd.f32 %v4105, %v55
  %v4138 = vadd.f32 %v4106, %v56
  %v4139 = vadd.f32 %v4107, %v57
  %v4140 = vadd.f32 %v4108, %v58
  %v4141 = vadd.f32 %v4109, %v59
  %v4142 = vadd.f32 %v4110, %v60
  %v4143 = vadd.f32 %v4111, %v61
  %v4144 = vadd.f32 %v4112, %v62
  %v4145 = vadd.f32 %v4113, %v63
  %v4146 = vadd.f32 %v4114, %v64
  %4147 = vst.msk [vmem:[%s6] sm:$0xff] %vm970, %v1519
  %4148 = vst.msk [vmem:[%s6 + $0x8] sm:$0xff] %vm970, %v1520
  %4149 = vst.msk [vmem:[%s6 + $0x10] sm:$0xff] %vm970, %v1521
  %4150 = vst.msk [vmem:[%s6 + $0x18] sm:$0xff] %vm970, %v1522
  %4151 = vst.msk [vmem:[%s6 + $0x20] sm:$0xff] %vm970, %v1523
  %4152 = vst.msk [vmem:[%s6 + $0x28] sm:$0xff] %vm970, %v1524
  %4153 = vst.msk [vmem:[%s6 + $0x30] sm:$0xff] %vm970, %v1525
  %4154 = vst.msk [vmem:[%s6 + $0x38] sm:$0xff] %vm970, %v1526
  %4155 = vst.msk [vmem:[%s7] sm:$0xff] %vm970, %v4115
  %4156 = vst.msk [vmem:[%s7 + $0x8] sm:$0xff] %vm970, %v4116
  %4157 = vst.msk [vmem:[%s7 + $0x10] sm:$0xff] %vm970, %v4117
  %4158 = vst.msk [vmem:[%s7 + $0x18] sm:$0xff] %vm970, %v4118
  %4159 = vst.msk [vmem:[%s7 + $0x20] sm:$0xff] %vm970, %v4119
  %4160 = vst.msk [vmem:[%s7 + $0x28] sm:$0xff] %vm970, %v4120
  %4161 = vst.msk [vmem:[%s7 + $0x30] sm:$0xff] %vm970, %v4121
  %4162 = vst.msk [vmem:[%s7 + $0x38] sm:$0xff] %vm970, %v4122
  %4163 = vst.msk [vmem:[%s7 + $0x40] sm:$0xff] %vm970, %v4123
  %4164 = vst.msk [vmem:[%s7 + $0x48] sm:$0xff] %vm970, %v4124
  %4165 = vst.msk [vmem:[%s7 + $0x50] sm:$0xff] %vm970, %v4125
  %4166 = vst.msk [vmem:[%s7 + $0x58] sm:$0xff] %vm970, %v4126
  %4167 = vst.msk [vmem:[%s7 + $0x60] sm:$0xff] %vm970, %v4127
  %4168 = vst.msk [vmem:[%s7 + $0x68] sm:$0xff] %vm970, %v4128
  %4169 = vst.msk [vmem:[%s7 + $0x70] sm:$0xff] %vm970, %v4129
  %4170 = vst.msk [vmem:[%s7 + $0x78] sm:$0xff] %vm970, %v4130
  %4171 = vst.msk [vmem:[%s7 + $0x80] sm:$0xff] %vm970, %v4131
  %4172 = vst.msk [vmem:[%s7 + $0x88] sm:$0xff] %vm970, %v4132
  %4173 = vst.msk [vmem:[%s7 + $0x90] sm:$0xff] %vm970, %v4133
  %4174 = vst.msk [vmem:[%s7 + $0x98] sm:$0xff] %vm970, %v4134
  %4175 = vst.msk [vmem:[%s7 + $0xa0] sm:$0xff] %vm970, %v4135
  %4176 = vst.msk [vmem:[%s7 + $0xa8] sm:$0xff] %vm970, %v4136
  %4177 = vst.msk [vmem:[%s7 + $0xb0] sm:$0xff] %vm970, %v4137
  %4178 = vst.msk [vmem:[%s7 + $0xb8] sm:$0xff] %vm970, %v4138
  %4179 = vst.msk [vmem:[%s7 + $0xc0] sm:$0xff] %vm970, %v4139
  %4180 = vst.msk [vmem:[%s7 + $0xc8] sm:$0xff] %vm970, %v4140
  %4181 = vst.msk [vmem:[%s7 + $0xd0] sm:$0xff] %vm970, %v4141
  %4182 = vst.msk [vmem:[%s7 + $0xd8] sm:$0xff] %vm970, %v4142
  %4183 = vst.msk [vmem:[%s7 + $0xe0] sm:$0xff] %vm970, %v4143
  %4184 = vst.msk [vmem:[%s7 + $0xe8] sm:$0xff] %vm970, %v4144
  %4185 = vst.msk [vmem:[%s7 + $0xf0] sm:$0xff] %vm970, %v4145
  %4186 = vst.msk [vmem:[%s7 + $0xf8] sm:$0xff] %vm970, %v4146
  // Predicated region
  $region26: #{interaction_gnn_cell.1} parent=0 // pred_check
    _
  $region27: #{interaction_gnn_cell.1} parent=0 // pred_check_branch
    %4188 = sbr.rel (0) target = $region29
  $region28: #{interaction_gnn_cell.1} parent=0 // pred_region
    _
  $region29: #{interaction_gnn_cell.1} parent=0 // pred_fallthru
    _
  // Predicated region
  $region30: #{interaction_gnn_cell.1} parent=0 // pred_check
    _
  $region31: #{interaction_gnn_cell.1} parent=0 // pred_check_branch
    %4190 = sbr.rel (0) target = $region33
  $region32: #{interaction_gnn_cell.1} parent=0 // pred_region
    _
  $region33: #{interaction_gnn_cell.1} parent=0 // pred_fallthru
    _
  // Predicated region
  $region34: #{interaction_gnn_cell.1} parent=0 // pred_check
    _
  $region35: #{interaction_gnn_cell.1} parent=0 // pred_check_branch
    %4192 = sbr.rel (0) target = $region37
  $region36: #{interaction_gnn_cell.1} parent=0 // pred_region
    _
  $region37: #{interaction_gnn_cell.1} parent=0 // pred_fallthru
    _
  // Predicated region
  $region38: #{interaction_gnn_cell.1} parent=0 // pred_check
    _
  $region39: #{interaction_gnn_cell.1} parent=0 // pred_check_branch
    %4194 = sbr.rel (0) target = $region41
  $region40: #{interaction_gnn_cell.1} parent=0 // pred_region
    _
  $region41: #{interaction_gnn_cell.1} parent=0 // pred_fallthru
    _

</llo_original>
